<compile_context>
chip_gen: v7x
topology: tpu7x:2x2x1
jax: 0.10.0
libtpu: 0.0.40
codegen_flags: <defaults>
</compile_context>

<pallas_src>
from functools import partial

import numpy as np
import jax
import jax.numpy as jnp
from jax import lax
from jax.experimental import pallas as pl
from jax.experimental.pallas import tpu as pltpu

_LN_EPS = 1e-5
_NEG_INF = -1e9   # finite mask value (review: avoid -inf overflow / bf16 NaNs)


def _layernorm(z, g, b, eps):
    mu = jnp.mean(z, axis=-1, keepdims=True)
    zc = z - mu
    var = jnp.mean(zc * zc, axis=-1, keepdims=True)
    return zc * lax.rsqrt(var + eps) * g + b


# ----------------------------------------------------------------------------
# Fused CLIP text-transformer kernel: one grid step == one encoder layer.
# ----------------------------------------------------------------------------
def _clip_text_kernel(x_in_ref, mask_ref,
                      ln1_g_ref, ln1_b_ref,
                      wqkv_ref, bqkv_ref, wo_ref, bo_ref,
                      ln2_g_ref, ln2_b_ref,
                      w1_ref, b1_ref, w2_ref, b2_ref,
                      fln_g_ref, fln_b_ref,
                      out_ref,
                      x_sc,
                      *, num_heads, eps):
    l = pl.program_id(0)
    bf16 = jnp.bfloat16

    @pl.when(l == 0)
    def _():
        x_sc[...] = x_in_ref[...]            # load embeddings into resident scratch

    x = x_sc[...]                            # (BS, D) f32 residual stream
    BS, D = x.shape
    hd = D // num_heads
    scale = float(hd) ** -0.5

    # ---- LayerNorm 1 + fused QKV projection (bf16 MXU, f32 accumulate) -------
    xn = _layernorm(x, ln1_g_ref[0], ln1_b_ref[0], eps)
    qkv = jnp.dot(xn.astype(bf16), wqkv_ref[0],
                  preferred_element_type=jnp.float32) + bqkv_ref[0]    # (BS, 3D)
    q = qkv[:, :D] * scale
    k = qkv[:, D:2 * D]
    v = qkv[:, 2 * D:]

    # ---- causal MHA (block-diagonal within each batch element) ---------------
    allowed = mask_ref[...] > 0.0                                      # (BS, BS)
    w_o = wo_ref[0]                                                    # (D, D) bf16
    attn = None
    # TODO(synk): at real CLIP scale (12 heads, hd=64) a head-batched dot_general
    # would use the MXU rows better; here each head is folded straight into the
    # out-projection accumulator so there is no lane-dim concat and per-head
    # intermediates die immediately (no long live ranges / spills).
    for h in range(num_heads):
        sl = slice(h * hd, (h + 1) * hd)
        qh = q[:, sl].astype(bf16)
        kh_t = k[:, sl].T.astype(bf16)
        vh = v[:, sl].astype(bf16)
        sc = jnp.dot(qh, kh_t, preferred_element_type=jnp.float32)    # (BS, BS)
        sc = jnp.where(allowed, sc, _NEG_INF)
        sc = sc - jnp.max(sc, axis=-1, keepdims=True)
        p = jnp.exp(sc)
        p = p * pl.reciprocal(jnp.sum(p, axis=-1, keepdims=True), approx=True)
        ctx_h = jnp.dot(p.astype(bf16), vh, preferred_element_type=jnp.float32)
        part = jnp.dot(ctx_h.astype(bf16), w_o[sl, :],
                       preferred_element_type=jnp.float32)             # (BS, D)
        attn = part if attn is None else attn + part
    x = x + attn + bo_ref[0]                                           # residual 1

    # ---- LayerNorm 2 + quick-GELU MLP (elementwise math kept in f32) ---------
    xn2 = _layernorm(x, ln2_g_ref[0], ln2_b_ref[0], eps)
    h1 = jnp.dot(xn2.astype(bf16), w1_ref[0],
                 preferred_element_type=jnp.float32) + b1_ref[0]       # (BS, F)
    h1 = h1 * pl.reciprocal(1.0 + jnp.exp(-1.702 * h1), approx=True)   # quick_gelu
    h2 = jnp.dot(h1.astype(bf16), w2_ref[0],
                 preferred_element_type=jnp.float32) + b2_ref[0]
    x = x + h2                                                         # residual 2
    x_sc[...] = x

    # ---- final LayerNorm fused into the last layer step ----------------------
    @pl.when(l == pl.num_programs(0) - 1)
    def _():
        out_ref[...] = _layernorm(x, fln_g_ref[...], fln_b_ref[...], eps
                                  ).astype(out_ref.dtype)


# ----------------------------------------------------------------------------
# Wrapper: full CLIP text-model forward (== FrozenCLIPEmbedder's transformer).
# ----------------------------------------------------------------------------
def clip_text_transformer(input_ids, params, *, num_heads, eps=_LN_EPS):
    # TODO(synk): CLIPTokenizer / CLIPProcessor / CLIP image encoder are host-side
    # preprocessing with external pretrained weights (image_embeds is unused when
    # embedding_manager is None); the kernel consumes pre-tokenized input_ids.
    B, S = input_ids.shape
    tok = params["token_embedding"]
    pos = params["position_embedding"]
    D = tok.shape[1]
    layers = params["layers"]
    L = len(layers)
    BS = B * S
    F = layers[0]["w1"].shape[1]

    # TODO(synk): data-dependent embedding row gather kept in plain JAX (jnp.take);
    # negligible next to the transformer layers.
    x = (jnp.take(tok, input_ids, axis=0) + pos[None, :S, :]).astype(jnp.float32)
    x = x.reshape(BS, D)                 # whole batch as one lane-dense tile

    stack = lambda n: jnp.stack([p[n] for p in layers])
    bstack = lambda n: stack(n).astype(jnp.bfloat16)
    # fused QKV weight/bias per layer: (L, D, 3D) bf16 / (L, 1, 3D) f32
    wqkv = jnp.stack([jnp.concatenate([p["wq"], p["wk"], p["wv"]], axis=1)
                      for p in layers]).astype(jnp.bfloat16)
    bqkv = jnp.stack([jnp.concatenate([p["bq"], p["bk"], p["bv"]], axis=1)
                      for p in layers])

    # precomputed block-diagonal causal mask over the flattened B*S token axis,
    # bound as a constant-index input (1.0 = attend, 0.0 = masked).
    idx = jnp.arange(BS)
    same_b = (idx[:, None] // S) == (idx[None, :] // S)
    causal = idx[None, :] <= idx[:, None]
    mask = (same_b & causal).astype(jnp.float32)

    per_layer = lambda a, b: pl.BlockSpec((1, a, b), lambda l: (l, 0, 0))
    const = lambda a, b: pl.BlockSpec((a, b), lambda l: (0, 0))

    # TODO(synk): for the real CLIP config pad S=77 -> 128 for lane-dense score
    # tiles, and at larger batch add a 'parallel' batch-tile grid axis for v7x's
    # two TensorCores (at B=2 the weight stream dominates, so a single layer-
    # sequential grid streams each layer's weights exactly once).
    out = pl.pallas_call(
        partial(_clip_text_kernel, num_heads=num_heads, eps=eps),
        out_shape=jax.ShapeDtypeStruct((BS, D), jnp.float32),
        grid=(L,),
        in_specs=[
            const(BS, D),                               # initial embeddings
            const(BS, BS),                              # causal/batch mask
            per_layer(1, D), per_layer(1, D),           # LN1 gamma/beta
            per_layer(D, 3 * D), per_layer(1, 3 * D),   # fused QKV w/b
            per_layer(D, D), per_layer(1, D),           # out projection w/b
            per_layer(1, D), per_layer(1, D),           # LN2 gamma/beta
            per_layer(D, F), per_layer(1, F),           # fc1 w/b
            per_layer(F, D), per_layer(1, D),           # fc2 w/b
            const(1, D), const(1, D),                   # final LayerNorm g/b
        ],
        out_specs=pl.BlockSpec((BS, D), lambda l: (0, 0)),
        scratch_shapes=[pltpu.VMEM((BS, D), jnp.float32)],   # resident activations
        compiler_params=pltpu.CompilerParams(
            dimension_semantics=("arbitrary",),          # layers are sequential
            vmem_limit_bytes=64 * 1024 * 1024),
    )(x, mask,
      stack("ln1_g"), stack("ln1_b"),
      wqkv, bqkv, bstack("wo"), stack("bo"),
      stack("ln2_g"), stack("ln2_b"),
      bstack("w1"), stack("b1"), bstack("w2"), stack("b2"),
      params["final_ln_g"], params["final_ln_b"])
    return out.reshape(B, S, D)


# ----------------------------------------------------------------------------
# Pure-JAX reference with the same bf16-input / f32-accumulate matmul precision.
# ----------------------------------------------------------------------------
def _reference(input_ids, params, num_heads, eps=_LN_EPS):
    bf16 = jnp.bfloat16
    mm = lambda a, b: jnp.matmul(a.astype(bf16), b.astype(bf16),
                                 preferred_element_type=jnp.float32)
    B, S = input_ids.shape
    x = jnp.take(params["token_embedding"], input_ids, axis=0) \
        + params["position_embedding"][None, :S, :]
    x = x.astype(jnp.float32)
    D = x.shape[-1]
    hd = D // num_heads
    masked = jnp.triu(jnp.ones((S, S), dtype=bool), 1)

    def ln(z, g, b):
        mu = z.mean(-1, keepdims=True)
        var = ((z - mu) ** 2).mean(-1, keepdims=True)
        return (z - mu) / jnp.sqrt(var + eps) * g + b

    for p in params["layers"]:
        r = x
        h = ln(x, p["ln1_g"], p["ln1_b"])
        q = (mm(h, p["wq"]) + p["bq"]) * (float(hd) ** -0.5)
        k = mm(h, p["wk"]) + p["bk"]
        v = mm(h, p["wv"]) + p["bv"]
        qh = q.reshape(B, S, num_heads, hd).transpose(0, 2, 1, 3)
        kh = k.reshape(B, S, num_heads, hd).transpose(0, 2, 1, 3)
        vh = v.reshape(B, S, num_heads, hd).transpose(0, 2, 1, 3)
        sc = jnp.einsum("bhqd,bhkd->bhqk", qh.astype(bf16), kh.astype(bf16),
                        preferred_element_type=jnp.float32)
        sc = jnp.where(masked[None, None], _NEG_INF, sc)
        a = jax.nn.softmax(sc, axis=-1)
        ctx = jnp.einsum("bhqk,bhkd->bhqd", a.astype(bf16), vh.astype(bf16),
                         preferred_element_type=jnp.float32)
        ctx = ctx.transpose(0, 2, 1, 3).reshape(B, S, D)
        x = r + mm(ctx, p["wo"]) + p["bo"]

        r = x
        h = ln(x, p["ln2_g"], p["ln2_b"])
        h1 = mm(h, p["w1"]) + p["b1"]
        h1 = h1 * jax.nn.sigmoid(1.702 * h1)
        x = r + mm(h1, p["w2"]) + p["b2"]

    return ln(x, params["final_ln_g"], params["final_ln_b"])


# ----------------------------------------------------------------------------
# Deterministic parameter construction (stand-in for the frozen HF checkpoint).
# ----------------------------------------------------------------------------
def _init_params(key, *, vocab, max_pos, d, f, layers):
    n_keys = 4 + 16 * layers
    ks = iter(jax.random.split(key, n_keys))
    nrm = lambda k, shape, std=0.02: (std * jax.random.normal(k, shape)).astype(jnp.float32)

    params = {
        "token_embedding": nrm(next(ks), (vocab, d)),
        "position_embedding": nrm(next(ks), (max_pos, d)),
        "final_ln_g": 1.0 + nrm(next(ks), (1, d)),
        "final_ln_b": nrm(next(ks), (1, d)),
        "layers": [],
    }
    for _ in range(layers):
        params["layers"].append({
            "ln1_g": 1.0 + nrm(next(ks), (1, d)),
            "ln1_b": nrm(next(ks), (1, d)),
            "wq": nrm(next(ks), (d, d)), "bq": nrm(next(ks), (1, d)),
            "wk": nrm(next(ks), (d, d)), "bk": nrm(next(ks), (1, d)),
            "wv": nrm(next(ks), (d, d)), "bv": nrm(next(ks), (1, d)),
            "wo": nrm(next(ks), (d, d)), "bo": nrm(next(ks), (1, d)),
            "ln2_g": 1.0 + nrm(next(ks), (1, d)),
            "ln2_b": nrm(next(ks), (1, d)),
            "w1": nrm(next(ks), (d, f)), "b1": nrm(next(ks), (1, f)),
            "w2": nrm(next(ks), (f, d)), "b2": nrm(next(ks), (1, d)),
        })
    return params


if __name__ == "__main__":
    # Small CLIP-text-like config (real model: vocab=49408, seq=77, D=768, 12 heads,
    # 12 layers).  D, 3D and FFN are lane-dense multiples of 128; B*S is a dense
    # multiple of 8 sublanes.
    B, S, D, HEADS, FFN, LAYERS, VOCAB = 2, 16, 128, 4, 512, 2, 512

    key = jax.random.PRNGKey(0)
    k_ids, k_params = jax.random.split(key)

    params = _init_params(k_params, vocab=VOCAB, max_pos=S, d=D, f=FFN, layers=LAYERS)
    input_ids = jax.random.randint(k_ids, (B, S), 0, VOCAB, dtype=jnp.int32)

    out = clip_text_transformer(input_ids, params, num_heads=HEADS)
    out = jax.block_until_ready(out)

    ref = _reference(input_ids, params, HEADS)
    assert out.shape == (B, S, D), out.shape
    # bf16 MXU inputs + approx reciprocal => compare against a bf16-matched
    # reference at a correspondingly loosened tolerance (review correctness note).
    assert np.allclose(np.asarray(out), np.asarray(ref), atol=2e-2, rtol=2e-2)

    print("KERNEL_OK")
</pallas_src>

<mosaic_0001>
module attributes {stable_mosaic.version = 11 : i64} {
  func.func @_clip_text_kernel(%arg0: i32, %arg1: memref<32x128xf32, #tpu.memory_space<vmem>>, %arg2: memref<32x32xf32, #tpu.memory_space<vmem>>, %arg3: memref<1x1x128xf32, #tpu.memory_space<vmem>>, %arg4: memref<1x1x128xf32, #tpu.memory_space<vmem>>, %arg5: memref<1x128x384xbf16, #tpu.memory_space<vmem>>, %arg6: memref<1x1x384xf32, #tpu.memory_space<vmem>>, %arg7: memref<1x128x128xbf16, #tpu.memory_space<vmem>>, %arg8: memref<1x1x128xf32, #tpu.memory_space<vmem>>, %arg9: memref<1x1x128xf32, #tpu.memory_space<vmem>>, %arg10: memref<1x1x128xf32, #tpu.memory_space<vmem>>, %arg11: memref<1x128x512xbf16, #tpu.memory_space<vmem>>, %arg12: memref<1x1x512xf32, #tpu.memory_space<vmem>>, %arg13: memref<1x512x128xbf16, #tpu.memory_space<vmem>>, %arg14: memref<1x1x128xf32, #tpu.memory_space<vmem>>, %arg15: memref<1x128xf32, #tpu.memory_space<vmem>>, %arg16: memref<1x128xf32, #tpu.memory_space<vmem>>, %arg17: memref<32x128xf32, #tpu.memory_space<vmem>>, %arg18: memref<32x128xf32, #tpu.memory_space<vmem>>) attributes {dimension_semantics = [#tpu.dimension_semantics<arbitrary>], iteration_bounds = array<i64: 2>, scalar_prefetch = 0 : i64, scratch_operands = 1 : i64, tpu.core_type = #tpu.core_type<tc>, window_params = [{pipeline_mode = #tpu.pipeline_mode<synchronous>, transform_indices = @transform_0, window_bounds = array<i64: 32, 128>}, {pipeline_mode = #tpu.pipeline_mode<synchronous>, transform_indices = @transform_1, window_bounds = array<i64: 32, 32>}, {transform_indices = @transform_2, window_bounds = array<i64: 1, 1, 128>}, {transform_indices = @transform_3, window_bounds = array<i64: 1, 1, 128>}, {transform_indices = @transform_4, window_bounds = array<i64: 1, 128, 384>}, {transform_indices = @transform_5, window_bounds = array<i64: 1, 1, 384>}, {transform_indices = @transform_6, window_bounds = array<i64: 1, 128, 128>}, {transform_indices = @transform_7, window_bounds = array<i64: 1, 1, 128>}, {transform_indices = @transform_8, window_bounds = array<i64: 1, 1, 128>}, {transform_indices = @transform_9, window_bounds = array<i64: 1, 1, 128>}, {transform_indices = @transform_10, window_bounds = array<i64: 1, 128, 512>}, {transform_indices = @transform_11, window_bounds = array<i64: 1, 1, 512>}, {transform_indices = @transform_12, window_bounds = array<i64: 1, 512, 128>}, {transform_indices = @transform_13, window_bounds = array<i64: 1, 1, 128>}, {pipeline_mode = #tpu.pipeline_mode<synchronous>, transform_indices = @transform_14, window_bounds = array<i64: 1, 128>}, {pipeline_mode = #tpu.pipeline_mode<synchronous>, transform_indices = @transform_15, window_bounds = array<i64: 1, 128>}, {pipeline_mode = #tpu.pipeline_mode<synchronous>, transform_indices = @transform_16, window_bounds = array<i64: 32, 128>}]} {
    %c0_i32 = arith.constant 0 : i32
    %0 = arith.cmpi eq, %arg0, %c0_i32 : i32
    %1 = arith.extui %0 : i1 to i32
    %c0_i32_0 = arith.constant 0 : i32
    %2 = arith.cmpi ne, %1, %c0_i32_0 : i32
    scf.if %2 {
      %c0_83 = arith.constant 0 : index
      %c0_84 = arith.constant 0 : index
      %206 = vector.load %arg1[%c0_83, %c0_84] : memref<32x128xf32, #tpu.memory_space<vmem>>, vector<32x128xf32>
      %c0_85 = arith.constant 0 : index
      %c0_86 = arith.constant 0 : index
      %207 = vector.load %arg18[%c0_85, %c0_86] : memref<32x128xf32, #tpu.memory_space<vmem>>, vector<32x128xf32>
      tpu.vector_store %arg18[%c0_85, %c0_86], %206 {strides = array<i32>} : memref<32x128xf32, #tpu.memory_space<vmem>>, vector<32x128xf32>,
    } else {
    }
    %c0 = arith.constant 0 : index
    %c0_1 = arith.constant 0 : index
    %3 = vector.load %arg18[%c0, %c0_1] : memref<32x128xf32, #tpu.memory_space<vmem>>, vector<32x128xf32>
    %c0_2 = arith.constant 0 : index
    %c0_3 = arith.constant 0 : index
    %c0_4 = arith.constant 0 : index
    %4 = vector.load %arg3[%c0_2, %c0_3, %c0_4] : memref<1x1x128xf32, #tpu.memory_space<vmem>>, vector<1x1x128xf32>
    %5 = vector.shape_cast %4 : vector<1x1x128xf32> to vector<1x128xf32>
    %c0_5 = arith.constant 0 : index
    %c0_6 = arith.constant 0 : index
    %c0_7 = arith.constant 0 : index
    %6 = vector.load %arg4[%c0_5, %c0_6, %c0_7] : memref<1x1x128xf32, #tpu.memory_space<vmem>>, vector<1x1x128xf32>
    %7 = vector.shape_cast %6 : vector<1x1x128xf32> to vector<1x128xf32>
    %cst = arith.constant dense<0.000000e+00> : vector<32xf32>
    %8 = vector.multi_reduction <add>, %3, %cst [1] : vector<32x128xf32> to vector<32xf32>
    %9 = vector.shape_cast %8 : vector<32xf32> to vector<32x1xf32>
    %cst_8 = arith.constant 1.280000e+02 : f32
    %10 = vector.broadcast %cst_8 : f32 to vector<32x1xf32>
    %11 = arith.divf %9, %10 : vector<32x1xf32>
    %12 = vector.broadcast %11 : vector<32x1xf32> to vector<32x128xf32>
    %13 = arith.subf %3, %12 : vector<32x128xf32>
    %14 = arith.mulf %13, %13 : vector<32x128xf32>
    %cst_9 = arith.constant dense<0.000000e+00> : vector<32xf32>
    %15 = vector.multi_reduction <add>, %14, %cst_9 [1] : vector<32x128xf32> to vector<32xf32>
    %16 = vector.shape_cast %15 : vector<32xf32> to vector<32x1xf32>
    %cst_10 = arith.constant 1.280000e+02 : f32
    %17 = vector.broadcast %cst_10 : f32 to vector<32x1xf32>
    %18 = arith.divf %16, %17 : vector<32x1xf32>
    %cst_11 = arith.constant 9.99999974E-6 : f32
    %19 = vector.broadcast %cst_11 : f32 to vector<32x1xf32>
    %20 = arith.addf %18, %19 : vector<32x1xf32>
    %21 = math.rsqrt %20 : vector<32x1xf32>
    %22 = vector.broadcast %21 : vector<32x1xf32> to vector<32x128xf32>
    %23 = arith.mulf %13, %22 : vector<32x128xf32>
    %24 = vector.broadcast %5 : vector<1x128xf32> to vector<32x128xf32>
    %25 = arith.mulf %23, %24 : vector<32x128xf32>
    %26 = vector.broadcast %7 : vector<1x128xf32> to vector<32x128xf32>
    %27 = arith.addf %25, %26 : vector<32x128xf32>
    %28 = arith.truncf %27 : vector<32x128xf32> to vector<32x128xbf16>
    %c0_12 = arith.constant 0 : index
    %c0_13 = arith.constant 0 : index
    %c0_14 = arith.constant 0 : index
    %29 = vector.load %arg5[%c0_12, %c0_13, %c0_14] : memref<1x128x384xbf16, #tpu.memory_space<vmem>>, vector<1x128x384xbf16>
    %30 = vector.shape_cast %29 : vector<1x128x384xbf16> to vector<128x384xbf16>
    %cst_15 = arith.constant dense<0.000000e+00> : vector<32x384xf32>
    %31 = tpu.matmul %28, %30, %cst_15 {dimension_numbers = #tpu.dot_dimension_numbers<[1], [0], [0], [1], [0, 0, 1, 1], [], []>} : vector<32x128xbf16>, vector<128x384xbf16>, vector<32x384xf32> -> vector<32x384xf32>
    %c0_16 = arith.constant 0 : index
    %c0_17 = arith.constant 0 : index
    %c0_18 = arith.constant 0 : index
    %32 = vector.load %arg6[%c0_16, %c0_17, %c0_18] : memref<1x1x384xf32, #tpu.memory_space<vmem>>, vector<1x1x384xf32>
    %33 = vector.shape_cast %32 : vector<1x1x384xf32> to vector<1x384xf32>
    %34 = vector.broadcast %33 : vector<1x384xf32> to vector<32x384xf32>
    %35 = arith.addf %31, %34 : vector<32x384xf32>
    %36 = vector.extract_strided_slice %35 {offsets = [0, 0], sizes = [32, 128], strides = [1, 1]} : vector<32x384xf32> to vector<32x128xf32>
    %cst_19 = arith.constant 0.176776692 : f32
    %37 = vector.broadcast %cst_19 : f32 to vector<32x128xf32>
    %38 = arith.mulf %36, %37 : vector<32x128xf32>
    %39 = vector.extract_strided_slice %35 {offsets = [0, 128], sizes = [32, 128], strides = [1, 1]} : vector<32x384xf32> to vector<32x128xf32>
    %40 = vector.extract_strided_slice %35 {offsets = [0, 256], sizes = [32, 128], strides = [1, 1]} : vector<32x384xf32> to vector<32x128xf32>
    %c0_20 = arith.constant 0 : index
    %c0_21 = arith.constant 0 : index
    %41 = vector.load %arg2[%c0_20, %c0_21] : memref<32x32xf32, #tpu.memory_space<vmem>>, vector<32x32xf32>
    %cst_22 = arith.constant 0.000000e+00 : f32
    %42 = vector.broadcast %cst_22 : f32 to vector<32x32xf32>
    %43 = arith.cmpf ogt, %41, %42 : vector<32x32xf32>
    %c0_23 = arith.constant 0 : index
    %c0_24 = arith.constant 0 : index
    %c0_25 = arith.constant 0 : index
    %44 = vector.load %arg7[%c0_23, %c0_24, %c0_25] : memref<1x128x128xbf16, #tpu.memory_space<vmem>>, vector<1x128x128xbf16>
    %45 = vector.shape_cast %44 : vector<1x128x128xbf16> to vector<128x128xbf16>
    %46 = vector.extract_strided_slice %38 {offsets = [0, 0], sizes = [32, 32], strides = [1, 1]} : vector<32x128xf32> to vector<32x32xf32>
    %47 = arith.truncf %46 : vector<32x32xf32> to vector<32x32xbf16>
    %48 = vector.extract_strided_slice %39 {offsets = [0, 0], sizes = [32, 32], strides = [1, 1]} : vector<32x128xf32> to vector<32x32xf32>
    %49 = tpu.transpose %48, [1, 0] : vector<32x32xf32> -> vector<32x32xf32>
    %50 = arith.truncf %49 : vector<32x32xf32> to vector<32x32xbf16>
    %51 = vector.extract_strided_slice %40 {offsets = [0, 0], sizes = [32, 32], strides = [1, 1]} : vector<32x128xf32> to vector<32x32xf32>
    %52 = arith.truncf %51 : vector<32x32xf32> to vector<32x32xbf16>
    %cst_26 = arith.constant dense<0.000000e+00> : vector<32x32xf32>
    %53 = tpu.matmul %47, %50, %cst_26 {dimension_numbers = #tpu.dot_dimension_numbers<[1], [0], [0], [1], [0, 0, 1, 1], [], []>} : vector<32x32xbf16>, vector<32x32xbf16>, vector<32x32xf32> -> vector<32x32xf32>
    %cst_27 = arith.constant -1.000000e+09 : f32
    %54 = vector.broadcast %cst_27 : f32 to vector<32x32xf32>
    %55 = arith.select %43, %53, %54 : vector<32x32xi1>, vector<32x32xf32>
    %cst_28 = arith.constant dense<0xFF800000> : vector<32xf32>
    %56 = vector.multi_reduction <maximumf>, %55, %cst_28 [1] : vector<32x32xf32> to vector<32xf32>
    %57 = vector.shape_cast %56 : vector<32xf32> to vector<32x1xf32>
    %58 = vector.broadcast %57 : vector<32x1xf32> to vector<32x32xf32>
    %59 = arith.subf %55, %58 : vector<32x32xf32>
    %60 = math.exp %59 : vector<32x32xf32>
    %cst_29 = arith.constant dense<0.000000e+00> : vector<32xf32>
    %61 = vector.multi_reduction <add>, %60, %cst_29 [1] : vector<32x32xf32> to vector<32xf32>
    %62 = vector.shape_cast %61 : vector<32xf32> to vector<32x1xf32>
    %63 = tpu.reciprocal %62 {approx = true} : vector<32x1xf32> -> vector<32x1xf32>
    %64 = vector.broadcast %63 : vector<32x1xf32> to vector<32x32xf32>
    %65 = arith.mulf %60, %64 : vector<32x32xf32>
    %66 = arith.truncf %65 : vector<32x32xf32> to vector<32x32xbf16>
    %cst_30 = arith.constant dense<0.000000e+00> : vector<32x32xf32>
    %67 = tpu.matmul %66, %52, %cst_30 {dimension_numbers = #tpu.dot_dimension_numbers<[1], [0], [0], [1], [0, 0, 1, 1], [], []>} : vector<32x32xbf16>, vector<32x32xbf16>, vector<32x32xf32> -> vector<32x32xf32>
    %68 = arith.truncf %67 : vector<32x32xf32> to vector<32x32xbf16>
    %69 = vector.extract_strided_slice %45 {offsets = [0, 0], sizes = [32, 128], strides = [1, 1]} : vector<128x128xbf16> to vector<32x128xbf16>
    %cst_31 = arith.constant dense<0.000000e+00> : vector<32x128xf32>
    %70 = tpu.matmul %68, %69, %cst_31 {dimension_numbers = #tpu.dot_dimension_numbers<[1], [0], [0], [1], [0, 0, 1, 1], [], []>} : vector<32x32xbf16>, vector<32x128xbf16>, vector<32x128xf32> -> vector<32x128xf32>
    %71 = vector.extract_strided_slice %38 {offsets = [0, 32], sizes = [32, 32], strides = [1, 1]} : vector<32x128xf32> to vector<32x32xf32>
    %72 = arith.truncf %71 : vector<32x32xf32> to vector<32x32xbf16>
    %73 = vector.extract_strided_slice %39 {offsets = [0, 32], sizes = [32, 32], strides = [1, 1]} : vector<32x128xf32> to vector<32x32xf32>
    %74 = tpu.transpose %73, [1, 0] : vector<32x32xf32> -> vector<32x32xf32>
    %75 = arith.truncf %74 : vector<32x32xf32> to vector<32x32xbf16>
    %76 = vector.extract_strided_slice %40 {offsets = [0, 32], sizes = [32, 32], strides = [1, 1]} : vector<32x128xf32> to vector<32x32xf32>
    %77 = arith.truncf %76 : vector<32x32xf32> to vector<32x32xbf16>
    %cst_32 = arith.constant dense<0.000000e+00> : vector<32x32xf32>
    %78 = tpu.matmul %72, %75, %cst_32 {dimension_numbers = #tpu.dot_dimension_numbers<[1], [0], [0], [1], [0, 0, 1, 1], [], []>} : vector<32x32xbf16>, vector<32x32xbf16>, vector<32x32xf32> -> vector<32x32xf32>
    %cst_33 = arith.constant -1.000000e+09 : f32
    %79 = vector.broadcast %cst_33 : f32 to vector<32x32xf32>
    %80 = arith.select %43, %78, %79 : vector<32x32xi1>, vector<32x32xf32>
    %cst_34 = arith.constant dense<0xFF800000> : vector<32xf32>
    %81 = vector.multi_reduction <maximumf>, %80, %cst_34 [1] : vector<32x32xf32> to vector<32xf32>
    %82 = vector.shape_cast %81 : vector<32xf32> to vector<32x1xf32>
    %83 = vector.broadcast %82 : vector<32x1xf32> to vector<32x32xf32>
    %84 = arith.subf %80, %83 : vector<32x32xf32>
    %85 = math.exp %84 : vector<32x32xf32>
    %cst_35 = arith.constant dense<0.000000e+00> : vector<32xf32>
    %86 = vector.multi_reduction <add>, %85, %cst_35 [1] : vector<32x32xf32> to vector<32xf32>
    %87 = vector.shape_cast %86 : vector<32xf32> to vector<32x1xf32>
    %88 = tpu.reciprocal %87 {approx = true} : vector<32x1xf32> -> vector<32x1xf32>
    %89 = vector.broadcast %88 : vector<32x1xf32> to vector<32x32xf32>
    %90 = arith.mulf %85, %89 : vector<32x32xf32>
    %91 = arith.truncf %90 : vector<32x32xf32> to vector<32x32xbf16>
    %cst_36 = arith.constant dense<0.000000e+00> : vector<32x32xf32>
    %92 = tpu.matmul %91, %77, %cst_36 {dimension_numbers = #tpu.dot_dimension_numbers<[1], [0], [0], [1], [0, 0, 1, 1], [], []>} : vector<32x32xbf16>, vector<32x32xbf16>, vector<32x32xf32> -> vector<32x32xf32>
    %93 = arith.truncf %92 : vector<32x32xf32> to vector<32x32xbf16>
    %94 = vector.extract_strided_slice %45 {offsets = [32, 0], sizes = [32, 128], strides = [1, 1]} : vector<128x128xbf16> to vector<32x128xbf16>
    %cst_37 = arith.constant dense<0.000000e+00> : vector<32x128xf32>
    %95 = tpu.matmul %93, %94, %cst_37 {dimension_numbers = #tpu.dot_dimension_numbers<[1], [0], [0], [1], [0, 0, 1, 1], [], []>} : vector<32x32xbf16>, vector<32x128xbf16>, vector<32x128xf32> -> vector<32x128xf32>
    %96 = arith.addf %70, %95 : vector<32x128xf32>
    %97 = vector.extract_strided_slice %38 {offsets = [0, 64], sizes = [32, 32], strides = [1, 1]} : vector<32x128xf32> to vector<32x32xf32>
    %98 = arith.truncf %97 : vector<32x32xf32> to vector<32x32xbf16>
    %99 = vector.extract_strided_slice %39 {offsets = [0, 64], sizes = [32, 32], strides = [1, 1]} : vector<32x128xf32> to vector<32x32xf32>
    %100 = tpu.transpose %99, [1, 0] : vector<32x32xf32> -> vector<32x32xf32>
    %101 = arith.truncf %100 : vector<32x32xf32> to vector<32x32xbf16>
    %102 = vector.extract_strided_slice %40 {offsets = [0, 64], sizes = [32, 32], strides = [1, 1]} : vector<32x128xf32> to vector<32x32xf32>
    %103 = arith.truncf %102 : vector<32x32xf32> to vector<32x32xbf16>
    %cst_38 = arith.constant dense<0.000000e+00> : vector<32x32xf32>
    %104 = tpu.matmul %98, %101, %cst_38 {dimension_numbers = #tpu.dot_dimension_numbers<[1], [0], [0], [1], [0, 0, 1, 1], [], []>} : vector<32x32xbf16>, vector<32x32xbf16>, vector<32x32xf32> -> vector<32x32xf32>
    %cst_39 = arith.constant -1.000000e+09 : f32
    %105 = vector.broadcast %cst_39 : f32 to vector<32x32xf32>
    %106 = arith.select %43, %104, %105 : vector<32x32xi1>, vector<32x32xf32>
    %cst_40 = arith.constant dense<0xFF800000> : vector<32xf32>
    %107 = vector.multi_reduction <maximumf>, %106, %cst_40 [1] : vector<32x32xf32> to vector<32xf32>
    %108 = vector.shape_cast %107 : vector<32xf32> to vector<32x1xf32>
    %109 = vector.broadcast %108 : vector<32x1xf32> to vector<32x32xf32>
    %110 = arith.subf %106, %109 : vector<32x32xf32>
    %111 = math.exp %110 : vector<32x32xf32>
    %cst_41 = arith.constant dense<0.000000e+00> : vector<32xf32>
    %112 = vector.multi_reduction <add>, %111, %cst_41 [1] : vector<32x32xf32> to vector<32xf32>
    %113 = vector.shape_cast %112 : vector<32xf32> to vector<32x1xf32>
    %114 = tpu.reciprocal %113 {approx = true} : vector<32x1xf32> -> vector<32x1xf32>
    %115 = vector.broadcast %114 : vector<32x1xf32> to vector<32x32xf32>
    %116 = arith.mulf %111, %115 : vector<32x32xf32>
    %117 = arith.truncf %116 : vector<32x32xf32> to vector<32x32xbf16>
    %cst_42 = arith.constant dense<0.000000e+00> : vector<32x32xf32>
    %118 = tpu.matmul %117, %103, %cst_42 {dimension_numbers = #tpu.dot_dimension_numbers<[1], [0], [0], [1], [0, 0, 1, 1], [], []>} : vector<32x32xbf16>, vector<32x32xbf16>, vector<32x32xf32> -> vector<32x32xf32>
    %119 = arith.truncf %118 : vector<32x32xf32> to vector<32x32xbf16>
    %120 = vector.extract_strided_slice %45 {offsets = [64, 0], sizes = [32, 128], strides = [1, 1]} : vector<128x128xbf16> to vector<32x128xbf16>
    %cst_43 = arith.constant dense<0.000000e+00> : vector<32x128xf32>
    %121 = tpu.matmul %119, %120, %cst_43 {dimension_numbers = #tpu.dot_dimension_numbers<[1], [0], [0], [1], [0, 0, 1, 1], [], []>} : vector<32x32xbf16>, vector<32x128xbf16>, vector<32x128xf32> -> vector<32x128xf32>
    %122 = arith.addf %96, %121 : vector<32x128xf32>
    %123 = vector.extract_strided_slice %38 {offsets = [0, 96], sizes = [32, 32], strides = [1, 1]} : vector<32x128xf32> to vector<32x32xf32>
    %124 = arith.truncf %123 : vector<32x32xf32> to vector<32x32xbf16>
    %125 = vector.extract_strided_slice %39 {offsets = [0, 96], sizes = [32, 32], strides = [1, 1]} : vector<32x128xf32> to vector<32x32xf32>
    %126 = tpu.transpose %125, [1, 0] : vector<32x32xf32> -> vector<32x32xf32>
    %127 = arith.truncf %126 : vector<32x32xf32> to vector<32x32xbf16>
    %128 = vector.extract_strided_slice %40 {offsets = [0, 96], sizes = [32, 32], strides = [1, 1]} : vector<32x128xf32> to vector<32x32xf32>
    %129 = arith.truncf %128 : vector<32x32xf32> to vector<32x32xbf16>
    %cst_44 = arith.constant dense<0.000000e+00> : vector<32x32xf32>
    %130 = tpu.matmul %124, %127, %cst_44 {dimension_numbers = #tpu.dot_dimension_numbers<[1], [0], [0], [1], [0, 0, 1, 1], [], []>} : vector<32x32xbf16>, vector<32x32xbf16>, vector<32x32xf32> -> vector<32x32xf32>
    %cst_45 = arith.constant -1.000000e+09 : f32
    %131 = vector.broadcast %cst_45 : f32 to vector<32x32xf32>
    %132 = arith.select %43, %130, %131 : vector<32x32xi1>, vector<32x32xf32>
    %cst_46 = arith.constant dense<0xFF800000> : vector<32xf32>
    %133 = vector.multi_reduction <maximumf>, %132, %cst_46 [1] : vector<32x32xf32> to vector<32xf32>
    %134 = vector.shape_cast %133 : vector<32xf32> to vector<32x1xf32>
    %135 = vector.broadcast %134 : vector<32x1xf32> to vector<32x32xf32>
    %136 = arith.subf %132, %135 : vector<32x32xf32>
    %137 = math.exp %136 : vector<32x32xf32>
    %cst_47 = arith.constant dense<0.000000e+00> : vector<32xf32>
    %138 = vector.multi_reduction <add>, %137, %cst_47 [1] : vector<32x32xf32> to vector<32xf32>
    %139 = vector.shape_cast %138 : vector<32xf32> to vector<32x1xf32>
    %140 = tpu.reciprocal %139 {approx = true} : vector<32x1xf32> -> vector<32x1xf32>
    %141 = vector.broadcast %140 : vector<32x1xf32> to vector<32x32xf32>
    %142 = arith.mulf %137, %141 : vector<32x32xf32>
    %143 = arith.truncf %142 : vector<32x32xf32> to vector<32x32xbf16>
    %cst_48 = arith.constant dense<0.000000e+00> : vector<32x32xf32>
    %144 = tpu.matmul %143, %129, %cst_48 {dimension_numbers = #tpu.dot_dimension_numbers<[1], [0], [0], [1], [0, 0, 1, 1], [], []>} : vector<32x32xbf16>, vector<32x32xbf16>, vector<32x32xf32> -> vector<32x32xf32>
    %145 = arith.truncf %144 : vector<32x32xf32> to vector<32x32xbf16>
    %146 = vector.extract_strided_slice %45 {offsets = [96, 0], sizes = [32, 128], strides = [1, 1]} : vector<128x128xbf16> to vector<32x128xbf16>
    %cst_49 = arith.constant dense<0.000000e+00> : vector<32x128xf32>
    %147 = tpu.matmul %145, %146, %cst_49 {dimension_numbers = #tpu.dot_dimension_numbers<[1], [0], [0], [1], [0, 0, 1, 1], [], []>} : vector<32x32xbf16>, vector<32x128xbf16>, vector<32x128xf32> -> vector<32x128xf32>
    %148 = arith.addf %122, %147 : vector<32x128xf32>
    %149 = arith.addf %3, %148 : vector<32x128xf32>
    %c0_50 = arith.constant 0 : index
    %c0_51 = arith.constant 0 : index
    %c0_52 = arith.constant 0 : index
    %150 = vector.load %arg8[%c0_50, %c0_51, %c0_52] : memref<1x1x128xf32, #tpu.memory_space<vmem>>, vector<1x1x128xf32>
    %151 = vector.shape_cast %150 : vector<1x1x128xf32> to vector<1x128xf32>
    %152 = vector.broadcast %151 : vector<1x128xf32> to vector<32x128xf32>
    %153 = arith.addf %149, %152 : vector<32x128xf32>
    %c0_53 = arith.constant 0 : index
    %c0_54 = arith.constant 0 : index
    %c0_55 = arith.constant 0 : index
    %154 = vector.load %arg9[%c0_53, %c0_54, %c0_55] : memref<1x1x128xf32, #tpu.memory_space<vmem>>, vector<1x1x128xf32>
    %155 = vector.shape_cast %154 : vector<1x1x128xf32> to vector<1x128xf32>
    %c0_56 = arith.constant 0 : index
    %c0_57 = arith.constant 0 : index
    %c0_58 = arith.constant 0 : index
    %156 = vector.load %arg10[%c0_56, %c0_57, %c0_58] : memref<1x1x128xf32, #tpu.memory_space<vmem>>, vector<1x1x128xf32>
    %157 = vector.shape_cast %156 : vector<1x1x128xf32> to vector<1x128xf32>
    %cst_59 = arith.constant dense<0.000000e+00> : vector<32xf32>
    %158 = vector.multi_reduction <add>, %153, %cst_59 [1] : vector<32x128xf32> to vector<32xf32>
    %159 = vector.shape_cast %158 : vector<32xf32> to vector<32x1xf32>
    %cst_60 = arith.constant 1.280000e+02 : f32
    %160 = vector.broadcast %cst_60 : f32 to vector<32x1xf32>
    %161 = arith.divf %159, %160 : vector<32x1xf32>
    %162 = vector.broadcast %161 : vector<32x1xf32> to vector<32x128xf32>
    %163 = arith.subf %153, %162 : vector<32x128xf32>
    %164 = arith.mulf %163, %163 : vector<32x128xf32>
    %cst_61 = arith.constant dense<0.000000e+00> : vector<32xf32>
    %165 = vector.multi_reduction <add>, %164, %cst_61 [1] : vector<32x128xf32> to vector<32xf32>
    %166 = vector.shape_cast %165 : vector<32xf32> to vector<32x1xf32>
    %cst_62 = arith.constant 1.280000e+02 : f32
    %167 = vector.broadcast %cst_62 : f32 to vector<32x1xf32>
    %168 = arith.divf %166, %167 : vector<32x1xf32>
    %cst_63 = arith.constant 9.99999974E-6 : f32
    %169 = vector.broadcast %cst_63 : f32 to vector<32x1xf32>
    %170 = arith.addf %168, %169 : vector<32x1xf32>
    %171 = math.rsqrt %170 : vector<32x1xf32>
    %172 = vector.broadcast %171 : vector<32x1xf32> to vector<32x128xf32>
    %173 = arith.mulf %163, %172 : vector<32x128xf32>
    %174 = vector.broadcast %155 : vector<1x128xf32> to vector<32x128xf32>
    %175 = arith.mulf %173, %174 : vector<32x128xf32>
    %176 = vector.broadcast %157 : vector<1x128xf32> to vector<32x128xf32>
    %177 = arith.addf %175, %176 : vector<32x128xf32>
    %178 = arith.truncf %177 : vector<32x128xf32> to vector<32x128xbf16>
    %c0_64 = arith.constant 0 : index
    %c0_65 = arith.constant 0 : index
    %c0_66 = arith.constant 0 : index
    %179 = vector.load %arg11[%c0_64, %c0_65, %c0_66] : memref<1x128x512xbf16, #tpu.memory_space<vmem>>, vector<1x128x512xbf16>
    %180 = vector.shape_cast %179 : vector<1x128x512xbf16> to vector<128x512xbf16>
    %cst_67 = arith.constant dense<0.000000e+00> : vector<32x512xf32>
    %181 = tpu.matmul %178, %180, %cst_67 {dimension_numbers = #tpu.dot_dimension_numbers<[1], [0], [0], [1], [0, 0, 1, 1], [], []>} : vector<32x128xbf16>, vector<128x512xbf16>, vector<32x512xf32> -> vector<32x512xf32>
    %c0_68 = arith.constant 0 : index
    %c0_69 = arith.constant 0 : index
    %c0_70 = arith.constant 0 : index
    %182 = vector.load %arg12[%c0_68, %c0_69, %c0_70] : memref<1x1x512xf32, #tpu.memory_space<vmem>>, vector<1x1x512xf32>
    %183 = vector.shape_cast %182 : vector<1x1x512xf32> to vector<1x512xf32>
    %184 = vector.broadcast %183 : vector<1x512xf32> to vector<32x512xf32>
    %185 = arith.addf %181, %184 : vector<32x512xf32>
    %cst_71 = arith.constant -1.702000e+00 : f32
    %186 = vector.broadcast %cst_71 : f32 to vector<32x512xf32>
    %187 = arith.mulf %186, %185 : vector<32x512xf32>
    %188 = math.exp %187 : vector<32x512xf32>
    %cst_72 = arith.constant 1.000000e+00 : f32
    %189 = vector.broadcast %cst_72 : f32 to vector<32x512xf32>
    %190 = arith.addf %189, %188 : vector<32x512xf32>
    %191 = tpu.reciprocal %190 {approx = true} : vector<32x512xf32> -> vector<32x512xf32>
    %192 = arith.mulf %185, %191 : vector<32x512xf32>
    %193 = arith.truncf %192 : vector<32x512xf32> to vector<32x512xbf16>
    %c0_73 = arith.constant 0 : index
    %c0_74 = arith.constant 0 : index
    %c0_75 = arith.constant 0 : index
    %194 = vector.load %arg13[%c0_73, %c0_74, %c0_75] : memref<1x512x128xbf16, #tpu.memory_space<vmem>>, vector<1x512x128xbf16>
    %195 = vector.shape_cast %194 : vector<1x512x128xbf16> to vector<512x128xbf16>
    %cst_76 = arith.constant dense<0.000000e+00> : vector<32x128xf32>
    %196 = tpu.matmul %193, %195, %cst_76 {dimension_numbers = #tpu.dot_dimension_numbers<[1], [0], [0], [1], [0, 0, 1, 1], [], []>} : vector<32x512xbf16>, vector<512x128xbf16>, vector<32x128xf32> -> vector<32x128xf32>
    %c0_77 = arith.constant 0 : index
    %c0_78 = arith.constant 0 : index
    %c0_79 = arith.constant 0 : index
    %197 = vector.load %arg14[%c0_77, %c0_78, %c0_79] : memref<1x1x128xf32, #tpu.memory_space<vmem>>, vector<1x1x128xf32>
    %198 = vector.shape_cast %197 : vector<1x1x128xf32> to vector<1x128xf32>
    %199 = vector.broadcast %198 : vector<1x128xf32> to vector<32x128xf32>
    %200 = arith.addf %196, %199 : vector<32x128xf32>
    %201 = arith.addf %153, %200 : vector<32x128xf32>
    %c0_80 = arith.constant 0 : index
    %c0_81 = arith.constant 0 : index
    %202 = vector.load %arg18[%c0_80, %c0_81] : memref<32x128xf32, #tpu.memory_space<vmem>>, vector<32x128xf32>
    tpu.vector_store %arg18[%c0_80, %c0_81], %201 {strides = array<i32>} : memref<32x128xf32, #tpu.memory_space<vmem>>, vector<32x128xf32>,
    %c1_i32 = arith.constant 1 : i32
    %203 = arith.cmpi eq, %arg0, %c1_i32 : i32
    %204 = arith.extui %203 : i1 to i32
    %c0_i32_82 = arith.constant 0 : i32
    %205 = arith.cmpi ne, %204, %c0_i32_82 : i32
    scf.if %205 {
      %c0_83 = arith.constant 0 : index
      %c0_84 = arith.constant 0 : index
      %206 = vector.load %arg15[%c0_83, %c0_84] : memref<1x128xf32, #tpu.memory_space<vmem>>, vector<1x128xf32>
      %c0_85 = arith.constant 0 : index
      %c0_86 = arith.constant 0 : index
      %207 = vector.load %arg16[%c0_85, %c0_86] : memref<1x128xf32, #tpu.memory_space<vmem>>, vector<1x128xf32>
      %cst_87 = arith.constant dense<0.000000e+00> : vector<32xf32>
      %208 = vector.multi_reduction <add>, %201, %cst_87 [1] : vector<32x128xf32> to vector<32xf32>
      %209 = vector.shape_cast %208 : vector<32xf32> to vector<32x1xf32>
      %cst_88 = arith.constant 1.280000e+02 : f32
      %210 = vector.broadcast %cst_88 : f32 to vector<32x1xf32>
      %211 = arith.divf %209, %210 : vector<32x1xf32>
      %212 = vector.broadcast %211 : vector<32x1xf32> to vector<32x128xf32>
      %213 = arith.subf %201, %212 : vector<32x128xf32>
      %214 = arith.mulf %213, %213 : vector<32x128xf32>
      %cst_89 = arith.constant dense<0.000000e+00> : vector<32xf32>
      %215 = vector.multi_reduction <add>, %214, %cst_89 [1] : vector<32x128xf32> to vector<32xf32>
      %216 = vector.shape_cast %215 : vector<32xf32> to vector<32x1xf32>
      %cst_90 = arith.constant 1.280000e+02 : f32
      %217 = vector.broadcast %cst_90 : f32 to vector<32x1xf32>
      %218 = arith.divf %216, %217 : vector<32x1xf32>
      %cst_91 = arith.constant 9.99999974E-6 : f32
      %219 = vector.broadcast %cst_91 : f32 to vector<32x1xf32>
      %220 = arith.addf %218, %219 : vector<32x1xf32>
      %221 = math.rsqrt %220 : vector<32x1xf32>
      %222 = vector.broadcast %221 : vector<32x1xf32> to vector<32x128xf32>
      %223 = arith.mulf %213, %222 : vector<32x128xf32>
      %224 = vector.broadcast %206 : vector<1x128xf32> to vector<32x128xf32>
      %225 = arith.mulf %223, %224 : vector<32x128xf32>
      %226 = vector.broadcast %207 : vector<1x128xf32> to vector<32x128xf32>
      %227 = arith.addf %225, %226 : vector<32x128xf32>
      %c0_92 = arith.constant 0 : index
      %c0_93 = arith.constant 0 : index
      %228 = vector.load %arg17[%c0_92, %c0_93] : memref<32x128xf32, #tpu.memory_space<vmem>>, vector<32x128xf32>
      tpu.vector_store %arg17[%c0_92, %c0_93], %227 {strides = array<i32>} : memref<32x128xf32, #tpu.memory_space<vmem>>, vector<32x128xf32>,
    } else {
    }
    return
  }
  func.func @transform_0(%arg0: i32) -> (i32, i32) {
    %c0_i32 = arith.constant 0 : i32
    %c0_i32_0 = arith.constant 0 : i32
    %c0_i32_1 = arith.constant 0 : i32
    return %c0_i32, %c0_i32_0 : i32, i32
  }
  func.func @transform_1(%arg0: i32) -> (i32, i32) {
    %c0_i32 = arith.constant 0 : i32
    %c0_i32_0 = arith.constant 0 : i32
    %c0_i32_1 = arith.constant 0 : i32
    return %c0_i32, %c0_i32_0 : i32, i32
  }
  func.func @transform_2(%arg0: i32) -> (i32, i32, i32) {
    %c0_i32 = arith.constant 0 : i32
    %c0_i32_0 = arith.constant 0 : i32
    %c0_i32_1 = arith.constant 0 : i32
    return %arg0, %c0_i32, %c0_i32_0 : i32, i32, i32
  }
  func.func @transform_3(%arg0: i32) -> (i32, i32, i32) {
    %c0_i32 = arith.constant 0 : i32
    %c0_i32_0 = arith.constant 0 : i32
    %c0_i32_1 = arith.constant 0 : i32
    return %arg0, %c0_i32, %c0_i32_0 : i32, i32, i32
  }
  func.func @transform_4(%arg0: i32) -> (i32, i32, i32) {
    %c0_i32 = arith.constant 0 : i32
    %c0_i32_0 = arith.constant 0 : i32
    %c0_i32_1 = arith.constant 0 : i32
    return %arg0, %c0_i32, %c0_i32_0 : i32, i32, i32
  }
  func.func @transform_5(%arg0: i32) -> (i32, i32, i32) {
    %c0_i32 = arith.constant 0 : i32
    %c0_i32_0 = arith.constant 0 : i32
    %c0_i32_1 = arith.constant 0 : i32
    return %arg0, %c0_i32, %c0_i32_0 : i32, i32, i32
  }
  func.func @transform_6(%arg0: i32) -> (i32, i32, i32) {
    %c0_i32 = arith.constant 0 : i32
    %c0_i32_0 = arith.constant 0 : i32
    %c0_i32_1 = arith.constant 0 : i32
    return %arg0, %c0_i32, %c0_i32_0 : i32, i32, i32
  }
  func.func @transform_7(%arg0: i32) -> (i32, i32, i32) {
    %c0_i32 = arith.constant 0 : i32
    %c0_i32_0 = arith.constant 0 : i32
    %c0_i32_1 = arith.constant 0 : i32
    return %arg0, %c0_i32, %c0_i32_0 : i32, i32, i32
  }
  func.func @transform_8(%arg0: i32) -> (i32, i32, i32) {
    %c0_i32 = arith.constant 0 : i32
    %c0_i32_0 = arith.constant 0 : i32
    %c0_i32_1 = arith.constant 0 : i32
    return %arg0, %c0_i32, %c0_i32_0 : i32, i32, i32
  }
  func.func @transform_9(%arg0: i32) -> (i32, i32, i32) {
    %c0_i32 = arith.constant 0 : i32
    %c0_i32_0 = arith.constant 0 : i32
    %c0_i32_1 = arith.constant 0 : i32
    return %arg0, %c0_i32, %c0_i32_0 : i32, i32, i32
  }
  func.func @transform_10(%arg0: i32) -> (i32, i32, i32) {
    %c0_i32 = arith.constant 0 : i32
    %c0_i32_0 = arith.constant 0 : i32
    %c0_i32_1 = arith.constant 0 : i32
    return %arg0, %c0_i32, %c0_i32_0 : i32, i32, i32
  }
  func.func @transform_11(%arg0: i32) -> (i32, i32, i32) {
    %c0_i32 = arith.constant 0 : i32
    %c0_i32_0 = arith.constant 0 : i32
    %c0_i32_1 = arith.constant 0 : i32
    return %arg0, %c0_i32, %c0_i32_0 : i32, i32, i32
  }
  func.func @transform_12(%arg0: i32) -> (i32, i32, i32) {
    %c0_i32 = arith.constant 0 : i32
    %c0_i32_0 = arith.constant 0 : i32
    %c0_i32_1 = arith.constant 0 : i32
    return %arg0, %c0_i32, %c0_i32_0 : i32, i32, i32
  }
  func.func @transform_13(%arg0: i32) -> (i32, i32, i32) {
    %c0_i32 = arith.constant 0 : i32
    %c0_i32_0 = arith.constant 0 : i32
    %c0_i32_1 = arith.constant 0 : i32
    return %arg0, %c0_i32, %c0_i32_0 : i32, i32, i32
  }
  func.func @transform_14(%arg0: i32) -> (i32, i32) {
    %c0_i32 = arith.constant 0 : i32
    %c0_i32_0 = arith.constant 0 : i32
    %c0_i32_1 = arith.constant 0 : i32
    return %c0_i32, %c0_i32_0 : i32, i32
  }
  func.func @transform_15(%arg0: i32) -> (i32, i32) {
    %c0_i32 = arith.constant 0 : i32
    %c0_i32_0 = arith.constant 0 : i32
    %c0_i32_1 = arith.constant 0 : i32
    return %c0_i32, %c0_i32_0 : i32, i32
  }
  func.func @transform_16(%arg0: i32) -> (i32, i32) {
    %c0_i32 = arith.constant 0 : i32
    %c0_i32_0 = arith.constant 0 : i32
    %c0_i32_1 = arith.constant 0 : i32
    return %c0_i32, %c0_i32_0 : i32, i32
  }
}

</mosaic_0001>

<llo_original>
// kernel: tpu_custom_call.1
$region0: #{tpu_custom_call.1}
  #allocation0 [shape = 'u32[]', space=smem, size = 0x4, offset = 0x4, fixed_abs, tag = 'smem constant byte address 0x4 - core index']
  #allocation1 [shape = 'u32[144,128]{1,0:T(1,128)}', space=vmem, size = 0x12000, scoped, tag = 'internal scratch']
  #allocation2 [shape = 'f32[32,128]{1,0:T(8,128)}', space=vmem, size = 0x4000, scoped, tag = 'scratch operand']
  %s0 = inlined_call_operand.hbm [shape: f32[32,128], index: 0, kind: input, shape index: {}]
  %s1 = inlined_call_operand.hbm [shape: f32[32,32], index: 1, kind: input, shape index: {}]
  %s2 = inlined_call_operand.hbm [shape: f32[2,1,128], index: 2, kind: input, shape index: {}]
  %s3 = inlined_call_operand.hbm [shape: f32[2,1,128], index: 3, kind: input, shape index: {}]
  %s4 = inlined_call_operand.hbm [shape: bf16[2,128,384], index: 4, kind: input, shape index: {}]
  %s5 = inlined_call_operand.hbm [shape: f32[2,1,384], index: 5, kind: input, shape index: {}]
  %s6 = inlined_call_operand.hbm [shape: bf16[2,128,128], index: 6, kind: input, shape index: {}]
  %s7 = inlined_call_operand.hbm [shape: f32[2,1,128], index: 7, kind: input, shape index: {}]
  %s8 = inlined_call_operand.hbm [shape: f32[2,1,128], index: 8, kind: input, shape index: {}]
  %s9 = inlined_call_operand.hbm [shape: f32[2,1,128], index: 9, kind: input, shape index: {}]
  %s10 = inlined_call_operand.hbm [shape: bf16[2,128,512], index: 10, kind: input, shape index: {}]
  %s11 = inlined_call_operand.hbm [shape: f32[2,1,512], index: 11, kind: input, shape index: {}]
  %s12 = inlined_call_operand.hbm [shape: bf16[2,512,128], index: 12, kind: input, shape index: {}]
  %s13 = inlined_call_operand.hbm [shape: f32[2,1,128], index: 13, kind: input, shape index: {}]
  %s14 = inlined_call_operand.hbm [shape: f32[1,128], index: 14, kind: input, shape index: {}]
  %s15 = inlined_call_operand.hbm [shape: f32[1,128], index: 15, kind: input, shape index: {}]
  %s16 = inlined_call_operand.hbm [shape: f32[32,128], index: 16, kind: output, shape index: {}]
  %s17 = sld [smem:[#allocation0]]
  $region169: #{tpu_custom_call.1} parent=0
    _
  %s19 = ssub.s32 1, %s17
  %s20 = scalar_select 0, %s19, %s17
  $region1: #{tpu_custom_call.1} parent=0
    #allocation3 [shape = 'u8[16384]{0}', space=vmem, size = 0x4000, scoped, tag = 'input window, operand 0, single buffered']
    #allocation4 [shape = 's32[2]{0}', space=sflag, size = 0x8, scoped, tag = 'scoped memory for tpu_custom_call.1']
    #allocation5 [shape = 's32[2]{0}', space=sflag, size = 0x8, scoped, tag = 'scoped memory for tpu_custom_call.1']
    #allocation6 [shape = 'u8[16384]{0}', space=vmem, size = 0x4000, scoped, tag = 'input window, operand 1, single buffered']
    #allocation7 [shape = 's32[1]{0}', space=sflag, size = 0x4, scoped, tag = 'scoped memory for tpu_custom_call.1']
    #allocation8 [shape = 'u8[1024]{0}', space=vmem, size = 0x400, scoped, tag = 'input window, operand 2']
    #allocation9 [shape = 'u8[1024]{0}', space=vmem, size = 0x400, scoped, tag = 'input window, operand 3']
    #allocation10 [shape = 'u8[196608]{0}', space=vmem, size = 0x30000, scoped, tag = 'input window, operand 4']
    #allocation11 [shape = 'u8[3072]{0}', space=vmem, size = 0xc00, scoped, tag = 'input window, operand 5']
    #allocation12 [shape = 'u8[65536]{0}', space=vmem, size = 0x10000, scoped, tag = 'input window, operand 6']
    #allocation13 [shape = 'u8[1024]{0}', space=vmem, size = 0x400, scoped, tag = 'input window, operand 7']
    #allocation14 [shape = 'u8[1024]{0}', space=vmem, size = 0x400, scoped, tag = 'input window, operand 8']
    #allocation15 [shape = 'u8[1024]{0}', space=vmem, size = 0x400, scoped, tag = 'input window, operand 9']
    #allocation16 [shape = 'u8[262144]{0}', space=vmem, size = 0x40000, scoped, tag = 'input window, operand 10']
    #allocation17 [shape = 'u8[4096]{0}', space=vmem, size = 0x1000, scoped, tag = 'input window, operand 11']
    #allocation18 [shape = 'u8[262144]{0}', space=vmem, size = 0x40000, scoped, tag = 'input window, operand 12']
    #allocation19 [shape = 'u8[1024]{0}', space=vmem, size = 0x400, scoped, tag = 'input window, operand 13']
    #allocation20 [shape = 'u8[512]{0}', space=vmem, size = 0x400, scoped, tag = 'input window, operand 14, single buffered']
    #allocation21 [shape = 'u8[512]{0}', space=vmem, size = 0x400, scoped, tag = 'input window, operand 15, single buffered']
    #allocation22 [shape = 's32[1]{0}', space=sflag, size = 0x4, scoped, tag = 'scoped memory for tpu_custom_call.1']
    #allocation23 [shape = 'u8[16384]{0}', space=vmem, size = 0x4000, scoped, tag = 'output window, operand 0, single buffered']
    %21 = vsyncpa [#allocation4], 0
    %22 = vsyncpa [#allocation7], 0
    %23 = vsyncpa [#allocation22], 0
    %24 = vsyncpa [#allocation5], 0
    loop: start=0, step=1, limit=4
    $region2: #{tpu_custom_call.1} parent=1 // loop_pre_header
      _
    $region3: #{tpu_custom_call.1} parent=1 // loop_header
      %s26 = sphi 0, %s30
      %p27 = scmp.ge.s32.totalorder %s26, 4
      %s34 = sphi 0, %s34
      %s36 = sphi 0, %s34
      %s37 = sphi 0, %s36
      %s51 = sphi 0, %s37
      %s55 = sphi 0, %s55
      %s57 = sphi 0, %s55
      %s58 = sphi 0, %s57
      %s72 = sphi 0, %s58
      %s78 = sphi 0, %s80
      %s81 = sphi 0, %s78
      %s82 = sphi 0, %s81
      %s98 = sphi 0, %s82
      %s104 = sphi 0, %s106
      %s107 = sphi 0, %s104
      %s108 = sphi 0, %s107
      %s124 = sphi 0, %s108
      %s130 = sphi 0, %s132
      %s133 = sphi 0, %s130
      %s134 = sphi 0, %s133
      %s150 = sphi 0, %s134
      %s156 = sphi 0, %s158
      %s159 = sphi 0, %s156
      %s160 = sphi 0, %s159
      %s176 = sphi 0, %s160
      %s182 = sphi 0, %s184
      %s185 = sphi 0, %s182
      %s186 = sphi 0, %s185
      %s202 = sphi 0, %s186
      %s208 = sphi 0, %s210
      %s211 = sphi 0, %s208
      %s212 = sphi 0, %s211
      %s228 = sphi 0, %s212
      %s234 = sphi 0, %s236
      %s237 = sphi 0, %s234
      %s238 = sphi 0, %s237
      %s254 = sphi 0, %s238
      %s260 = sphi 0, %s262
      %s263 = sphi 0, %s260
      %s264 = sphi 0, %s263
      %s280 = sphi 0, %s264
      %s286 = sphi 0, %s288
      %s289 = sphi 0, %s286
      %s290 = sphi 0, %s289
      %s306 = sphi 0, %s290
      %s312 = sphi 0, %s314
      %s315 = sphi 0, %s312
      %s316 = sphi 0, %s315
      %s332 = sphi 0, %s316
      %s338 = sphi 0, %s340
      %s341 = sphi 0, %s338
      %s342 = sphi 0, %s341
      %s358 = sphi 0, %s342
      %s364 = sphi 0, %s366
      %s367 = sphi 0, %s364
      %s368 = sphi 0, %s367
      %s384 = sphi 0, %s368
      %s388 = sphi 0, %s388
      %s390 = sphi 0, %s388
      %s391 = sphi 0, %s390
      %s405 = sphi 0, %s391
      %s409 = sphi 0, %s409
      %s411 = sphi 0, %s409
      %s412 = sphi 0, %s411
      %s426 = sphi 0, %s412
      %s430 = sphi 0, %s430
      %s432 = sphi 0, %s430
      %s433 = sphi 0, %s432
      %s447 = sphi 0, %s433
    $region4: #{tpu_custom_call.1} parent=1 // loop_header_branch
      %29 = sbr.rel (%p27) target = $region8
    $region5: #{tpu_custom_call.1} parent=1 // loop_body
      %s31 = ssub.s32 %s26, 1
      %s32 = ssub.s32 %s26, 2
      %s33 = sadd.s32 %s26, 1
      %s35 = sadd.s32 %s34, 1
      %p38 = scmp.eq.s32.totalorder %s26, 1
      %p39 = scmp.ne.s32.totalorder %s34, %s36
      %p40 = scmp.eq.s32.totalorder %s26, 0
      %p41 = por %p39, %p40
      %p42 = scmp.ne.s32.totalorder %s34, %s36
      %p43 = scmp.eq.s32.totalorder %s31, 1
      %p44 = por %p42, %p43
      %p45 = scmp.ne.s32.totalorder %s36, %s37
      %p46 = scmp.eq.s32.totalorder %s31, 0
      %p47 = por %p45, %p46
      %p48 = scmp.ne.s32.totalorder %s36, %s37
      %p49 = scmp.eq.s32.totalorder %s32, 1
      %p50 = por %p48, %p49
      %p52 = scmp.ne.s32.totalorder %s37, %s51
      %p53 = scmp.eq.s32.totalorder %s32, 0
      %p54 = por %p52, %p53
      %s56 = sadd.s32 %s55, 1
      %p59 = scmp.eq.s32.totalorder %s26, 1
      %p60 = scmp.ne.s32.totalorder %s55, %s57
      %p61 = scmp.eq.s32.totalorder %s26, 0
      %p62 = por %p60, %p61
      %p63 = scmp.ne.s32.totalorder %s55, %s57
      %p64 = scmp.eq.s32.totalorder %s31, 1
      %p65 = por %p63, %p64
      %p66 = scmp.ne.s32.totalorder %s57, %s58
      %p67 = scmp.eq.s32.totalorder %s31, 0
      %p68 = por %p66, %p67
      %p69 = scmp.ne.s32.totalorder %s57, %s58
      %p70 = scmp.eq.s32.totalorder %s32, 1
      %p71 = por %p69, %p70
      %p73 = scmp.ne.s32.totalorder %s58, %s72
      %p74 = scmp.eq.s32.totalorder %s32, 0
      %p75 = por %p73, %p74
      %s76 = ssub.s32 %s26, %s33
      %p77 = scmp.eq.s32.totalorder %s76, 0
      %s79 = sadd.s32 %s78, 1
      %s80 = scalar_select %p77, %s78, %s79
      %p83 = pneg %p77
      %p84 = scmp.eq.s32.totalorder %s26, 1
      %p85 = por %p83, %p84
      %p86 = scmp.ne.s32.totalorder %s78, %s81
      %p87 = scmp.eq.s32.totalorder %s26, 0
      %p88 = por %p86, %p87
      %p89 = scmp.ne.s32.totalorder %s78, %s81
      %p90 = scmp.eq.s32.totalorder %s31, 1
      %p91 = por %p89, %p90
      %p92 = scmp.ne.s32.totalorder %s81, %s82
      %p93 = scmp.eq.s32.totalorder %s31, 0
      %p94 = por %p92, %p93
      %p95 = scmp.ne.s32.totalorder %s81, %s82
      %p96 = scmp.eq.s32.totalorder %s32, 1
      %p97 = por %p95, %p96
      %p99 = scmp.ne.s32.totalorder %s82, %s98
      %p100 = scmp.eq.s32.totalorder %s32, 0
      %p101 = por %p99, %p100
      %s102 = ssub.s32 %s26, %s33
      %p103 = scmp.eq.s32.totalorder %s102, 0
      %s105 = sadd.s32 %s104, 1
      %s106 = scalar_select %p103, %s104, %s105
      %p109 = pneg %p103
      %p110 = scmp.eq.s32.totalorder %s26, 1
      %p111 = por %p109, %p110
      %p112 = scmp.ne.s32.totalorder %s104, %s107
      %p113 = scmp.eq.s32.totalorder %s26, 0
      %p114 = por %p112, %p113
      %p115 = scmp.ne.s32.totalorder %s104, %s107
      %p116 = scmp.eq.s32.totalorder %s31, 1
      %p117 = por %p115, %p116
      %p118 = scmp.ne.s32.totalorder %s107, %s108
      %p119 = scmp.eq.s32.totalorder %s31, 0
      %p120 = por %p118, %p119
      %p121 = scmp.ne.s32.totalorder %s107, %s108
      %p122 = scmp.eq.s32.totalorder %s32, 1
      %p123 = por %p121, %p122
      %p125 = scmp.ne.s32.totalorder %s108, %s124
      %p126 = scmp.eq.s32.totalorder %s32, 0
      %p127 = por %p125, %p126
      %s128 = ssub.s32 %s26, %s33
      %p129 = scmp.eq.s32.totalorder %s128, 0
      %s131 = sadd.s32 %s130, 1
      %s132 = scalar_select %p129, %s130, %s131
      %p135 = pneg %p129
      %p136 = scmp.eq.s32.totalorder %s26, 1
      %p137 = por %p135, %p136
      %p138 = scmp.ne.s32.totalorder %s130, %s133
      %p139 = scmp.eq.s32.totalorder %s26, 0
      %p140 = por %p138, %p139
      %p141 = scmp.ne.s32.totalorder %s130, %s133
      %p142 = scmp.eq.s32.totalorder %s31, 1
      %p143 = por %p141, %p142
      %p144 = scmp.ne.s32.totalorder %s133, %s134
      %p145 = scmp.eq.s32.totalorder %s31, 0
      %p146 = por %p144, %p145
      %p147 = scmp.ne.s32.totalorder %s133, %s134
      %p148 = scmp.eq.s32.totalorder %s32, 1
      %p149 = por %p147, %p148
      %p151 = scmp.ne.s32.totalorder %s134, %s150
      %p152 = scmp.eq.s32.totalorder %s32, 0
      %p153 = por %p151, %p152
      %s154 = ssub.s32 %s26, %s33
      %p155 = scmp.eq.s32.totalorder %s154, 0
      %s157 = sadd.s32 %s156, 1
      %s158 = scalar_select %p155, %s156, %s157
      %p161 = pneg %p155
      %p162 = scmp.eq.s32.totalorder %s26, 1
      %p163 = por %p161, %p162
      %p164 = scmp.ne.s32.totalorder %s156, %s159
      %p165 = scmp.eq.s32.totalorder %s26, 0
      %p166 = por %p164, %p165
      %p167 = scmp.ne.s32.totalorder %s156, %s159
      %p168 = scmp.eq.s32.totalorder %s31, 1
      %p169 = por %p167, %p168
      %p170 = scmp.ne.s32.totalorder %s159, %s160
      %p171 = scmp.eq.s32.totalorder %s31, 0
      %p172 = por %p170, %p171
      %p173 = scmp.ne.s32.totalorder %s159, %s160
      %p174 = scmp.eq.s32.totalorder %s32, 1
      %p175 = por %p173, %p174
      %p177 = scmp.ne.s32.totalorder %s160, %s176
      %p178 = scmp.eq.s32.totalorder %s32, 0
      %p179 = por %p177, %p178
      %s180 = ssub.s32 %s26, %s33
      %p181 = scmp.eq.s32.totalorder %s180, 0
      %s183 = sadd.s32 %s182, 1
      %s184 = scalar_select %p181, %s182, %s183
      %p187 = pneg %p181
      %p188 = scmp.eq.s32.totalorder %s26, 1
      %p189 = por %p187, %p188
      %p190 = scmp.ne.s32.totalorder %s182, %s185
      %p191 = scmp.eq.s32.totalorder %s26, 0
      %p192 = por %p190, %p191
      %p193 = scmp.ne.s32.totalorder %s182, %s185
      %p194 = scmp.eq.s32.totalorder %s31, 1
      %p195 = por %p193, %p194
      %p196 = scmp.ne.s32.totalorder %s185, %s186
      %p197 = scmp.eq.s32.totalorder %s31, 0
      %p198 = por %p196, %p197
      %p199 = scmp.ne.s32.totalorder %s185, %s186
      %p200 = scmp.eq.s32.totalorder %s32, 1
      %p201 = por %p199, %p200
      %p203 = scmp.ne.s32.totalorder %s186, %s202
      %p204 = scmp.eq.s32.totalorder %s32, 0
      %p205 = por %p203, %p204
      %s206 = ssub.s32 %s26, %s33
      %p207 = scmp.eq.s32.totalorder %s206, 0
      %s209 = sadd.s32 %s208, 1
      %s210 = scalar_select %p207, %s208, %s209
      %p213 = pneg %p207
      %p214 = scmp.eq.s32.totalorder %s26, 1
      %p215 = por %p213, %p214
      %p216 = scmp.ne.s32.totalorder %s208, %s211
      %p217 = scmp.eq.s32.totalorder %s26, 0
      %p218 = por %p216, %p217
      %p219 = scmp.ne.s32.totalorder %s208, %s211
      %p220 = scmp.eq.s32.totalorder %s31, 1
      %p221 = por %p219, %p220
      %p222 = scmp.ne.s32.totalorder %s211, %s212
      %p223 = scmp.eq.s32.totalorder %s31, 0
      %p224 = por %p222, %p223
      %p225 = scmp.ne.s32.totalorder %s211, %s212
      %p226 = scmp.eq.s32.totalorder %s32, 1
      %p227 = por %p225, %p226
      %p229 = scmp.ne.s32.totalorder %s212, %s228
      %p230 = scmp.eq.s32.totalorder %s32, 0
      %p231 = por %p229, %p230
      %s232 = ssub.s32 %s26, %s33
      %p233 = scmp.eq.s32.totalorder %s232, 0
      %s235 = sadd.s32 %s234, 1
      %s236 = scalar_select %p233, %s234, %s235
      %p239 = pneg %p233
      %p240 = scmp.eq.s32.totalorder %s26, 1
      %p241 = por %p239, %p240
      %p242 = scmp.ne.s32.totalorder %s234, %s237
      %p243 = scmp.eq.s32.totalorder %s26, 0
      %p244 = por %p242, %p243
      %p245 = scmp.ne.s32.totalorder %s234, %s237
      %p246 = scmp.eq.s32.totalorder %s31, 1
      %p247 = por %p245, %p246
      %p248 = scmp.ne.s32.totalorder %s237, %s238
      %p249 = scmp.eq.s32.totalorder %s31, 0
      %p250 = por %p248, %p249
      %p251 = scmp.ne.s32.totalorder %s237, %s238
      %p252 = scmp.eq.s32.totalorder %s32, 1
      %p253 = por %p251, %p252
      %p255 = scmp.ne.s32.totalorder %s238, %s254
      %p256 = scmp.eq.s32.totalorder %s32, 0
      %p257 = por %p255, %p256
      %s258 = ssub.s32 %s26, %s33
      %p259 = scmp.eq.s32.totalorder %s258, 0
      %s261 = sadd.s32 %s260, 1
      %s262 = scalar_select %p259, %s260, %s261
      %p265 = pneg %p259
      %p266 = scmp.eq.s32.totalorder %s26, 1
      %p267 = por %p265, %p266
      %p268 = scmp.ne.s32.totalorder %s260, %s263
      %p269 = scmp.eq.s32.totalorder %s26, 0
      %p270 = por %p268, %p269
      %p271 = scmp.ne.s32.totalorder %s260, %s263
      %p272 = scmp.eq.s32.totalorder %s31, 1
      %p273 = por %p271, %p272
      %p274 = scmp.ne.s32.totalorder %s263, %s264
      %p275 = scmp.eq.s32.totalorder %s31, 0
      %p276 = por %p274, %p275
      %p277 = scmp.ne.s32.totalorder %s263, %s264
      %p278 = scmp.eq.s32.totalorder %s32, 1
      %p279 = por %p277, %p278
      %p281 = scmp.ne.s32.totalorder %s264, %s280
      %p282 = scmp.eq.s32.totalorder %s32, 0
      %p283 = por %p281, %p282
      %s284 = ssub.s32 %s26, %s33
      %p285 = scmp.eq.s32.totalorder %s284, 0
      %s287 = sadd.s32 %s286, 1
      %s288 = scalar_select %p285, %s286, %s287
      %p291 = pneg %p285
      %p292 = scmp.eq.s32.totalorder %s26, 1
      %p293 = por %p291, %p292
      %p294 = scmp.ne.s32.totalorder %s286, %s289
      %p295 = scmp.eq.s32.totalorder %s26, 0
      %p296 = por %p294, %p295
      %p297 = scmp.ne.s32.totalorder %s286, %s289
      %p298 = scmp.eq.s32.totalorder %s31, 1
      %p299 = por %p297, %p298
      %p300 = scmp.ne.s32.totalorder %s289, %s290
      %p301 = scmp.eq.s32.totalorder %s31, 0
      %p302 = por %p300, %p301
      %p303 = scmp.ne.s32.totalorder %s289, %s290
      %p304 = scmp.eq.s32.totalorder %s32, 1
      %p305 = por %p303, %p304
      %p307 = scmp.ne.s32.totalorder %s290, %s306
      %p308 = scmp.eq.s32.totalorder %s32, 0
      %p309 = por %p307, %p308
      %s310 = ssub.s32 %s26, %s33
      %p311 = scmp.eq.s32.totalorder %s310, 0
      %s313 = sadd.s32 %s312, 1
      %s314 = scalar_select %p311, %s312, %s313
      %p317 = pneg %p311
      %p318 = scmp.eq.s32.totalorder %s26, 1
      %p319 = por %p317, %p318
      %p320 = scmp.ne.s32.totalorder %s312, %s315
      %p321 = scmp.eq.s32.totalorder %s26, 0
      %p322 = por %p320, %p321
      %p323 = scmp.ne.s32.totalorder %s312, %s315
      %p324 = scmp.eq.s32.totalorder %s31, 1
      %p325 = por %p323, %p324
      %p326 = scmp.ne.s32.totalorder %s315, %s316
      %p327 = scmp.eq.s32.totalorder %s31, 0
      %p328 = por %p326, %p327
      %p329 = scmp.ne.s32.totalorder %s315, %s316
      %p330 = scmp.eq.s32.totalorder %s32, 1
      %p331 = por %p329, %p330
      %p333 = scmp.ne.s32.totalorder %s316, %s332
      %p334 = scmp.eq.s32.totalorder %s32, 0
      %p335 = por %p333, %p334
      %s336 = ssub.s32 %s26, %s33
      %p337 = scmp.eq.s32.totalorder %s336, 0
      %s339 = sadd.s32 %s338, 1
      %s340 = scalar_select %p337, %s338, %s339
      %p343 = pneg %p337
      %p344 = scmp.eq.s32.totalorder %s26, 1
      %p345 = por %p343, %p344
      %p346 = scmp.ne.s32.totalorder %s338, %s341
      %p347 = scmp.eq.s32.totalorder %s26, 0
      %p348 = por %p346, %p347
      %p349 = scmp.ne.s32.totalorder %s338, %s341
      %p350 = scmp.eq.s32.totalorder %s31, 1
      %p351 = por %p349, %p350
      %p352 = scmp.ne.s32.totalorder %s341, %s342
      %p353 = scmp.eq.s32.totalorder %s31, 0
      %p354 = por %p352, %p353
      %p355 = scmp.ne.s32.totalorder %s341, %s342
      %p356 = scmp.eq.s32.totalorder %s32, 1
      %p357 = por %p355, %p356
      %p359 = scmp.ne.s32.totalorder %s342, %s358
      %p360 = scmp.eq.s32.totalorder %s32, 0
      %p361 = por %p359, %p360
      %s362 = ssub.s32 %s26, %s33
      %p363 = scmp.eq.s32.totalorder %s362, 0
      %s365 = sadd.s32 %s364, 1
      %s366 = scalar_select %p363, %s364, %s365
      %p369 = pneg %p363
      %p370 = scmp.eq.s32.totalorder %s26, 1
      %p371 = por %p369, %p370
      %p372 = scmp.ne.s32.totalorder %s364, %s367
      %p373 = scmp.eq.s32.totalorder %s26, 0
      %p374 = por %p372, %p373
      %p375 = scmp.ne.s32.totalorder %s364, %s367
      %p376 = scmp.eq.s32.totalorder %s31, 1
      %p377 = por %p375, %p376
      %p378 = scmp.ne.s32.totalorder %s367, %s368
      %p379 = scmp.eq.s32.totalorder %s31, 0
      %p380 = por %p378, %p379
      %p381 = scmp.ne.s32.totalorder %s367, %s368
      %p382 = scmp.eq.s32.totalorder %s32, 1
      %p383 = por %p381, %p382
      %p385 = scmp.ne.s32.totalorder %s368, %s384
      %p386 = scmp.eq.s32.totalorder %s32, 0
      %p387 = por %p385, %p386
      %s389 = sadd.s32 %s388, 1
      %p392 = scmp.eq.s32.totalorder %s26, 1
      %p393 = scmp.ne.s32.totalorder %s388, %s390
      %p394 = scmp.eq.s32.totalorder %s26, 0
      %p395 = por %p393, %p394
      %p396 = scmp.ne.s32.totalorder %s388, %s390
      %p397 = scmp.eq.s32.totalorder %s31, 1
      %p398 = por %p396, %p397
      %p399 = scmp.ne.s32.totalorder %s390, %s391
      %p400 = scmp.eq.s32.totalorder %s31, 0
      %p401 = por %p399, %p400
      %p402 = scmp.ne.s32.totalorder %s390, %s391
      %p403 = scmp.eq.s32.totalorder %s32, 1
      %p404 = por %p402, %p403
      %p406 = scmp.ne.s32.totalorder %s391, %s405
      %p407 = scmp.eq.s32.totalorder %s32, 0
      %p408 = por %p406, %p407
      %s410 = sadd.s32 %s409, 1
      %p413 = scmp.eq.s32.totalorder %s26, 1
      %p414 = scmp.ne.s32.totalorder %s409, %s411
      %p415 = scmp.eq.s32.totalorder %s26, 0
      %p416 = por %p414, %p415
      %p417 = scmp.ne.s32.totalorder %s409, %s411
      %p418 = scmp.eq.s32.totalorder %s31, 1
      %p419 = por %p417, %p418
      %p420 = scmp.ne.s32.totalorder %s411, %s412
      %p421 = scmp.eq.s32.totalorder %s31, 0
      %p422 = por %p420, %p421
      %p423 = scmp.ne.s32.totalorder %s411, %s412
      %p424 = scmp.eq.s32.totalorder %s32, 1
      %p425 = por %p423, %p424
      %p427 = scmp.ne.s32.totalorder %s412, %s426
      %p428 = scmp.eq.s32.totalorder %s32, 0
      %p429 = por %p427, %p428
      %s431 = sadd.s32 %s430, 1
      %p434 = scmp.eq.s32.totalorder %s26, 1
      %p435 = scmp.ne.s32.totalorder %s430, %s432
      %p436 = scmp.eq.s32.totalorder %s26, 0
      %p437 = por %p435, %p436
      %p438 = scmp.ne.s32.totalorder %s430, %s432
      %p439 = scmp.eq.s32.totalorder %s31, 1
      %p440 = por %p438, %p439
      %p441 = scmp.ne.s32.totalorder %s432, %s433
      %p442 = scmp.eq.s32.totalorder %s31, 0
      %p443 = por %p441, %p442
      %p444 = scmp.ne.s32.totalorder %s432, %s433
      %p445 = scmp.eq.s32.totalorder %s32, 1
      %p446 = por %p444, %p445
      %p448 = scmp.ne.s32.totalorder %s433, %s447
      %p449 = scmp.eq.s32.totalorder %s32, 0
      %p450 = por %p448, %p449
      %p451 = scmp.le.s32.totalorder 1, %s26
      %p452 = scmp.lt.s32.totalorder %s26, 3
      %p453 = pnand %p451, %p452
      %p454 = pneg %p453
      // Predicated region
      $region9: #{tpu_custom_call.1} parent=5 // pred_check
        _
      $region10: #{tpu_custom_call.1} parent=5 // pred_check_branch
        %456 = sbr.rel (%p453) target = $region12
      $region11: #{tpu_custom_call.1} parent=5 // pred_region
        %s457 = ssub.s32 %s26, 1
        // Predicated region
        $region13: #{tpu_custom_call.1} parent=11 // pred_check
          %p458 = pneg %p47
        $region14: #{tpu_custom_call.1} parent=11 // pred_check_branch
          %460 = sbr.rel (%p458) target = $region16
        $region15: #{tpu_custom_call.1} parent=11 // pred_region
          %s462 = ssub.s32 512, 512
          %463 = vsyncadd [#allocation4], %s462
          %s464 = sshll.u32 [#allocation3], 4
          %s465 = int_to_ptr.vmem [resolvable:$true] %s464
          %470 = dma.hbm_to_vmem [thread:$0]  %s0, 512, %s465, [#allocation4], 128, 128, 8
        $region16: #{tpu_custom_call.1} parent=11 // pred_fallthru
          _
        // Predicated region
        $region17: #{tpu_custom_call.1} parent=11 // pred_check
          %p471 = pneg %p68
        $region18: #{tpu_custom_call.1} parent=11 // pred_check_branch
          %473 = sbr.rel (%p471) target = $region20
        $region19: #{tpu_custom_call.1} parent=11 // pred_region
          %s475 = ssub.s32 512, 512
          %476 = vsyncadd [#allocation7], %s475
          %s477 = sshll.u32 [#allocation6], 4
          %s478 = int_to_ptr.vmem [resolvable:$true] %s477
          %483 = dma.hbm_to_vmem [thread:$0]  %s1, 512, %s478, [#allocation7], 128, 128, 8
        $region20: #{tpu_custom_call.1} parent=11 // pred_fallthru
          _
        // Predicated region
        $region21: #{tpu_custom_call.1} parent=11 // pred_check
          %p484 = pneg %p401
        $region22: #{tpu_custom_call.1} parent=11 // pred_check_branch
          %486 = sbr.rel (%p484) target = $region24
        $region23: #{tpu_custom_call.1} parent=11 // pred_region
          %s488 = ssub.s32 16, 16
          %489 = vsyncadd [#allocation7], %s488
          %s491 = sshll.u32 [#allocation20], 4
          %s492 = int_to_ptr.vmem [resolvable:$true] %s491
          %494 = dma.hbm_to_vmem [thread:$0]  %s14, 16, %s492, [#allocation7]
        $region24: #{tpu_custom_call.1} parent=11 // pred_fallthru
          _
        // Predicated region
        $region25: #{tpu_custom_call.1} parent=11 // pred_check
          %p495 = pneg %p422
        $region26: #{tpu_custom_call.1} parent=11 // pred_check_branch
          %497 = sbr.rel (%p495) target = $region28
        $region27: #{tpu_custom_call.1} parent=11 // pred_region
          %s499 = ssub.s32 16, 16
          %500 = vsyncadd [#allocation22], %s499
          %s502 = sshll.u32 [#allocation21], 4
          %s503 = int_to_ptr.vmem [resolvable:$true] %s502
          %505 = dma.hbm_to_vmem [thread:$0]  %s15, 16, %s503, [#allocation22]
        $region28: #{tpu_custom_call.1} parent=11 // pred_fallthru
          _
      $region12: #{tpu_custom_call.1} parent=5 // pred_fallthru
        _
      %p506 = scmp.lt.s32.totalorder %s26, 2
      // Predicated region
      $region29: #{tpu_custom_call.1} parent=5 // pred_check
        %p507 = pneg %p506
      $region30: #{tpu_custom_call.1} parent=5 // pred_check_branch
        %509 = sbr.rel (%p507) target = $region32
      $region31: #{tpu_custom_call.1} parent=5 // pred_region
        // Predicated region
        $region33: #{tpu_custom_call.1} parent=31 // pred_check
          %p510 = pneg %p88
        $region34: #{tpu_custom_call.1} parent=31 // pred_check_branch
          %512 = sbr.rel (%p510) target = $region36
        $region35: #{tpu_custom_call.1} parent=31 // pred_region
          %s513 = sand.u32 %s26, 1
          %s514 = scalar_lea.sflag [#allocation4], %s513
          %s515 = sand.u32 %s78, 1
          %s516 = scalar_lea.vmem [#allocation8], %s515
          %s518 = ssub.s32 16, 16
          %519 = vsyncadd %s514, %s518
          %s520 = smul.addr %s26, 16
          %s521 = scalar_lea.hbm %s2, %s520
          %s523 = sshll.u32 %s516, 4
          %s524 = int_to_ptr.vmem [resolvable:$true] %s523
          %526 = dma.hbm_to_vmem [thread:$0]  %s521, 16, %s524, %s514
        $region36: #{tpu_custom_call.1} parent=31 // pred_fallthru
          _
        // Predicated region
        $region37: #{tpu_custom_call.1} parent=31 // pred_check
          %p527 = pneg %p114
        $region38: #{tpu_custom_call.1} parent=31 // pred_check_branch
          %529 = sbr.rel (%p527) target = $region40
        $region39: #{tpu_custom_call.1} parent=31 // pred_region
          %s530 = sand.u32 %s26, 1
          %s531 = scalar_lea.sflag [#allocation4], %s530
          %s532 = sand.u32 %s104, 1
          %s533 = scalar_lea.vmem [#allocation9], %s532
          %s535 = ssub.s32 16, 16
          %536 = vsyncadd %s531, %s535
          %s537 = smul.addr %s26, 16
          %s538 = scalar_lea.hbm %s3, %s537
          %s540 = sshll.u32 %s533, 4
          %s541 = int_to_ptr.vmem [resolvable:$true] %s540
          %543 = dma.hbm_to_vmem [thread:$0]  %s538, 16, %s541, %s531
        $region40: #{tpu_custom_call.1} parent=31 // pred_fallthru
          _
        // Predicated region
        $region41: #{tpu_custom_call.1} parent=31 // pred_check
          %p544 = pneg %p140
        $region42: #{tpu_custom_call.1} parent=31 // pred_check_branch
          %546 = sbr.rel (%p544) target = $region44
        $region43: #{tpu_custom_call.1} parent=31 // pred_region
          %s547 = sand.u32 %s26, 1
          %s548 = scalar_lea.sflag [#allocation4], %s547
          %s549 = sand.u32 %s130, 1
          %s550 = smul.addr %s549, 192
          %s551 = scalar_lea.vmem [#allocation10], %s550
          %s553 = ssub.s32 3072, 3072
          %554 = vsyncadd %s548, %s553
          %s555 = smul.addr %s26, 48
          %s556 = smul.addr %s555, 64
          %s557 = scalar_lea.hbm %s4, %s556
          %s558 = sshll.u32 %s551, 4
          %s559 = int_to_ptr.vmem [resolvable:$true] %s558
          %564 = dma.hbm_to_vmem [thread:$0]  %s557, 3072, %s559, %s548, 192, 192, 12
        $region44: #{tpu_custom_call.1} parent=31 // pred_fallthru
          _
        // Predicated region
        $region45: #{tpu_custom_call.1} parent=31 // pred_check
          %p565 = pneg %p166
        $region46: #{tpu_custom_call.1} parent=31 // pred_check_branch
          %567 = sbr.rel (%p565) target = $region48
        $region47: #{tpu_custom_call.1} parent=31 // pred_region
          %s568 = sand.u32 %s26, 1
          %s569 = scalar_lea.sflag [#allocation4], %s568
          %s570 = sand.u32 %s156, 1
          %s571 = smul.addr %s570, 3
          %s572 = scalar_lea.vmem [#allocation11], %s571
          %s574 = ssub.s32 48, 48
          %575 = vsyncadd %s569, %s574
          %s576 = smul.addr %s26, 3
          %s577 = smul.addr %s576, 16
          %s578 = scalar_lea.hbm %s5, %s577
          %s580 = sshll.u32 %s572, 4
          %s581 = int_to_ptr.vmem [resolvable:$true] %s580
          %583 = dma.hbm_to_vmem [thread:$0]  %s578, 48, %s581, %s569
        $region48: #{tpu_custom_call.1} parent=31 // pred_fallthru
          _
        // Predicated region
        $region49: #{tpu_custom_call.1} parent=31 // pred_check
          %p584 = pneg %p192
        $region50: #{tpu_custom_call.1} parent=31 // pred_check_branch
          %586 = sbr.rel (%p584) target = $region52
        $region51: #{tpu_custom_call.1} parent=31 // pred_region
          %s587 = sand.u32 %s26, 1
          %s588 = scalar_lea.sflag [#allocation4], %s587
          %s589 = sand.u32 %s182, 1
          %s590 = smul.addr %s589, 64
          %s591 = scalar_lea.vmem [#allocation12], %s590
          %s593 = ssub.s32 1024, 1024
          %594 = vsyncadd %s588, %s593
          %s595 = smul.addr %s26, 16
          %s596 = smul.addr %s595, 64
          %s597 = scalar_lea.hbm %s6, %s596
          %s598 = sshll.u32 %s591, 4
          %s599 = int_to_ptr.vmem [resolvable:$true] %s598
          %604 = dma.hbm_to_vmem [thread:$0]  %s597, 1024, %s599, %s588, 64, 64, 4
        $region52: #{tpu_custom_call.1} parent=31 // pred_fallthru
          _
        // Predicated region
        $region53: #{tpu_custom_call.1} parent=31 // pred_check
          %p605 = pneg %p218
        $region54: #{tpu_custom_call.1} parent=31 // pred_check_branch
          %607 = sbr.rel (%p605) target = $region56
        $region55: #{tpu_custom_call.1} parent=31 // pred_region
          %s608 = sand.u32 %s26, 1
          %s609 = scalar_lea.sflag [#allocation4], %s608
          %s610 = sand.u32 %s208, 1
          %s611 = scalar_lea.vmem [#allocation13], %s610
          %s613 = ssub.s32 16, 16
          %614 = vsyncadd %s609, %s613
          %s615 = smul.addr %s26, 16
          %s616 = scalar_lea.hbm %s7, %s615
          %s618 = sshll.u32 %s611, 4
          %s619 = int_to_ptr.vmem [resolvable:$true] %s618
          %621 = dma.hbm_to_vmem [thread:$0]  %s616, 16, %s619, %s609
        $region56: #{tpu_custom_call.1} parent=31 // pred_fallthru
          _
        // Predicated region
        $region57: #{tpu_custom_call.1} parent=31 // pred_check
          %p622 = pneg %p244
        $region58: #{tpu_custom_call.1} parent=31 // pred_check_branch
          %624 = sbr.rel (%p622) target = $region60
        $region59: #{tpu_custom_call.1} parent=31 // pred_region
          %s625 = sand.u32 %s26, 1
          %s626 = scalar_lea.sflag [#allocation4], %s625
          %s627 = sand.u32 %s234, 1
          %s628 = scalar_lea.vmem [#allocation14], %s627
          %s630 = ssub.s32 16, 16
          %631 = vsyncadd %s626, %s630
          %s632 = smul.addr %s26, 16
          %s633 = scalar_lea.hbm %s8, %s632
          %s635 = sshll.u32 %s628, 4
          %s636 = int_to_ptr.vmem [resolvable:$true] %s635
          %638 = dma.hbm_to_vmem [thread:$0]  %s633, 16, %s636, %s626
        $region60: #{tpu_custom_call.1} parent=31 // pred_fallthru
          _
        // Predicated region
        $region61: #{tpu_custom_call.1} parent=31 // pred_check
          %p639 = pneg %p270
        $region62: #{tpu_custom_call.1} parent=31 // pred_check_branch
          %641 = sbr.rel (%p639) target = $region64
        $region63: #{tpu_custom_call.1} parent=31 // pred_region
          %s642 = sand.u32 %s26, 1
          %s643 = scalar_lea.sflag [#allocation4], %s642
          %s644 = sand.u32 %s260, 1
          %s645 = scalar_lea.vmem [#allocation15], %s644
          %s647 = ssub.s32 16, 16
          %648 = vsyncadd %s643, %s647
          %s649 = smul.addr %s26, 16
          %s650 = scalar_lea.hbm %s9, %s649
          %s652 = sshll.u32 %s645, 4
          %s653 = int_to_ptr.vmem [resolvable:$true] %s652
          %655 = dma.hbm_to_vmem [thread:$0]  %s650, 16, %s653, %s643
        $region64: #{tpu_custom_call.1} parent=31 // pred_fallthru
          _
        // Predicated region
        $region65: #{tpu_custom_call.1} parent=31 // pred_check
          %p656 = pneg %p296
        $region66: #{tpu_custom_call.1} parent=31 // pred_check_branch
          %658 = sbr.rel (%p656) target = $region68
        $region67: #{tpu_custom_call.1} parent=31 // pred_region
          %s659 = sand.u32 %s26, 1
          %s660 = scalar_lea.sflag [#allocation4], %s659
          %s661 = sand.u32 %s286, 1
          %s662 = smul.addr %s661, 256
          %s663 = scalar_lea.vmem [#allocation16], %s662
          %s665 = ssub.s32 4096, 4096
          %666 = vsyncadd %s660, %s665
          %s667 = smul.addr %s26, 64
          %s668 = smul.addr %s667, 64
          %s669 = scalar_lea.hbm %s10, %s668
          %s670 = sshll.u32 %s663, 4
          %s671 = int_to_ptr.vmem [resolvable:$true] %s670
          %676 = dma.hbm_to_vmem [thread:$0]  %s669, 4096, %s671, %s660, 256, 256, 16
        $region68: #{tpu_custom_call.1} parent=31 // pred_fallthru
          _
        // Predicated region
        $region69: #{tpu_custom_call.1} parent=31 // pred_check
          %p677 = pneg %p322
        $region70: #{tpu_custom_call.1} parent=31 // pred_check_branch
          %679 = sbr.rel (%p677) target = $region72
        $region71: #{tpu_custom_call.1} parent=31 // pred_region
          %s680 = sand.u32 %s26, 1
          %s681 = scalar_lea.sflag [#allocation4], %s680
          %s682 = sand.u32 %s312, 1
          %s683 = smul.addr %s682, 4
          %s684 = scalar_lea.vmem [#allocation17], %s683
          %s686 = ssub.s32 64, 64
          %687 = vsyncadd %s681, %s686
          %s688 = smul.addr %s26, 4
          %s689 = smul.addr %s688, 16
          %s690 = scalar_lea.hbm %s11, %s689
          %s692 = sshll.u32 %s684, 4
          %s693 = int_to_ptr.vmem [resolvable:$true] %s692
          %695 = dma.hbm_to_vmem [thread:$0]  %s690, 64, %s693, %s681
        $region72: #{tpu_custom_call.1} parent=31 // pred_fallthru
          _
        // Predicated region
        $region73: #{tpu_custom_call.1} parent=31 // pred_check
          %p696 = pneg %p348
        $region74: #{tpu_custom_call.1} parent=31 // pred_check_branch
          %698 = sbr.rel (%p696) target = $region76
        $region75: #{tpu_custom_call.1} parent=31 // pred_region
          %s699 = sand.u32 %s26, 1
          %s700 = scalar_lea.sflag [#allocation4], %s699
          %s701 = sand.u32 %s338, 1
          %s702 = smul.addr %s701, 256
          %s703 = scalar_lea.vmem [#allocation18], %s702
          %s705 = ssub.s32 4096, 4096
          %706 = vsyncadd %s700, %s705
          %s707 = smul.addr %s26, 64
          %s708 = smul.addr %s707, 64
          %s709 = scalar_lea.hbm %s12, %s708
          %s710 = sshll.u32 %s703, 4
          %s711 = int_to_ptr.vmem [resolvable:$true] %s710
          %716 = dma.hbm_to_vmem [thread:$0]  %s709, 4096, %s711, %s700, 64, 64, 4
        $region76: #{tpu_custom_call.1} parent=31 // pred_fallthru
          _
        // Predicated region
        $region77: #{tpu_custom_call.1} parent=31 // pred_check
          %p717 = pneg %p374
        $region78: #{tpu_custom_call.1} parent=31 // pred_check_branch
          %719 = sbr.rel (%p717) target = $region80
        $region79: #{tpu_custom_call.1} parent=31 // pred_region
          %s720 = sand.u32 %s26, 1
          %s721 = scalar_lea.sflag [#allocation4], %s720
          %s722 = sand.u32 %s364, 1
          %s723 = scalar_lea.vmem [#allocation19], %s722
          %s725 = ssub.s32 16, 16
          %726 = vsyncadd %s721, %s725
          %s727 = smul.addr %s26, 16
          %s728 = scalar_lea.hbm %s13, %s727
          %s730 = sshll.u32 %s723, 4
          %s731 = int_to_ptr.vmem [resolvable:$true] %s730
          %733 = dma.hbm_to_vmem [thread:$0]  %s728, 16, %s731, %s721
        $region80: #{tpu_custom_call.1} parent=31 // pred_fallthru
          _
      $region32: #{tpu_custom_call.1} parent=5 // pred_fallthru
        _
      %p734 = scmp.le.s32.totalorder 1, %s26
      %p735 = scmp.lt.s32.totalorder %s26, 3
      %p736 = pnand %p734, %p735
      %p737 = pneg %p736
      // Predicated region
      $region81: #{tpu_custom_call.1} parent=5 // pred_check
        _
      $region82: #{tpu_custom_call.1} parent=5 // pred_check_branch
        %739 = sbr.rel (%p736) target = $region84
      $region83: #{tpu_custom_call.1} parent=5 // pred_region
        %s740 = ssub.s32 %s26, 1
        // Predicated region
        $region85: #{tpu_custom_call.1} parent=83 // pred_check
          %p741 = pneg %p47
        $region86: #{tpu_custom_call.1} parent=83 // pred_check_branch
          %743 = sbr.rel (%p741) target = $region88
        $region87: #{tpu_custom_call.1} parent=83 // pred_region
          %744 = dma.done [#allocation4], 512
        $region88: #{tpu_custom_call.1} parent=83 // pred_fallthru
          _
        // Predicated region
        $region89: #{tpu_custom_call.1} parent=83 // pred_check
          %p745 = pneg %p68
        $region90: #{tpu_custom_call.1} parent=83 // pred_check_branch
          %747 = sbr.rel (%p745) target = $region92
        $region91: #{tpu_custom_call.1} parent=83 // pred_region
          %748 = dma.done [#allocation7], 512
        $region92: #{tpu_custom_call.1} parent=83 // pred_fallthru
          _
        %s749 = sand.u32 %s31, 1
        %s750 = scalar_lea.sflag [#allocation4], %s749
        %s751 = sand.u32 %s81, 1
        %s752 = scalar_lea.vmem [#allocation8], %s751
        // Predicated region
        $region93: #{tpu_custom_call.1} parent=83 // pred_check
          %p753 = pneg %p94
        $region94: #{tpu_custom_call.1} parent=83 // pred_check_branch
          %755 = sbr.rel (%p753) target = $region96
        $region95: #{tpu_custom_call.1} parent=83 // pred_region
          %756 = dma.done %s750, 16
        $region96: #{tpu_custom_call.1} parent=83 // pred_fallthru
          _
        %s757 = sand.u32 %s31, 1
        %s758 = scalar_lea.sflag [#allocation4], %s757
        %s759 = sand.u32 %s107, 1
        %s760 = scalar_lea.vmem [#allocation9], %s759
        // Predicated region
        $region97: #{tpu_custom_call.1} parent=83 // pred_check
          %p761 = pneg %p120
        $region98: #{tpu_custom_call.1} parent=83 // pred_check_branch
          %763 = sbr.rel (%p761) target = $region100
        $region99: #{tpu_custom_call.1} parent=83 // pred_region
          %764 = dma.done %s758, 16
        $region100: #{tpu_custom_call.1} parent=83 // pred_fallthru
          _
        %s765 = sand.u32 %s31, 1
        %s766 = scalar_lea.sflag [#allocation4], %s765
        %s767 = sand.u32 %s133, 1
        %s768 = smul.addr %s767, 192
        %s769 = scalar_lea.vmem [#allocation10], %s768
        // Predicated region
        $region101: #{tpu_custom_call.1} parent=83 // pred_check
          %p770 = pneg %p146
        $region102: #{tpu_custom_call.1} parent=83 // pred_check_branch
          %772 = sbr.rel (%p770) target = $region104
        $region103: #{tpu_custom_call.1} parent=83 // pred_region
          %773 = dma.done %s766, 3072
        $region104: #{tpu_custom_call.1} parent=83 // pred_fallthru
          _
        %s774 = sand.u32 %s31, 1
        %s775 = scalar_lea.sflag [#allocation4], %s774
        %s776 = sand.u32 %s159, 1
        %s777 = smul.addr %s776, 3
        %s778 = scalar_lea.vmem [#allocation11], %s777
        // Predicated region
        $region105: #{tpu_custom_call.1} parent=83 // pred_check
          %p779 = pneg %p172
        $region106: #{tpu_custom_call.1} parent=83 // pred_check_branch
          %781 = sbr.rel (%p779) target = $region108
        $region107: #{tpu_custom_call.1} parent=83 // pred_region
          %782 = dma.done %s775, 48
        $region108: #{tpu_custom_call.1} parent=83 // pred_fallthru
          _
        %s783 = sand.u32 %s31, 1
        %s784 = scalar_lea.sflag [#allocation4], %s783
        %s785 = sand.u32 %s185, 1
        %s786 = smul.addr %s785, 64
        %s787 = scalar_lea.vmem [#allocation12], %s786
        // Predicated region
        $region109: #{tpu_custom_call.1} parent=83 // pred_check
          %p788 = pneg %p198
        $region110: #{tpu_custom_call.1} parent=83 // pred_check_branch
          %790 = sbr.rel (%p788) target = $region112
        $region111: #{tpu_custom_call.1} parent=83 // pred_region
          %791 = dma.done %s784, 1024
        $region112: #{tpu_custom_call.1} parent=83 // pred_fallthru
          _
        %s792 = sand.u32 %s31, 1
        %s793 = scalar_lea.sflag [#allocation4], %s792
        %s794 = sand.u32 %s211, 1
        %s795 = scalar_lea.vmem [#allocation13], %s794
        // Predicated region
        $region113: #{tpu_custom_call.1} parent=83 // pred_check
          %p796 = pneg %p224
        $region114: #{tpu_custom_call.1} parent=83 // pred_check_branch
          %798 = sbr.rel (%p796) target = $region116
        $region115: #{tpu_custom_call.1} parent=83 // pred_region
          %799 = dma.done %s793, 16
        $region116: #{tpu_custom_call.1} parent=83 // pred_fallthru
          _
        %s800 = sand.u32 %s31, 1
        %s801 = scalar_lea.sflag [#allocation4], %s800
        %s802 = sand.u32 %s237, 1
        %s803 = scalar_lea.vmem [#allocation14], %s802
        // Predicated region
        $region117: #{tpu_custom_call.1} parent=83 // pred_check
          %p804 = pneg %p250
        $region118: #{tpu_custom_call.1} parent=83 // pred_check_branch
          %806 = sbr.rel (%p804) target = $region120
        $region119: #{tpu_custom_call.1} parent=83 // pred_region
          %807 = dma.done %s801, 16
        $region120: #{tpu_custom_call.1} parent=83 // pred_fallthru
          _
        %s808 = sand.u32 %s31, 1
        %s809 = scalar_lea.sflag [#allocation4], %s808
        %s810 = sand.u32 %s263, 1
        %s811 = scalar_lea.vmem [#allocation15], %s810
        // Predicated region
        $region121: #{tpu_custom_call.1} parent=83 // pred_check
          %p812 = pneg %p276
        $region122: #{tpu_custom_call.1} parent=83 // pred_check_branch
          %814 = sbr.rel (%p812) target = $region124
        $region123: #{tpu_custom_call.1} parent=83 // pred_region
          %815 = dma.done %s809, 16
        $region124: #{tpu_custom_call.1} parent=83 // pred_fallthru
          _
        %s816 = sand.u32 %s31, 1
        %s817 = scalar_lea.sflag [#allocation4], %s816
        %s818 = sand.u32 %s289, 1
        %s819 = smul.addr %s818, 256
        %s820 = scalar_lea.vmem [#allocation16], %s819
        // Predicated region
        $region125: #{tpu_custom_call.1} parent=83 // pred_check
          %p821 = pneg %p302
        $region126: #{tpu_custom_call.1} parent=83 // pred_check_branch
          %823 = sbr.rel (%p821) target = $region128
        $region127: #{tpu_custom_call.1} parent=83 // pred_region
          %824 = dma.done %s817, 4096
        $region128: #{tpu_custom_call.1} parent=83 // pred_fallthru
          _
        %s825 = sand.u32 %s31, 1
        %s826 = scalar_lea.sflag [#allocation4], %s825
        %s827 = sand.u32 %s315, 1
        %s828 = smul.addr %s827, 4
        %s829 = scalar_lea.vmem [#allocation17], %s828
        // Predicated region
        $region129: #{tpu_custom_call.1} parent=83 // pred_check
          %p830 = pneg %p328
        $region130: #{tpu_custom_call.1} parent=83 // pred_check_branch
          %832 = sbr.rel (%p830) target = $region132
        $region131: #{tpu_custom_call.1} parent=83 // pred_region
          %833 = dma.done %s826, 64
        $region132: #{tpu_custom_call.1} parent=83 // pred_fallthru
          _
        %s834 = sand.u32 %s31, 1
        %s835 = scalar_lea.sflag [#allocation4], %s834
        %s836 = sand.u32 %s341, 1
        %s837 = smul.addr %s836, 256
        %s838 = scalar_lea.vmem [#allocation18], %s837
        // Predicated region
        $region133: #{tpu_custom_call.1} parent=83 // pred_check
          %p839 = pneg %p354
        $region134: #{tpu_custom_call.1} parent=83 // pred_check_branch
          %841 = sbr.rel (%p839) target = $region136
        $region135: #{tpu_custom_call.1} parent=83 // pred_region
          %842 = dma.done %s835, 4096
        $region136: #{tpu_custom_call.1} parent=83 // pred_fallthru
          _
        %s843 = sand.u32 %s31, 1
        %s844 = scalar_lea.sflag [#allocation4], %s843
        %s845 = sand.u32 %s367, 1
        %s846 = scalar_lea.vmem [#allocation19], %s845
        // Predicated region
        $region137: #{tpu_custom_call.1} parent=83 // pred_check
          %p847 = pneg %p380
        $region138: #{tpu_custom_call.1} parent=83 // pred_check_branch
          %849 = sbr.rel (%p847) target = $region140
        $region139: #{tpu_custom_call.1} parent=83 // pred_region
          %850 = dma.done %s844, 16
        $region140: #{tpu_custom_call.1} parent=83 // pred_fallthru
          _
        // Predicated region
        $region141: #{tpu_custom_call.1} parent=83 // pred_check
          %p851 = pneg %p401
        $region142: #{tpu_custom_call.1} parent=83 // pred_check_branch
          %853 = sbr.rel (%p851) target = $region144
        $region143: #{tpu_custom_call.1} parent=83 // pred_region
          %854 = dma.done [#allocation7], 16
        $region144: #{tpu_custom_call.1} parent=83 // pred_fallthru
          _
        // Predicated region
        $region145: #{tpu_custom_call.1} parent=83 // pred_check
          %p855 = pneg %p422
        $region146: #{tpu_custom_call.1} parent=83 // pred_check_branch
          %857 = sbr.rel (%p855) target = $region148
        $region147: #{tpu_custom_call.1} parent=83 // pred_region
          %858 = dma.done [#allocation22], 16
        $region148: #{tpu_custom_call.1} parent=83 // pred_fallthru
          _
        %p859 = pneg %p47
        %p860 = pneg %p44
        %p861 = pneg %p68
        %p862 = pneg %p65
        %s863 = sand.u32 %s31, 1
        %s864 = scalar_lea.sflag [#allocation4], %s863
        %s865 = sand.u32 %s81, 1
        %s866 = scalar_lea.vmem [#allocation8], %s865
        %p867 = pneg %p94
        %p868 = pneg %p91
        %s869 = sand.u32 %s31, 1
        %s870 = scalar_lea.sflag [#allocation4], %s869
        %s871 = sand.u32 %s107, 1
        %s872 = scalar_lea.vmem [#allocation9], %s871
        %p873 = pneg %p120
        %p874 = pneg %p117
        %s875 = sand.u32 %s31, 1
        %s876 = scalar_lea.sflag [#allocation4], %s875
        %s877 = sand.u32 %s133, 1
        %s878 = smul.addr %s877, 192
        %s879 = scalar_lea.vmem [#allocation10], %s878
        %p880 = pneg %p146
        %p881 = pneg %p143
        %s882 = sand.u32 %s31, 1
        %s883 = scalar_lea.sflag [#allocation4], %s882
        %s884 = sand.u32 %s159, 1
        %s885 = smul.addr %s884, 3
        %s886 = scalar_lea.vmem [#allocation11], %s885
        %p887 = pneg %p172
        %p888 = pneg %p169
        %s889 = sand.u32 %s31, 1
        %s890 = scalar_lea.sflag [#allocation4], %s889
        %s891 = sand.u32 %s185, 1
        %s892 = smul.addr %s891, 64
        %s893 = scalar_lea.vmem [#allocation12], %s892
        %p894 = pneg %p198
        %p895 = pneg %p195
        %s896 = sand.u32 %s31, 1
        %s897 = scalar_lea.sflag [#allocation4], %s896
        %s898 = sand.u32 %s211, 1
        %s899 = scalar_lea.vmem [#allocation13], %s898
        %p900 = pneg %p224
        %p901 = pneg %p221
        %s902 = sand.u32 %s31, 1
        %s903 = scalar_lea.sflag [#allocation4], %s902
        %s904 = sand.u32 %s237, 1
        %s905 = scalar_lea.vmem [#allocation14], %s904
        %p906 = pneg %p250
        %p907 = pneg %p247
        %s908 = sand.u32 %s31, 1
        %s909 = scalar_lea.sflag [#allocation4], %s908
        %s910 = sand.u32 %s263, 1
        %s911 = scalar_lea.vmem [#allocation15], %s910
        %p912 = pneg %p276
        %p913 = pneg %p273
        %s914 = sand.u32 %s31, 1
        %s915 = scalar_lea.sflag [#allocation4], %s914
        %s916 = sand.u32 %s289, 1
        %s917 = smul.addr %s916, 256
        %s918 = scalar_lea.vmem [#allocation16], %s917
        %p919 = pneg %p302
        %p920 = pneg %p299
        %s921 = sand.u32 %s31, 1
        %s922 = scalar_lea.sflag [#allocation4], %s921
        %s923 = sand.u32 %s315, 1
        %s924 = smul.addr %s923, 4
        %s925 = scalar_lea.vmem [#allocation17], %s924
        %p926 = pneg %p328
        %p927 = pneg %p325
        %s928 = sand.u32 %s31, 1
        %s929 = scalar_lea.sflag [#allocation4], %s928
        %s930 = sand.u32 %s341, 1
        %s931 = smul.addr %s930, 256
        %s932 = scalar_lea.vmem [#allocation18], %s931
        %p933 = pneg %p354
        %p934 = pneg %p351
        %s935 = sand.u32 %s31, 1
        %s936 = scalar_lea.sflag [#allocation4], %s935
        %s937 = sand.u32 %s367, 1
        %s938 = scalar_lea.vmem [#allocation19], %s937
        %p939 = pneg %p380
        %p940 = pneg %p377
        %p941 = pneg %p401
        %p942 = pneg %p398
        %p943 = pneg %p422
        %p944 = pneg %p419
        %p945 = pneg %p443
        %p946 = pneg %p440
        %p948 = scmp.eq.s32.totalorder %s31, 0
        // Predicated region
        $region149: #{tpu_custom_call.1} parent=83 // pred_check
          %p949 = pneg %p948
        $region150: #{tpu_custom_call.1} parent=83 // pred_check_branch
          %951 = sbr.rel (%p949) target = $region152
        $region151: #{tpu_custom_call.1} parent=83 // pred_region
          %v952 = vld [vmem:[#allocation3] sm:$0xff]
          %v953 = vld [vmem:[#allocation3 + $0x8] sm:$0xff]
          %v954 = vld [vmem:[#allocation3 + $0x10] sm:$0xff]
          %v955 = vld [vmem:[#allocation3 + $0x18] sm:$0xff]
          %956 = vst [vmem:[#allocation2] sm:$0xff] %v952
          %957 = vst [vmem:[#allocation2 + $0x8] sm:$0xff] %v953
          %958 = vst [vmem:[#allocation2 + $0x10] sm:$0xff] %v954
          %959 = vst [vmem:[#allocation2 + $0x18] sm:$0xff] %v955
        $region152: #{tpu_custom_call.1} parent=83 // pred_fallthru
          _
        %v960 = vld [vmem:[#allocation2] sm:$0xff]
        %v961 = vld [vmem:[#allocation2 + $0x8] sm:$0xff]
        %v962 = vld [vmem:[#allocation2 + $0x10] sm:$0xff]
        %v963 = vld [vmem:[#allocation2 + $0x18] sm:$0xff]
        %v964 = vld [vmem:[%s752] sm:$0x1]
        %v965 = vld [vmem:[%s760] sm:$0x1]
        %966 = vadd.xlane.f32.xlu0 %v960
        %v967 = vpop.xlane.xlu0 %966
        %968 = vadd.xlane.f32.xlu0 %v961
        %v969 = vpop.xlane.xlu0 %968
        %970 = vadd.xlane.f32.xlu0 %v962
        %v971 = vpop.xlane.xlu0 %970
        %972 = vadd.xlane.f32.xlu0 %v963
        %v973 = vpop.xlane.xlu0 %972
        %v974 = vrcp.pop 128.0
        %v975 = vmul.f32 %v967, %v974
        %v976 = vmul.f32 %v969, %v974
        %v977 = vmul.f32 %v971, %v974
        %v978 = vmul.f32 %v973, %v974
        %v979 = vsub.f32 %v960, %v975
        %v980 = vsub.f32 %v961, %v976
        %v981 = vsub.f32 %v962, %v977
        %v982 = vsub.f32 %v963, %v978
        %v983 = vmul.f32 %v979, %v979
        %v984 = vmul.f32 %v980, %v980
        %v985 = vmul.f32 %v981, %v981
        %v986 = vmul.f32 %v982, %v982
        %987 = vadd.xlane.f32.xlu0 %v983
        %v988 = vpop.xlane.xlu0 %987
        %989 = vadd.xlane.f32.xlu0 %v984
        %v990 = vpop.xlane.xlu0 %989
        %991 = vadd.xlane.f32.xlu0 %v985
        %v992 = vpop.xlane.xlu0 %991
        %993 = vadd.xlane.f32.xlu0 %v986
        %v994 = vpop.xlane.xlu0 %993
        %v995 = vmul.f32 %v988, %v974
        %v996 = vmul.f32 %v990, %v974
        %v997 = vmul.f32 %v992, %v974
        %v998 = vmul.f32 %v994, %v974
        %v999 = vadd.f32 %v995, 1e-05
        %v1000 = vadd.f32 %v996, 1e-05
        %v1001 = vadd.f32 %v997, 1e-05
        %v1002 = vadd.f32 %v998, 1e-05
        %v1003 = vrsqrt.pop %v999
        %v1004 = vrsqrt.pop %v1000
        %v1005 = vrsqrt.pop %v1001
        %v1006 = vrsqrt.pop %v1002
        %v1007 = vmul.f32 %v979, %v1003
        %v1008 = vmul.f32 %v980, %v1004
        %v1009 = vmul.f32 %v981, %v1005
        %v1010 = vmul.f32 %v982, %v1006
        %v1012 = vlaneseq
        %v1013 = vshrl.u32 %v1012, 7
        %v1014 = vsub.s32 0, %v1013
        %v1015 = vrot.slane %v964, %v1014
        %v1017 = vmul.f32 %v1007, %v1015
        %v1018 = vmul.f32 %v1008, %v1015
        %v1019 = vmul.f32 %v1009, %v1015
        %v1020 = vmul.f32 %v1010, %v1015
        %v1022 = vlaneseq
        %v1023 = vshrl.u32 %v1022, 7
        %v1024 = vsub.s32 0, %v1023
        %v1025 = vrot.slane %v965, %v1024
        %v1027 = vadd.f32 %v1017, %v1025
        %v1028 = vadd.f32 %v1018, %v1025
        %v1029 = vadd.f32 %v1019, %v1025
        %v1030 = vadd.f32 %v1020, %v1025
        %v1031 = vpack.c.bf16 %v1028, %v1027
        %v1032 = vpack.c.bf16 %v1030, %v1029
        %v1033 = vld [vmem:[%s769] sm:$0xff]
        %v1034 = vld [vmem:[%s769 + $0x8] sm:$0xf]
        %v1035 = vld [vmem:[%s769 + $0xc] sm:$0xff]
        %v1036 = vld [vmem:[%s769 + $0x14] sm:$0xf]
        %v1037 = vld [vmem:[%s769 + $0x18] sm:$0xff]
        %v1038 = vld [vmem:[%s769 + $0x20] sm:$0xf]
        %v1039 = vld [vmem:[%s769 + $0x24] sm:$0xff]
        %v1040 = vld [vmem:[%s769 + $0x2c] sm:$0xf]
        %v1041 = vld [vmem:[%s769 + $0x30] sm:$0xff]
        %v1042 = vld [vmem:[%s769 + $0x38] sm:$0xf]
        %v1043 = vld [vmem:[%s769 + $0x3c] sm:$0xff]
        %v1044 = vld [vmem:[%s769 + $0x44] sm:$0xf]
        %v1045 = vld [vmem:[%s769 + $0x48] sm:$0xff]
        %v1046 = vld [vmem:[%s769 + $0x50] sm:$0xf]
        %v1047 = vld [vmem:[%s769 + $0x54] sm:$0xff]
        %v1048 = vld [vmem:[%s769 + $0x5c] sm:$0xf]
        %v1049 = vld [vmem:[%s769 + $0x60] sm:$0xff]
        %v1050 = vld [vmem:[%s769 + $0x68] sm:$0xf]
        %v1051 = vld [vmem:[%s769 + $0x6c] sm:$0xff]
        %v1052 = vld [vmem:[%s769 + $0x74] sm:$0xf]
        %v1053 = vld [vmem:[%s769 + $0x78] sm:$0xff]
        %v1054 = vld [vmem:[%s769 + $0x80] sm:$0xf]
        %v1055 = vld [vmem:[%s769 + $0x84] sm:$0xff]
        %v1056 = vld [vmem:[%s769 + $0x8c] sm:$0xf]
        %v1057 = vld [vmem:[%s769 + $0x90] sm:$0xff]
        %v1058 = vld [vmem:[%s769 + $0x98] sm:$0xf]
        %v1059 = vld [vmem:[%s769 + $0x9c] sm:$0xff]
        %v1060 = vld [vmem:[%s769 + $0xa4] sm:$0xf]
        %v1061 = vld [vmem:[%s769 + $0xa8] sm:$0xff]
        %v1062 = vld [vmem:[%s769 + $0xb0] sm:$0xf]
        %v1063 = vld [vmem:[%s769 + $0xb4] sm:$0xff]
        %v1064 = vld [vmem:[%s769 + $0xbc] sm:$0xf]
        %v1065 = vld [vmem:[%s778] sm:$0x7]
        %v1067 = vlaneseq
        %v1068 = vshrl.u32 %v1067, 7
        %v1069 = vsub.s32 0, %v1068
        %v1070 = vrot.slane %v1065, %v1069
        %v1071 = vlaneseq
        %v1072 = vshrl.u32 %v1071, 7
        %v1073 = vsub.s32 1, %v1072
        %v1074 = vrot.slane %v1065, %v1073
        %v1075 = vlaneseq
        %v1076 = vshrl.u32 %v1075, 7
        %v1077 = vsub.s32 2, %v1076
        %v1078 = vrot.slane %v1065, %v1077
        %v1114 = vunpack.c.l.b16 %v1033
        %v1115 = vunpack.c.h.b16 %v1033
        %v1116 = vunpack.c.l.b16 %v1034
        %v1117 = vunpack.c.l.b16 %v1035
        %v1118 = vunpack.c.h.b16 %v1035
        %v1119 = vunpack.c.l.b16 %v1036
        %v1120 = vunpack.c.l.b16 %v1037
        %v1121 = vunpack.c.h.b16 %v1037
        %v1122 = vunpack.c.l.b16 %v1038
        %v1123 = vunpack.c.l.b16 %v1039
        %v1124 = vunpack.c.h.b16 %v1039
        %v1125 = vunpack.c.l.b16 %v1040
        %v1126 = vunpack.c.l.b16 %v1041
        %v1127 = vunpack.c.h.b16 %v1041
        %v1128 = vunpack.c.l.b16 %v1042
        %v1129 = vunpack.c.l.b16 %v1043
        %v1130 = vunpack.c.h.b16 %v1043
        %v1131 = vunpack.c.l.b16 %v1044
        %v1132 = vunpack.c.l.b16 %v1045
        %v1133 = vunpack.c.h.b16 %v1045
        %v1134 = vunpack.c.l.b16 %v1046
        %v1135 = vunpack.c.l.b16 %v1047
        %v1136 = vunpack.c.h.b16 %v1047
        %v1137 = vunpack.c.l.b16 %v1048
        %v1138 = vunpack.c.l.b16 %v1049
        %v1139 = vunpack.c.h.b16 %v1049
        %v1140 = vunpack.c.l.b16 %v1050
        %v1141 = vunpack.c.l.b16 %v1051
        %v1142 = vunpack.c.h.b16 %v1051
        %v1143 = vunpack.c.l.b16 %v1052
        %v1144 = vunpack.c.l.b16 %v1053
        %v1145 = vunpack.c.h.b16 %v1053
        %v1146 = vunpack.c.l.b16 %v1054
        %v1147 = vunpack.c.l.b16 %v1055
        %v1148 = vunpack.c.h.b16 %v1055
        %v1149 = vunpack.c.l.b16 %v1056
        %v1150 = vunpack.c.l.b16 %v1057
        %v1151 = vunpack.c.h.b16 %v1057
        %v1152 = vunpack.c.l.b16 %v1058
        %v1153 = vunpack.c.l.b16 %v1059
        %v1154 = vunpack.c.h.b16 %v1059
        %v1155 = vunpack.c.l.b16 %v1060
        %v1156 = vunpack.c.l.b16 %v1061
        %v1157 = vunpack.c.h.b16 %v1061
        %v1158 = vunpack.c.l.b16 %v1062
        %v1159 = vunpack.c.l.b16 %v1063
        %v1160 = vunpack.c.h.b16 %v1063
        %v1161 = vunpack.c.l.b16 %v1064
        %v1162 = vpack.c.b16 %v1117, %v1114
        %v1163 = vpack.c.b16 %v1118, %v1115
        %v1164 = vpack.c.b16 %v1119, %v1116
        %v1165 = vpack.c.b16 %v1123, %v1120
        %v1166 = vpack.c.b16 %v1124, %v1121
        %v1167 = vpack.c.b16 %v1125, %v1122
        %v1168 = vpack.c.b16 %v1129, %v1126
        %v1169 = vpack.c.b16 %v1130, %v1127
        %v1170 = vpack.c.b16 %v1131, %v1128
        %v1171 = vpack.c.b16 %v1135, %v1132
        %v1172 = vpack.c.b16 %v1136, %v1133
        %v1173 = vpack.c.b16 %v1137, %v1134
        %v1174 = vpack.c.b16 %v1141, %v1138
        %v1175 = vpack.c.b16 %v1142, %v1139
        %v1176 = vpack.c.b16 %v1143, %v1140
        %v1177 = vpack.c.b16 %v1147, %v1144
        %v1178 = vpack.c.b16 %v1148, %v1145
        %v1179 = vpack.c.b16 %v1149, %v1146
        %v1180 = vpack.c.b16 %v1153, %v1150
        %v1181 = vpack.c.b16 %v1154, %v1151
        %v1182 = vpack.c.b16 %v1155, %v1152
        %v1183 = vpack.c.b16 %v1159, %v1156
        %v1184 = vpack.c.b16 %v1160, %v1157
        %v1185 = vpack.c.b16 %v1161, %v1158
        %1210 = vmatprep.subr.bf16.mxu0 %v1163
        %1211 = vmatpush1.bf16.msra.mxu0 %v1162
        %1212 = vmatprep.subr.bf16.mxu0 %v1166
        %1213 = vmatpush1.bf16.msra.mxu0 %v1165
        %1214 = vmatprep.subr.bf16.mxu0 %v1169
        %1215 = vmatpush1.bf16.msra.mxu0 %v1168
        %1216 = vmatprep.subr.bf16.mxu0 %v1172
        %1217 = vmatpush1.bf16.msra.mxu0 %v1171
        %1218 = vmatprep.subr.bf16.mxu0 %v1175
        %1219 = vmatpush1.bf16.msra.mxu0 %v1174
        %1220 = vmatprep.subr.bf16.mxu0 %v1178
        %1221 = vmatpush1.bf16.msra.mxu0 %v1177
        %1222 = vmatprep.subr.bf16.mxu0 %v1181
        %1223 = vmatpush1.bf16.msra.mxu0 %v1180
        %1224 = vmatprep.subr.bf16.mxu0 %v1184
        %1225 = vmatpush1.bf16.msra.mxu0 %v1183
        %1226 = vmatprep.subr.bf16.mxu0 0
        %1227 = vmatpush1.bf16.msra.mxu0 0
        %1228 = vmatprep.subr.bf16.mxu0 0
        %1229 = vmatpush1.bf16.msra.mxu0 0
        %1230 = vmatprep.subr.bf16.mxu0 0
        %1231 = vmatpush1.bf16.msra.mxu0 0
        %1232 = vmatprep.subr.bf16.mxu0 0
        %1233 = vmatpush1.bf16.msra.mxu0 0
        %1234 = vmatprep.subr.bf16.mxu0 0
        %1235 = vmatpush1.bf16.msra.mxu0 0
        %1236 = vmatprep.subr.bf16.mxu0 0
        %1237 = vmatpush1.bf16.msra.mxu0 0
        %1238 = vmatprep.subr.bf16.mxu0 0
        %1239 = vmatpush1.bf16.msra.mxu0 0
        %1240 = vmatprep.subr.bf16.mxu0 0
        %1241 = vmatpush1.bf16.msra.mxu0 0
        %1242 = vmatprep.mubr.bf16.mxu0 0
        %1243 = vmatmul.mubr.bf16.gmra.mrb[0].mxu0 %v1031
        %v1244 = vpop.f32.mrb[0].mxu0
        %v1245 = vadd.f32 %v1070, %v1244
        %v1246 = vpop.f32.mrb[0].mxu0
        %v1247 = vadd.f32 %v1074, %v1246
        %v1248 = vpop.f32.mrb[0].mxu0
        %v1249 = vadd.f32 %v1070, %v1248
        %v1250 = vpop.f32.mrb[0].mxu0
        %v1251 = vadd.f32 %v1074, %v1250
        %1252 = vmatprep.mubr.bf16.mxu0 0
        %1253 = vmatmul.mubr.bf16.gmra.mrb[0].mxu0 %v1032
        %v1254 = vpop.f32.mrb[0].mxu0
        %v1255 = vadd.f32 %v1070, %v1254
        %v1256 = vpop.f32.mrb[0].mxu0
        %v1257 = vadd.f32 %v1074, %v1256
        %v1258 = vpop.f32.mrb[0].mxu0
        %v1259 = vadd.f32 %v1070, %v1258
        %v1260 = vpop.f32.mrb[0].mxu0
        %v1261 = vadd.f32 %v1074, %v1260
        %1262 = vdwg.mxu0
        %1263 = vmatprep.subr.bf16.mxu0 0
        %1264 = vmatpush1.bf16.msra.mxu0 %v1164
        %1265 = vmatprep.subr.bf16.mxu0 0
        %1266 = vmatpush1.bf16.msra.mxu0 %v1167
        %1267 = vmatprep.subr.bf16.mxu0 0
        %1268 = vmatpush1.bf16.msra.mxu0 %v1170
        %1269 = vmatprep.subr.bf16.mxu0 0
        %1270 = vmatpush1.bf16.msra.mxu0 %v1173
        %1271 = vmatprep.subr.bf16.mxu0 0
        %1272 = vmatpush1.bf16.msra.mxu0 %v1176
        %1273 = vmatprep.subr.bf16.mxu0 0
        %1274 = vmatpush1.bf16.msra.mxu0 %v1179
        %1275 = vmatprep.subr.bf16.mxu0 0
        %1276 = vmatpush1.bf16.msra.mxu0 %v1182
        %1277 = vmatprep.subr.bf16.mxu0 0
        %1278 = vmatpush1.bf16.msra.mxu0 %v1185
        %1279 = vmatprep.subr.bf16.mxu0 0
        %1280 = vmatpush1.bf16.msra.mxu0 0
        %1281 = vmatprep.subr.bf16.mxu0 0
        %1282 = vmatpush1.bf16.msra.mxu0 0
        %1283 = vmatprep.subr.bf16.mxu0 0
        %1284 = vmatpush1.bf16.msra.mxu0 0
        %1285 = vmatprep.subr.bf16.mxu0 0
        %1286 = vmatpush1.bf16.msra.mxu0 0
        %1287 = vmatprep.subr.bf16.mxu0 0
        %1288 = vmatpush1.bf16.msra.mxu0 0
        %1289 = vmatprep.subr.bf16.mxu0 0
        %1290 = vmatpush1.bf16.msra.mxu0 0
        %1291 = vmatprep.subr.bf16.mxu0 0
        %1292 = vmatpush1.bf16.msra.mxu0 0
        %1293 = vmatprep.subr.bf16.mxu0 0
        %1294 = vmatpush1.bf16.msra.mxu0 0
        %1295 = vmatprep.mubr.bf16.mxu0 0
        %1296 = vmatmul.mubr.bf16.gmra.mrb[0].mxu0 %v1031
        %v1297 = vpop.f32.mrb[0].mxu0
        %v1298 = vadd.f32 %v1078, %v1297
        %v1299 = vpop.f32.mrb[0].mxu0
        %v1300 = vpop.f32.mrb[0].mxu0
        %v1301 = vadd.f32 %v1078, %v1300
        %v1302 = vpop.f32.mrb[0].mxu0
        %1303 = vmatprep.mubr.bf16.mxu0 0
        %1304 = vmatmul.mubr.bf16.gmra.mrb[0].mxu0 %v1032
        %v1305 = vpop.f32.mrb[0].mxu0
        %v1306 = vadd.f32 %v1078, %v1305
        %v1307 = vpop.f32.mrb[0].mxu0
        %v1308 = vpop.f32.mrb[0].mxu0
        %v1309 = vadd.f32 %v1078, %v1308
        %v1310 = vpop.f32.mrb[0].mxu0
        %1311 = vdwg.mxu0
        %v1312 = vmul.f32 %v1245, 0.17677669
        %v1313 = vmul.f32 %v1249, 0.17677669
        %v1314 = vmul.f32 %v1255, 0.17677669
        %v1315 = vmul.f32 %v1259, 0.17677669
        %v1316 = vld [vmem:[#allocation6] sm:$0xff]
        %v1317 = vld [vmem:[#allocation6 + $0x8] sm:$0xff]
        %v1318 = vld [vmem:[#allocation6 + $0x10] sm:$0xff]
        %v1319 = vld [vmem:[#allocation6 + $0x18] sm:$0xff]
        %vm1320 = vcmp.gt.f32.partialorder %v1316, 0.0
        %vm1321 = vcmp.gt.f32.partialorder %v1317, 0.0
        %vm1322 = vcmp.gt.f32.partialorder %v1318, 0.0
        %vm1323 = vcmp.gt.f32.partialorder %v1319, 0.0
        %v1324 = vld [vmem:[%s787] sm:$0xf]
        %v1325 = vld [vmem:[%s787 + $0x4] sm:$0xf]
        %v1326 = vld [vmem:[%s787 + $0x8] sm:$0xf]
        %v1327 = vld [vmem:[%s787 + $0xc] sm:$0xf]
        %v1328 = vld [vmem:[%s787 + $0x10] sm:$0xf]
        %v1329 = vld [vmem:[%s787 + $0x14] sm:$0xf]
        %v1330 = vld [vmem:[%s787 + $0x18] sm:$0xf]
        %v1331 = vld [vmem:[%s787 + $0x1c] sm:$0xf]
        %v1332 = vld [vmem:[%s787 + $0x20] sm:$0xf]
        %v1333 = vld [vmem:[%s787 + $0x24] sm:$0xf]
        %v1334 = vld [vmem:[%s787 + $0x28] sm:$0xf]
        %v1335 = vld [vmem:[%s787 + $0x2c] sm:$0xf]
        %v1336 = vld [vmem:[%s787 + $0x30] sm:$0xf]
        %v1337 = vld [vmem:[%s787 + $0x34] sm:$0xf]
        %v1338 = vld [vmem:[%s787 + $0x38] sm:$0xf]
        %v1339 = vld [vmem:[%s787 + $0x3c] sm:$0xf]
        %v1340 = vpack.c.bf16 %v1313, %v1312
        %v1341 = vpack.c.bf16 %v1315, %v1314
        %1342 = vxpose.xlu0.b32.start [1/16] %v1247, 128
        %1343 = vxpose.xlu0.b32.cont [2/16] %v1251, 128
        %1344 = vxpose.xlu0.b32.cont [3/16] %v1257, 128
        %1345 = vxpose.xlu0.b32.cont [4/16] %v1261, 128
        %1346 = vxpose.xlu0.b32.cont [5/16] 0.0, 128
        %1347 = vxpose.xlu0.b32.cont [6/16] 0.0, 128
        %1348 = vxpose.xlu0.b32.cont [7/16] 0.0, 128
        %1349 = vxpose.xlu0.b32.cont [8/16] 0.0, 128
        %1350 = vxpose.xlu0.b32.cont [9/16] 0.0, 128
        %1351 = vxpose.xlu0.b32.cont [10/16] 0.0, 128
        %1352 = vxpose.xlu0.b32.cont [11/16] 0.0, 128
        %1353 = vxpose.xlu0.b32.cont [12/16] 0.0, 128
        %1354 = vxpose.xlu0.b32.cont [13/16] 0.0, 128
        %1355 = vxpose.xlu0.b32.cont [14/16] 0.0, 128
        %1356 = vxpose.xlu0.b32.cont [15/16] 0.0, 128
        %1357 = vxpose.xlu0.b32.end [16/16] 0.0, 128
        %v1358 = vpop.trf.xlu0
        %v1359 = vpop.trf.xlu0
        %v1360 = vpop.trf.xlu0
        %v1361 = vpop.trf.xlu0
        %v1362 = vpop.trf.xlu0
        %v1363 = vpop.trf.xlu0
        %v1364 = vpop.trf.xlu0
        %v1365 = vpop.trf.xlu0
        %v1366 = vpop.trf.xlu0
        %v1367 = vpop.trf.xlu0
        %v1368 = vpop.trf.xlu0
        %v1369 = vpop.trf.xlu0
        %v1370 = vpop.trf.xlu0
        %v1371 = vpop.trf.xlu0
        %v1372 = vpop.trf.xlu0
        %v1373 = vpop.trf.xlu0
        %v1374 = vpack.c.bf16 %v1359, %v1358
        %v1375 = vpack.c.bf16 %v1361, %v1360
        %v1376 = vpack.c.bf16 %v1301, %v1298
        %v1377 = vpack.c.bf16 %v1309, %v1306
        %vm1378 = vcmask 261120
        %v1380 = vsel %vm1378, %v1340, 0
        %v1383 = vsel %vm1378, %v1341, 0
        %1385 = vmatprep.subr.bf16.mxu0 0
        %1386 = vmatpush1.bf16.msra.mxu0 %v1374
        %1387 = vmatprep.subr.bf16.mxu0 0
        %1388 = vmatpush1.bf16.msra.mxu0 %v1375
        %1389 = vmatprep.subr.bf16.mxu0 0
        %1390 = vmatpush1.bf16.msra.mxu0 0
        %1391 = vmatprep.subr.bf16.mxu0 0
        %1392 = vmatpush1.bf16.msra.mxu0 0
        %1393 = vmatprep.subr.bf16.mxu0 0
        %1394 = vmatpush1.bf16.msra.mxu0 0
        %1395 = vmatprep.subr.bf16.mxu0 0
        %1396 = vmatpush1.bf16.msra.mxu0 0
        %1397 = vmatprep.subr.bf16.mxu0 0
        %1398 = vmatpush1.bf16.msra.mxu0 0
        %1399 = vmatprep.subr.bf16.mxu0 0
        %1400 = vmatpush1.bf16.msra.mxu0 0
        %1401 = vmatprep.subr.bf16.mxu0 0
        %1402 = vmatpush1.bf16.msra.mxu0 0
        %1403 = vmatprep.subr.bf16.mxu0 0
        %1404 = vmatpush1.bf16.msra.mxu0 0
        %1405 = vmatprep.subr.bf16.mxu0 0
        %1406 = vmatpush1.bf16.msra.mxu0 0
        %1407 = vmatprep.subr.bf16.mxu0 0
        %1408 = vmatpush1.bf16.msra.mxu0 0
        %1409 = vmatprep.subr.bf16.mxu0 0
        %1410 = vmatpush1.bf16.msra.mxu0 0
        %1411 = vmatprep.subr.bf16.mxu0 0
        %1412 = vmatpush1.bf16.msra.mxu0 0
        %1413 = vmatprep.subr.bf16.mxu0 0
        %1414 = vmatpush1.bf16.msra.mxu0 0
        %1415 = vmatprep.subr.bf16.mxu0 0
        %1416 = vmatpush1.bf16.msra.mxu0 0
        %1417 = vmatprep.mubr.bf16.mxu0 0
        %1418 = vmatmul.mubr.bf16.gmra.mrb[0].mxu0 %v1380
        %v1419 = vpop.f32.mrb[0].mxu0
        %v1420 = vadd.f32 0.0, %v1419
        %v1421 = vpop.f32.mrb[0].mxu0
        %v1422 = vpop.f32.mrb[0].mxu0
        %v1423 = vadd.f32 0.0, %v1422
        %v1424 = vpop.f32.mrb[0].mxu0
        %1425 = vmatprep.mubr.bf16.mxu0 0
        %1426 = vmatmul.mubr.bf16.gmra.mrb[0].mxu0 %v1383
        %v1427 = vpop.f32.mrb[0].mxu0
        %v1428 = vadd.f32 0.0, %v1427
        %v1429 = vpop.f32.mrb[0].mxu0
        %v1430 = vpop.f32.mrb[0].mxu0
        %v1431 = vadd.f32 0.0, %v1430
        %v1432 = vpop.f32.mrb[0].mxu0
        %1433 = vdwg.mxu0
        %v1434 = vsel %vm1320, %v1420, -1e+09
        %v1435 = vsel %vm1321, %v1423, -1e+09
        %v1436 = vsel %vm1322, %v1428, -1e+09
        %v1437 = vsel %vm1323, %v1431, -1e+09
        %v1438 = vsel %vm1378, %v1434, -inf
        %1439 = vmax.xlane.f32.xlu0 %v1438
        %v1440 = vpop.xlane.xlu0 %1439
        %v1441 = vsel %vm1378, %v1435, -inf
        %1442 = vmax.xlane.f32.xlu0 %v1441
        %v1443 = vpop.xlane.xlu0 %1442
        %v1444 = vsel %vm1378, %v1436, -inf
        %1445 = vmax.xlane.f32.xlu0 %v1444
        %v1446 = vpop.xlane.xlu0 %1445
        %v1447 = vsel %vm1378, %v1437, -inf
        %1448 = vmax.xlane.f32.xlu0 %v1447
        %v1449 = vpop.xlane.xlu0 %1448
        %v1450 = vsub.f32 %v1434, %v1440
        %v1451 = vsub.f32 %v1435, %v1443
        %v1452 = vsub.f32 %v1436, %v1446
        %v1453 = vsub.f32 %v1437, %v1449
        %v1454 = vmul.f32 %v1450, 1.442695
        %v1455 = vpow.pop %v1454
        %v1456 = vmul.f32 %v1451, 1.442695
        %v1457 = vpow.pop %v1456
        %v1458 = vmul.f32 %v1452, 1.442695
        %v1459 = vpow.pop %v1458
        %v1460 = vmul.f32 %v1453, 1.442695
        %v1461 = vpow.pop %v1460
        %v1462 = vsel %vm1378, %v1455, 0.0
        %1463 = vadd.xlane.f32.xlu0 %v1462
        %v1464 = vpop.xlane.xlu0 %1463
        %v1465 = vsel %vm1378, %v1457, 0.0
        %1466 = vadd.xlane.f32.xlu0 %v1465
        %v1467 = vpop.xlane.xlu0 %1466
        %v1468 = vsel %vm1378, %v1459, 0.0
        %1469 = vadd.xlane.f32.xlu0 %v1468
        %v1470 = vpop.xlane.xlu0 %1469
        %v1471 = vsel %vm1378, %v1461, 0.0
        %1472 = vadd.xlane.f32.xlu0 %v1471
        %v1473 = vpop.xlane.xlu0 %1472
        %v1474 = vrcp.pop %v1464
        %v1475 = vrcp.pop %v1467
        %v1476 = vrcp.pop %v1470
        %v1477 = vrcp.pop %v1473
        %v1478 = vmul.f32 %v1455, %v1474
        %v1479 = vmul.f32 %v1457, %v1475
        %v1480 = vmul.f32 %v1459, %v1476
        %v1481 = vmul.f32 %v1461, %v1477
        %v1482 = vpack.c.bf16 %v1479, %v1478
        %v1483 = vpack.c.bf16 %v1481, %v1480
        %v1485 = vsel %vm1378, %v1482, 0
        %v1488 = vsel %vm1378, %v1483, 0
        %1490 = vmatprep.subr.bf16.mxu0 0
        %1491 = vmatpush1.bf16.msra.mxu0 %v1376
        %1492 = vmatprep.subr.bf16.mxu0 0
        %1493 = vmatpush1.bf16.msra.mxu0 %v1377
        %1494 = vmatprep.subr.bf16.mxu0 0
        %1495 = vmatpush1.bf16.msra.mxu0 0
        %1496 = vmatprep.subr.bf16.mxu0 0
        %1497 = vmatpush1.bf16.msra.mxu0 0
        %1498 = vmatprep.subr.bf16.mxu0 0
        %1499 = vmatpush1.bf16.msra.mxu0 0
        %1500 = vmatprep.subr.bf16.mxu0 0
        %1501 = vmatpush1.bf16.msra.mxu0 0
        %1502 = vmatprep.subr.bf16.mxu0 0
        %1503 = vmatpush1.bf16.msra.mxu0 0
        %1504 = vmatprep.subr.bf16.mxu0 0
        %1505 = vmatpush1.bf16.msra.mxu0 0
        %1506 = vmatprep.subr.bf16.mxu0 0
        %1507 = vmatpush1.bf16.msra.mxu0 0
        %1508 = vmatprep.subr.bf16.mxu0 0
        %1509 = vmatpush1.bf16.msra.mxu0 0
        %1510 = vmatprep.subr.bf16.mxu0 0
        %1511 = vmatpush1.bf16.msra.mxu0 0
        %1512 = vmatprep.subr.bf16.mxu0 0
        %1513 = vmatpush1.bf16.msra.mxu0 0
        %1514 = vmatprep.subr.bf16.mxu0 0
        %1515 = vmatpush1.bf16.msra.mxu0 0
        %1516 = vmatprep.subr.bf16.mxu0 0
        %1517 = vmatpush1.bf16.msra.mxu0 0
        %1518 = vmatprep.subr.bf16.mxu0 0
        %1519 = vmatpush1.bf16.msra.mxu0 0
        %1520 = vmatprep.subr.bf16.mxu0 0
        %1521 = vmatpush1.bf16.msra.mxu0 0
        %1522 = vmatprep.mubr.bf16.mxu0 0
        %1523 = vmatmul.mubr.bf16.gmra.mrb[0].mxu0 %v1485
        %v1524 = vpop.f32.mrb[0].mxu0
        %v1525 = vadd.f32 0.0, %v1524
        %v1526 = vpop.f32.mrb[0].mxu0
        %v1527 = vpop.f32.mrb[0].mxu0
        %v1528 = vadd.f32 0.0, %v1527
        %v1529 = vpop.f32.mrb[0].mxu0
        %1530 = vmatprep.mubr.bf16.mxu0 0
        %1531 = vmatmul.mubr.bf16.gmra.mrb[0].mxu0 %v1488
        %v1532 = vpop.f32.mrb[0].mxu0
        %v1533 = vadd.f32 0.0, %v1532
        %v1534 = vpop.f32.mrb[0].mxu0
        %v1535 = vpop.f32.mrb[0].mxu0
        %v1536 = vadd.f32 0.0, %v1535
        %v1537 = vpop.f32.mrb[0].mxu0
        %1538 = vdwg.mxu0
        %v1539 = vpack.c.bf16 %v1528, %v1525
        %v1540 = vpack.c.bf16 %v1536, %v1533
        %1545 = vrot.lane.b32.xlu0 %v1247, 96
        %v1546 = vpop.permute.xlu0 %1545
        %1547 = vrot.lane.b32.xlu0 %v1251, 96
        %v1548 = vpop.permute.xlu0 %1547
        %1549 = vrot.lane.b32.xlu0 %v1257, 96
        %v1550 = vpop.permute.xlu0 %1549
        %1551 = vrot.lane.b32.xlu0 %v1261, 96
        %v1552 = vpop.permute.xlu0 %1551
        %1557 = vxpose.xlu0.b32.start [1/16] %v1546, 128
        %1558 = vxpose.xlu0.b32.cont [2/16] %v1548, 128
        %1559 = vxpose.xlu0.b32.cont [3/16] %v1550, 128
        %1560 = vxpose.xlu0.b32.cont [4/16] %v1552, 128
        %1561 = vxpose.xlu0.b32.cont [5/16] 0.0, 128
        %1562 = vxpose.xlu0.b32.cont [6/16] 0.0, 128
        %1563 = vxpose.xlu0.b32.cont [7/16] 0.0, 128
        %1564 = vxpose.xlu0.b32.cont [8/16] 0.0, 128
        %1565 = vxpose.xlu0.b32.cont [9/16] 0.0, 128
        %1566 = vxpose.xlu0.b32.cont [10/16] 0.0, 128
        %1567 = vxpose.xlu0.b32.cont [11/16] 0.0, 128
        %1568 = vxpose.xlu0.b32.cont [12/16] 0.0, 128
        %1569 = vxpose.xlu0.b32.cont [13/16] 0.0, 128
        %1570 = vxpose.xlu0.b32.cont [14/16] 0.0, 128
        %1571 = vxpose.xlu0.b32.cont [15/16] 0.0, 128
        %1572 = vxpose.xlu0.b32.end [16/16] 0.0, 128
        %v1573 = vpop.trf.xlu0
        %v1574 = vpop.trf.xlu0
        %v1575 = vpop.trf.xlu0
        %v1576 = vpop.trf.xlu0
        %v1577 = vpop.trf.xlu0
        %v1578 = vpop.trf.xlu0
        %v1579 = vpop.trf.xlu0
        %v1580 = vpop.trf.xlu0
        %v1581 = vpop.trf.xlu0
        %v1582 = vpop.trf.xlu0
        %v1583 = vpop.trf.xlu0
        %v1584 = vpop.trf.xlu0
        %v1585 = vpop.trf.xlu0
        %v1586 = vpop.trf.xlu0
        %v1587 = vpop.trf.xlu0
        %v1588 = vpop.trf.xlu0
        %v1589 = vpack.c.bf16 %v1574, %v1573
        %v1590 = vpack.c.bf16 %v1576, %v1575
        %1593 = vrot.lane.b32.xlu0 %v1340, 96
        %v1594 = vpop.permute.xlu0 %1593
        %1595 = vrot.lane.b32.xlu0 %v1341, 96
        %v1596 = vpop.permute.xlu0 %1595
        %v1598 = vsel %vm1378, %v1594, 0
        %v1601 = vsel %vm1378, %v1596, 0
        %1603 = vmatprep.subr.bf16.mxu0 0
        %1604 = vmatpush1.bf16.msra.mxu0 %v1589
        %1605 = vmatprep.subr.bf16.mxu0 0
        %1606 = vmatpush1.bf16.msra.mxu0 %v1590
        %1607 = vmatprep.subr.bf16.mxu0 0
        %1608 = vmatpush1.bf16.msra.mxu0 0
        %1609 = vmatprep.subr.bf16.mxu0 0
        %1610 = vmatpush1.bf16.msra.mxu0 0
        %1611 = vmatprep.subr.bf16.mxu0 0
        %1612 = vmatpush1.bf16.msra.mxu0 0
        %1613 = vmatprep.subr.bf16.mxu0 0
        %1614 = vmatpush1.bf16.msra.mxu0 0
        %1615 = vmatprep.subr.bf16.mxu0 0
        %1616 = vmatpush1.bf16.msra.mxu0 0
        %1617 = vmatprep.subr.bf16.mxu0 0
        %1618 = vmatpush1.bf16.msra.mxu0 0
        %1619 = vmatprep.subr.bf16.mxu0 0
        %1620 = vmatpush1.bf16.msra.mxu0 0
        %1621 = vmatprep.subr.bf16.mxu0 0
        %1622 = vmatpush1.bf16.msra.mxu0 0
        %1623 = vmatprep.subr.bf16.mxu0 0
        %1624 = vmatpush1.bf16.msra.mxu0 0
        %1625 = vmatprep.subr.bf16.mxu0 0
        %1626 = vmatpush1.bf16.msra.mxu0 0
        %1627 = vmatprep.subr.bf16.mxu0 0
        %1628 = vmatpush1.bf16.msra.mxu0 0
        %1629 = vmatprep.subr.bf16.mxu0 0
        %1630 = vmatpush1.bf16.msra.mxu0 0
        %1631 = vmatprep.subr.bf16.mxu0 0
        %1632 = vmatpush1.bf16.msra.mxu0 0
        %1633 = vmatprep.subr.bf16.mxu0 0
        %1634 = vmatpush1.bf16.msra.mxu0 0
        %1635 = vmatprep.mubr.bf16.mxu0 0
        %1636 = vmatmul.mubr.bf16.gmra.mrb[0].mxu0 %v1598
        %v1637 = vpop.f32.mrb[0].mxu0
        %v1638 = vadd.f32 0.0, %v1637
        %v1639 = vpop.f32.mrb[0].mxu0
        %v1640 = vpop.f32.mrb[0].mxu0
        %v1641 = vadd.f32 0.0, %v1640
        %v1642 = vpop.f32.mrb[0].mxu0
        %1643 = vmatprep.mubr.bf16.mxu0 0
        %1644 = vmatmul.mubr.bf16.gmra.mrb[0].mxu0 %v1601
        %v1645 = vpop.f32.mrb[0].mxu0
        %v1646 = vadd.f32 0.0, %v1645
        %v1647 = vpop.f32.mrb[0].mxu0
        %v1648 = vpop.f32.mrb[0].mxu0
        %v1649 = vadd.f32 0.0, %v1648
        %v1650 = vpop.f32.mrb[0].mxu0
        %1651 = vdwg.mxu0
        %v1652 = vsel %vm1320, %v1638, -1e+09
        %v1653 = vsel %vm1321, %v1641, -1e+09
        %v1654 = vsel %vm1322, %v1646, -1e+09
        %v1655 = vsel %vm1323, %v1649, -1e+09
        %v1656 = vsel %vm1378, %v1652, -inf
        %1657 = vmax.xlane.f32.xlu0 %v1656
        %v1658 = vpop.xlane.xlu0 %1657
        %v1659 = vsel %vm1378, %v1653, -inf
        %1660 = vmax.xlane.f32.xlu0 %v1659
        %v1661 = vpop.xlane.xlu0 %1660
        %v1662 = vsel %vm1378, %v1654, -inf
        %1663 = vmax.xlane.f32.xlu0 %v1662
        %v1664 = vpop.xlane.xlu0 %1663
        %v1665 = vsel %vm1378, %v1655, -inf
        %1666 = vmax.xlane.f32.xlu0 %v1665
        %v1667 = vpop.xlane.xlu0 %1666
        %v1668 = vsub.f32 %v1652, %v1658
        %v1669 = vsub.f32 %v1653, %v1661
        %v1670 = vsub.f32 %v1654, %v1664
        %v1671 = vsub.f32 %v1655, %v1667
        %v1672 = vmul.f32 %v1668, 1.442695
        %v1673 = vpow.pop %v1672
        %v1674 = vmul.f32 %v1669, 1.442695
        %v1675 = vpow.pop %v1674
        %v1676 = vmul.f32 %v1670, 1.442695
        %v1677 = vpow.pop %v1676
        %v1678 = vmul.f32 %v1671, 1.442695
        %v1679 = vpow.pop %v1678
        %v1680 = vsel %vm1378, %v1673, 0.0
        %1681 = vadd.xlane.f32.xlu0 %v1680
        %v1682 = vpop.xlane.xlu0 %1681
        %v1683 = vsel %vm1378, %v1675, 0.0
        %1684 = vadd.xlane.f32.xlu0 %v1683
        %v1685 = vpop.xlane.xlu0 %1684
        %v1686 = vsel %vm1378, %v1677, 0.0
        %1687 = vadd.xlane.f32.xlu0 %v1686
        %v1688 = vpop.xlane.xlu0 %1687
        %v1689 = vsel %vm1378, %v1679, 0.0
        %1690 = vadd.xlane.f32.xlu0 %v1689
        %v1691 = vpop.xlane.xlu0 %1690
        %v1692 = vrcp.pop %v1682
        %v1693 = vrcp.pop %v1685
        %v1694 = vrcp.pop %v1688
        %v1695 = vrcp.pop %v1691
        %v1696 = vmul.f32 %v1673, %v1692
        %v1697 = vmul.f32 %v1675, %v1693
        %v1698 = vmul.f32 %v1677, %v1694
        %v1699 = vmul.f32 %v1679, %v1695
        %v1700 = vpack.c.bf16 %v1697, %v1696
        %v1701 = vpack.c.bf16 %v1699, %v1698
        %1704 = vrot.lane.b32.xlu0 %v1376, 96
        %v1705 = vpop.permute.xlu0 %1704
        %1706 = vrot.lane.b32.xlu0 %v1377, 96
        %v1707 = vpop.permute.xlu0 %1706
        %v1711 = vsel %vm1378, %v1700, 0
        %v1714 = vsel %vm1378, %v1701, 0
        %1716 = vmatprep.subr.bf16.mxu0 0
        %1717 = vmatpush1.bf16.msra.mxu0 %v1705
        %1718 = vmatprep.subr.bf16.mxu0 0
        %1719 = vmatpush1.bf16.msra.mxu0 %v1707
        %1720 = vmatprep.subr.bf16.mxu0 0
        %1721 = vmatpush1.bf16.msra.mxu0 0
        %1722 = vmatprep.subr.bf16.mxu0 0
        %1723 = vmatpush1.bf16.msra.mxu0 0
        %1724 = vmatprep.subr.bf16.mxu0 0
        %1725 = vmatpush1.bf16.msra.mxu0 0
        %1726 = vmatprep.subr.bf16.mxu0 0
        %1727 = vmatpush1.bf16.msra.mxu0 0
        %1728 = vmatprep.subr.bf16.mxu0 0
        %1729 = vmatpush1.bf16.msra.mxu0 0
        %1730 = vmatprep.subr.bf16.mxu0 0
        %1731 = vmatpush1.bf16.msra.mxu0 0
        %1732 = vmatprep.subr.bf16.mxu0 0
        %1733 = vmatpush1.bf16.msra.mxu0 0
        %1734 = vmatprep.subr.bf16.mxu0 0
        %1735 = vmatpush1.bf16.msra.mxu0 0
        %1736 = vmatprep.subr.bf16.mxu0 0
        %1737 = vmatpush1.bf16.msra.mxu0 0
        %1738 = vmatprep.subr.bf16.mxu0 0
        %1739 = vmatpush1.bf16.msra.mxu0 0
        %1740 = vmatprep.subr.bf16.mxu0 0
        %1741 = vmatpush1.bf16.msra.mxu0 0
        %1742 = vmatprep.subr.bf16.mxu0 0
        %1743 = vmatpush1.bf16.msra.mxu0 0
        %1744 = vmatprep.subr.bf16.mxu0 0
        %1745 = vmatpush1.bf16.msra.mxu0 0
        %1746 = vmatprep.subr.bf16.mxu0 0
        %1747 = vmatpush1.bf16.msra.mxu0 0
        %1748 = vmatprep.mubr.bf16.mxu0 0
        %1749 = vmatmul.mubr.bf16.gmra.mrb[0].mxu0 %v1711
        %v1750 = vpop.f32.mrb[0].mxu0
        %v1751 = vadd.f32 0.0, %v1750
        %v1752 = vpop.f32.mrb[0].mxu0
        %v1753 = vpop.f32.mrb[0].mxu0
        %v1754 = vadd.f32 0.0, %v1753
        %v1755 = vpop.f32.mrb[0].mxu0
        %1756 = vmatprep.mubr.bf16.mxu0 0
        %1757 = vmatmul.mubr.bf16.gmra.mrb[0].mxu0 %v1714
        %v1758 = vpop.f32.mrb[0].mxu0
        %v1759 = vadd.f32 0.0, %v1758
        %v1760 = vpop.f32.mrb[0].mxu0
        %v1761 = vpop.f32.mrb[0].mxu0
        %v1762 = vadd.f32 0.0, %v1761
        %v1763 = vpop.f32.mrb[0].mxu0
        %1764 = vdwg.mxu0
        %v1765 = vpack.c.bf16 %v1754, %v1751
        %v1766 = vpack.c.bf16 %v1762, %v1759
        %v1771 = vunpack.c.l.b16 %v1328
        %v1772 = vunpack.c.l.b16 %v1329
        %v1773 = vunpack.c.l.b16 %v1330
        %v1774 = vunpack.c.l.b16 %v1331
        %v1775 = vpack.c.b16 %v1772, %v1771
        %v1776 = vpack.c.b16 %v1774, %v1773
        %v1780 = vsel %vm1378, %v1765, 0
        %v1783 = vsel %vm1378, %v1766, 0
        %1785 = vmatprep.subr.bf16.mxu0 0
        %1786 = vmatpush1.bf16.msra.mxu0 %v1775
        %1787 = vmatprep.subr.bf16.mxu0 0
        %1788 = vmatpush1.bf16.msra.mxu0 %v1776
        %1789 = vmatprep.subr.bf16.mxu0 0
        %1790 = vmatpush1.bf16.msra.mxu0 0
        %1791 = vmatprep.subr.bf16.mxu0 0
        %1792 = vmatpush1.bf16.msra.mxu0 0
        %1793 = vmatprep.subr.bf16.mxu0 0
        %1794 = vmatpush1.bf16.msra.mxu0 0
        %1795 = vmatprep.subr.bf16.mxu0 0
        %1796 = vmatpush1.bf16.msra.mxu0 0
        %1797 = vmatprep.subr.bf16.mxu0 0
        %1798 = vmatpush1.bf16.msra.mxu0 0
        %1799 = vmatprep.subr.bf16.mxu0 0
        %1800 = vmatpush1.bf16.msra.mxu0 0
        %1801 = vmatprep.subr.bf16.mxu0 0
        %1802 = vmatpush1.bf16.msra.mxu0 0
        %1803 = vmatprep.subr.bf16.mxu0 0
        %1804 = vmatpush1.bf16.msra.mxu0 0
        %1805 = vmatprep.subr.bf16.mxu0 0
        %1806 = vmatpush1.bf16.msra.mxu0 0
        %1807 = vmatprep.subr.bf16.mxu0 0
        %1808 = vmatpush1.bf16.msra.mxu0 0
        %1809 = vmatprep.subr.bf16.mxu0 0
        %1810 = vmatpush1.bf16.msra.mxu0 0
        %1811 = vmatprep.subr.bf16.mxu0 0
        %1812 = vmatpush1.bf16.msra.mxu0 0
        %1813 = vmatprep.subr.bf16.mxu0 0
        %1814 = vmatpush1.bf16.msra.mxu0 0
        %1815 = vmatprep.subr.bf16.mxu0 0
        %1816 = vmatpush1.bf16.msra.mxu0 0
        %1817 = vmatprep.mubr.bf16.mxu0 0
        %1818 = vmatmul.mubr.bf16.gmra.mrb[0].mxu0 %v1780
        %v1819 = vpop.f32.mrb[0].mxu0
        %v1820 = vadd.f32 0.0, %v1819
        %v1821 = vpop.f32.mrb[0].mxu0
        %v1822 = vpop.f32.mrb[0].mxu0
        %v1823 = vadd.f32 0.0, %v1822
        %v1824 = vpop.f32.mrb[0].mxu0
        %1825 = vmatprep.mubr.bf16.mxu0 0
        %1826 = vmatmul.mubr.bf16.gmra.mrb[0].mxu0 %v1783
        %v1827 = vpop.f32.mrb[0].mxu0
        %v1828 = vadd.f32 0.0, %v1827
        %v1829 = vpop.f32.mrb[0].mxu0
        %v1830 = vpop.f32.mrb[0].mxu0
        %v1831 = vadd.f32 0.0, %v1830
        %v1832 = vpop.f32.mrb[0].mxu0
        %1833 = vdwg.mxu0
        %v1838 = vunpack.c.l.b16 %v1324
        %v1839 = vunpack.c.l.b16 %v1325
        %v1840 = vunpack.c.l.b16 %v1326
        %v1841 = vunpack.c.l.b16 %v1327
        %v1842 = vpack.c.b16 %v1839, %v1838
        %v1843 = vpack.c.b16 %v1841, %v1840
        %v1847 = vsel %vm1378, %v1539, 0
        %v1850 = vsel %vm1378, %v1540, 0
        %1852 = vmatprep.subr.bf16.mxu0 0
        %1853 = vmatpush1.bf16.msra.mxu0 %v1842
        %1854 = vmatprep.subr.bf16.mxu0 0
        %1855 = vmatpush1.bf16.msra.mxu0 %v1843
        %1856 = vmatprep.subr.bf16.mxu0 0
        %1857 = vmatpush1.bf16.msra.mxu0 0
        %1858 = vmatprep.subr.bf16.mxu0 0
        %1859 = vmatpush1.bf16.msra.mxu0 0
        %1860 = vmatprep.subr.bf16.mxu0 0
        %1861 = vmatpush1.bf16.msra.mxu0 0
        %1862 = vmatprep.subr.bf16.mxu0 0
        %1863 = vmatpush1.bf16.msra.mxu0 0
        %1864 = vmatprep.subr.bf16.mxu0 0
        %1865 = vmatpush1.bf16.msra.mxu0 0
        %1866 = vmatprep.subr.bf16.mxu0 0
        %1867 = vmatpush1.bf16.msra.mxu0 0
        %1868 = vmatprep.subr.bf16.mxu0 0
        %1869 = vmatpush1.bf16.msra.mxu0 0
        %1870 = vmatprep.subr.bf16.mxu0 0
        %1871 = vmatpush1.bf16.msra.mxu0 0
        %1872 = vmatprep.subr.bf16.mxu0 0
        %1873 = vmatpush1.bf16.msra.mxu0 0
        %1874 = vmatprep.subr.bf16.mxu0 0
        %1875 = vmatpush1.bf16.msra.mxu0 0
        %1876 = vmatprep.subr.bf16.mxu0 0
        %1877 = vmatpush1.bf16.msra.mxu0 0
        %1878 = vmatprep.subr.bf16.mxu0 0
        %1879 = vmatpush1.bf16.msra.mxu0 0
        %1880 = vmatprep.subr.bf16.mxu0 0
        %1881 = vmatpush1.bf16.msra.mxu0 0
        %1882 = vmatprep.subr.bf16.mxu0 0
        %1883 = vmatpush1.bf16.msra.mxu0 0
        %1884 = vmatprep.mubr.bf16.mxu0 0
        %1885 = vmatmul.mubr.bf16.gmra.mrb[0].mxu0 %v1847
        %v1886 = vpop.f32.mrb[0].mxu0
        %v1887 = vadd.f32 %v1820, %v1886
        %v1888 = vpop.f32.mrb[0].mxu0
        %v1889 = vpop.f32.mrb[0].mxu0
        %v1890 = vadd.f32 %v1823, %v1889
        %v1891 = vpop.f32.mrb[0].mxu0
        %1892 = vmatprep.mubr.bf16.mxu0 0
        %1893 = vmatmul.mubr.bf16.gmra.mrb[0].mxu0 %v1850
        %v1894 = vpop.f32.mrb[0].mxu0
        %v1895 = vadd.f32 %v1828, %v1894
        %v1896 = vpop.f32.mrb[0].mxu0
        %v1897 = vpop.f32.mrb[0].mxu0
        %v1898 = vadd.f32 %v1831, %v1897
        %v1899 = vpop.f32.mrb[0].mxu0
        %1900 = vdwg.mxu0
        %1901 = vrot.lane.b32.xlu0 %v1247, 64
        %v1902 = vpop.permute.xlu0 %1901
        %1903 = vrot.lane.b32.xlu0 %v1251, 64
        %v1904 = vpop.permute.xlu0 %1903
        %1905 = vrot.lane.b32.xlu0 %v1257, 64
        %v1906 = vpop.permute.xlu0 %1905
        %1907 = vrot.lane.b32.xlu0 %v1261, 64
        %v1908 = vpop.permute.xlu0 %1907
        %1913 = vxpose.xlu0.b32.start [1/16] %v1902, 128
        %1914 = vxpose.xlu0.b32.cont [2/16] %v1904, 128
        %1915 = vxpose.xlu0.b32.cont [3/16] %v1906, 128
        %1916 = vxpose.xlu0.b32.cont [4/16] %v1908, 128
        %1917 = vxpose.xlu0.b32.cont [5/16] 0.0, 128
        %1918 = vxpose.xlu0.b32.cont [6/16] 0.0, 128
        %1919 = vxpose.xlu0.b32.cont [7/16] 0.0, 128
        %1920 = vxpose.xlu0.b32.cont [8/16] 0.0, 128
        %1921 = vxpose.xlu0.b32.cont [9/16] 0.0, 128
        %1922 = vxpose.xlu0.b32.cont [10/16] 0.0, 128
        %1923 = vxpose.xlu0.b32.cont [11/16] 0.0, 128
        %1924 = vxpose.xlu0.b32.cont [12/16] 0.0, 128
        %1925 = vxpose.xlu0.b32.cont [13/16] 0.0, 128
        %1926 = vxpose.xlu0.b32.cont [14/16] 0.0, 128
        %1927 = vxpose.xlu0.b32.cont [15/16] 0.0, 128
        %1928 = vxpose.xlu0.b32.end [16/16] 0.0, 128
        %v1929 = vpop.trf.xlu0
        %v1930 = vpop.trf.xlu0
        %v1931 = vpop.trf.xlu0
        %v1932 = vpop.trf.xlu0
        %v1933 = vpop.trf.xlu0
        %v1934 = vpop.trf.xlu0
        %v1935 = vpop.trf.xlu0
        %v1936 = vpop.trf.xlu0
        %v1937 = vpop.trf.xlu0
        %v1938 = vpop.trf.xlu0
        %v1939 = vpop.trf.xlu0
        %v1940 = vpop.trf.xlu0
        %v1941 = vpop.trf.xlu0
        %v1942 = vpop.trf.xlu0
        %v1943 = vpop.trf.xlu0
        %v1944 = vpop.trf.xlu0
        %v1945 = vpack.c.bf16 %v1930, %v1929
        %v1946 = vpack.c.bf16 %v1932, %v1931
        %1947 = vrot.lane.b32.xlu0 %v1340, 64
        %v1948 = vpop.permute.xlu0 %1947
        %1949 = vrot.lane.b32.xlu0 %v1341, 64
        %v1950 = vpop.permute.xlu0 %1949
        %v1952 = vsel %vm1378, %v1948, 0
        %v1955 = vsel %vm1378, %v1950, 0
        %1957 = vmatprep.subr.bf16.mxu0 0
        %1958 = vmatpush1.bf16.msra.mxu0 %v1945
        %1959 = vmatprep.subr.bf16.mxu0 0
        %1960 = vmatpush1.bf16.msra.mxu0 %v1946
        %1961 = vmatprep.subr.bf16.mxu0 0
        %1962 = vmatpush1.bf16.msra.mxu0 0
        %1963 = vmatprep.subr.bf16.mxu0 0
        %1964 = vmatpush1.bf16.msra.mxu0 0
        %1965 = vmatprep.subr.bf16.mxu0 0
        %1966 = vmatpush1.bf16.msra.mxu0 0
        %1967 = vmatprep.subr.bf16.mxu0 0
        %1968 = vmatpush1.bf16.msra.mxu0 0
        %1969 = vmatprep.subr.bf16.mxu0 0
        %1970 = vmatpush1.bf16.msra.mxu0 0
        %1971 = vmatprep.subr.bf16.mxu0 0
        %1972 = vmatpush1.bf16.msra.mxu0 0
        %1973 = vmatprep.subr.bf16.mxu0 0
        %1974 = vmatpush1.bf16.msra.mxu0 0
        %1975 = vmatprep.subr.bf16.mxu0 0
        %1976 = vmatpush1.bf16.msra.mxu0 0
        %1977 = vmatprep.subr.bf16.mxu0 0
        %1978 = vmatpush1.bf16.msra.mxu0 0
        %1979 = vmatprep.subr.bf16.mxu0 0
        %1980 = vmatpush1.bf16.msra.mxu0 0
        %1981 = vmatprep.subr.bf16.mxu0 0
        %1982 = vmatpush1.bf16.msra.mxu0 0
        %1983 = vmatprep.subr.bf16.mxu0 0
        %1984 = vmatpush1.bf16.msra.mxu0 0
        %1985 = vmatprep.subr.bf16.mxu0 0
        %1986 = vmatpush1.bf16.msra.mxu0 0
        %1987 = vmatprep.subr.bf16.mxu0 0
        %1988 = vmatpush1.bf16.msra.mxu0 0
        %1989 = vmatprep.mubr.bf16.mxu0 0
        %1990 = vmatmul.mubr.bf16.gmra.mrb[0].mxu0 %v1952
        %v1991 = vpop.f32.mrb[0].mxu0
        %v1992 = vadd.f32 0.0, %v1991
        %v1993 = vpop.f32.mrb[0].mxu0
        %v1994 = vpop.f32.mrb[0].mxu0
        %v1995 = vadd.f32 0.0, %v1994
        %v1996 = vpop.f32.mrb[0].mxu0
        %1997 = vmatprep.mubr.bf16.mxu0 0
        %1998 = vmatmul.mubr.bf16.gmra.mrb[0].mxu0 %v1955
        %v1999 = vpop.f32.mrb[0].mxu0
        %v2000 = vadd.f32 0.0, %v1999
        %v2001 = vpop.f32.mrb[0].mxu0
        %v2002 = vpop.f32.mrb[0].mxu0
        %v2003 = vadd.f32 0.0, %v2002
        %v2004 = vpop.f32.mrb[0].mxu0
        %2005 = vdwg.mxu0
        %v2006 = vsel %vm1320, %v1992, -1e+09
        %v2007 = vsel %vm1321, %v1995, -1e+09
        %v2008 = vsel %vm1322, %v2000, -1e+09
        %v2009 = vsel %vm1323, %v2003, -1e+09
        %v2010 = vsel %vm1378, %v2006, -inf
        %2011 = vmax.xlane.f32.xlu0 %v2010
        %v2012 = vpop.xlane.xlu0 %2011
        %v2013 = vsel %vm1378, %v2007, -inf
        %2014 = vmax.xlane.f32.xlu0 %v2013
        %v2015 = vpop.xlane.xlu0 %2014
        %v2016 = vsel %vm1378, %v2008, -inf
        %2017 = vmax.xlane.f32.xlu0 %v2016
        %v2018 = vpop.xlane.xlu0 %2017
        %v2019 = vsel %vm1378, %v2009, -inf
        %2020 = vmax.xlane.f32.xlu0 %v2019
        %v2021 = vpop.xlane.xlu0 %2020
        %v2022 = vsub.f32 %v2006, %v2012
        %v2023 = vsub.f32 %v2007, %v2015
        %v2024 = vsub.f32 %v2008, %v2018
        %v2025 = vsub.f32 %v2009, %v2021
        %v2026 = vmul.f32 %v2022, 1.442695
        %v2027 = vpow.pop %v2026
        %v2028 = vmul.f32 %v2023, 1.442695
        %v2029 = vpow.pop %v2028
        %v2030 = vmul.f32 %v2024, 1.442695
        %v2031 = vpow.pop %v2030
        %v2032 = vmul.f32 %v2025, 1.442695
        %v2033 = vpow.pop %v2032
        %v2034 = vsel %vm1378, %v2027, 0.0
        %2035 = vadd.xlane.f32.xlu0 %v2034
        %v2036 = vpop.xlane.xlu0 %2035
        %v2037 = vsel %vm1378, %v2029, 0.0
        %2038 = vadd.xlane.f32.xlu0 %v2037
        %v2039 = vpop.xlane.xlu0 %2038
        %v2040 = vsel %vm1378, %v2031, 0.0
        %2041 = vadd.xlane.f32.xlu0 %v2040
        %v2042 = vpop.xlane.xlu0 %2041
        %v2043 = vsel %vm1378, %v2033, 0.0
        %2044 = vadd.xlane.f32.xlu0 %v2043
        %v2045 = vpop.xlane.xlu0 %2044
        %v2046 = vrcp.pop %v2036
        %v2047 = vrcp.pop %v2039
        %v2048 = vrcp.pop %v2042
        %v2049 = vrcp.pop %v2045
        %v2050 = vmul.f32 %v2027, %v2046
        %v2051 = vmul.f32 %v2029, %v2047
        %v2052 = vmul.f32 %v2031, %v2048
        %v2053 = vmul.f32 %v2033, %v2049
        %v2054 = vpack.c.bf16 %v2051, %v2050
        %v2055 = vpack.c.bf16 %v2053, %v2052
        %2056 = vrot.lane.b32.xlu0 %v1376, 64
        %v2057 = vpop.permute.xlu0 %2056
        %2058 = vrot.lane.b32.xlu0 %v1377, 64
        %v2059 = vpop.permute.xlu0 %2058
        %v2063 = vsel %vm1378, %v2054, 0
        %v2066 = vsel %vm1378, %v2055, 0
        %2068 = vmatprep.subr.bf16.mxu0 0
        %2069 = vmatpush1.bf16.msra.mxu0 %v2057
        %2070 = vmatprep.subr.bf16.mxu0 0
        %2071 = vmatpush1.bf16.msra.mxu0 %v2059
        %2072 = vmatprep.subr.bf16.mxu0 0
        %2073 = vmatpush1.bf16.msra.mxu0 0
        %2074 = vmatprep.subr.bf16.mxu0 0
        %2075 = vmatpush1.bf16.msra.mxu0 0
        %2076 = vmatprep.subr.bf16.mxu0 0
        %2077 = vmatpush1.bf16.msra.mxu0 0
        %2078 = vmatprep.subr.bf16.mxu0 0
        %2079 = vmatpush1.bf16.msra.mxu0 0
        %2080 = vmatprep.subr.bf16.mxu0 0
        %2081 = vmatpush1.bf16.msra.mxu0 0
        %2082 = vmatprep.subr.bf16.mxu0 0
        %2083 = vmatpush1.bf16.msra.mxu0 0
        %2084 = vmatprep.subr.bf16.mxu0 0
        %2085 = vmatpush1.bf16.msra.mxu0 0
        %2086 = vmatprep.subr.bf16.mxu0 0
        %2087 = vmatpush1.bf16.msra.mxu0 0
        %2088 = vmatprep.subr.bf16.mxu0 0
        %2089 = vmatpush1.bf16.msra.mxu0 0
        %2090 = vmatprep.subr.bf16.mxu0 0
        %2091 = vmatpush1.bf16.msra.mxu0 0
        %2092 = vmatprep.subr.bf16.mxu0 0
        %2093 = vmatpush1.bf16.msra.mxu0 0
        %2094 = vmatprep.subr.bf16.mxu0 0
        %2095 = vmatpush1.bf16.msra.mxu0 0
        %2096 = vmatprep.subr.bf16.mxu0 0
        %2097 = vmatpush1.bf16.msra.mxu0 0
        %2098 = vmatprep.subr.bf16.mxu0 0
        %2099 = vmatpush1.bf16.msra.mxu0 0
        %2100 = vmatprep.mubr.bf16.mxu0 0
        %2101 = vmatmul.mubr.bf16.gmra.mrb[0].mxu0 %v2063
        %v2102 = vpop.f32.mrb[0].mxu0
        %v2103 = vadd.f32 0.0, %v2102
        %v2104 = vpop.f32.mrb[0].mxu0
        %v2105 = vpop.f32.mrb[0].mxu0
        %v2106 = vadd.f32 0.0, %v2105
        %v2107 = vpop.f32.mrb[0].mxu0
        %2108 = vmatprep.mubr.bf16.mxu0 0
        %2109 = vmatmul.mubr.bf16.gmra.mrb[0].mxu0 %v2066
        %v2110 = vpop.f32.mrb[0].mxu0
        %v2111 = vadd.f32 0.0, %v2110
        %v2112 = vpop.f32.mrb[0].mxu0
        %v2113 = vpop.f32.mrb[0].mxu0
        %v2114 = vadd.f32 0.0, %v2113
        %v2115 = vpop.f32.mrb[0].mxu0
        %2116 = vdwg.mxu0
        %v2117 = vpack.c.bf16 %v2106, %v2103
        %v2118 = vpack.c.bf16 %v2114, %v2111
        %v2123 = vunpack.c.l.b16 %v1332
        %v2124 = vunpack.c.l.b16 %v1333
        %v2125 = vunpack.c.l.b16 %v1334
        %v2126 = vunpack.c.l.b16 %v1335
        %v2127 = vpack.c.b16 %v2124, %v2123
        %v2128 = vpack.c.b16 %v2126, %v2125
        %v2132 = vsel %vm1378, %v2117, 0
        %v2135 = vsel %vm1378, %v2118, 0
        %2137 = vmatprep.subr.bf16.mxu0 0
        %2138 = vmatpush1.bf16.msra.mxu0 %v2127
        %2139 = vmatprep.subr.bf16.mxu0 0
        %2140 = vmatpush1.bf16.msra.mxu0 %v2128
        %2141 = vmatprep.subr.bf16.mxu0 0
        %2142 = vmatpush1.bf16.msra.mxu0 0
        %2143 = vmatprep.subr.bf16.mxu0 0
        %2144 = vmatpush1.bf16.msra.mxu0 0
        %2145 = vmatprep.subr.bf16.mxu0 0
        %2146 = vmatpush1.bf16.msra.mxu0 0
        %2147 = vmatprep.subr.bf16.mxu0 0
        %2148 = vmatpush1.bf16.msra.mxu0 0
        %2149 = vmatprep.subr.bf16.mxu0 0
        %2150 = vmatpush1.bf16.msra.mxu0 0
        %2151 = vmatprep.subr.bf16.mxu0 0
        %2152 = vmatpush1.bf16.msra.mxu0 0
        %2153 = vmatprep.subr.bf16.mxu0 0
        %2154 = vmatpush1.bf16.msra.mxu0 0
        %2155 = vmatprep.subr.bf16.mxu0 0
        %2156 = vmatpush1.bf16.msra.mxu0 0
        %2157 = vmatprep.subr.bf16.mxu0 0
        %2158 = vmatpush1.bf16.msra.mxu0 0
        %2159 = vmatprep.subr.bf16.mxu0 0
        %2160 = vmatpush1.bf16.msra.mxu0 0
        %2161 = vmatprep.subr.bf16.mxu0 0
        %2162 = vmatpush1.bf16.msra.mxu0 0
        %2163 = vmatprep.subr.bf16.mxu0 0
        %2164 = vmatpush1.bf16.msra.mxu0 0
        %2165 = vmatprep.subr.bf16.mxu0 0
        %2166 = vmatpush1.bf16.msra.mxu0 0
        %2167 = vmatprep.subr.bf16.mxu0 0
        %2168 = vmatpush1.bf16.msra.mxu0 0
        %2169 = vmatprep.mubr.bf16.mxu0 0
        %2170 = vmatmul.mubr.bf16.gmra.mrb[0].mxu0 %v2132
        %v2171 = vpop.f32.mrb[0].mxu0
        %v2172 = vadd.f32 0.0, %v2171
        %v2173 = vpop.f32.mrb[0].mxu0
        %v2174 = vpop.f32.mrb[0].mxu0
        %v2175 = vadd.f32 0.0, %v2174
        %v2176 = vpop.f32.mrb[0].mxu0
        %2177 = vmatprep.mubr.bf16.mxu0 0
        %2178 = vmatmul.mubr.bf16.gmra.mrb[0].mxu0 %v2135
        %v2179 = vpop.f32.mrb[0].mxu0
        %v2180 = vadd.f32 0.0, %v2179
        %v2181 = vpop.f32.mrb[0].mxu0
        %v2182 = vpop.f32.mrb[0].mxu0
        %v2183 = vadd.f32 0.0, %v2182
        %v2184 = vpop.f32.mrb[0].mxu0
        %2185 = vdwg.mxu0
        %v2186 = vadd.f32 %v1887, %v2172
        %v2187 = vadd.f32 %v1890, %v2175
        %v2188 = vadd.f32 %v1895, %v2180
        %v2189 = vadd.f32 %v1898, %v2183
        %2190 = vrot.lane.b32.xlu0 %v1247, 32
        %v2191 = vpop.permute.xlu0 %2190
        %2192 = vrot.lane.b32.xlu0 %v1251, 32
        %v2193 = vpop.permute.xlu0 %2192
        %2194 = vrot.lane.b32.xlu0 %v1257, 32
        %v2195 = vpop.permute.xlu0 %2194
        %2196 = vrot.lane.b32.xlu0 %v1261, 32
        %v2197 = vpop.permute.xlu0 %2196
        %2202 = vxpose.xlu0.b32.start [1/16] %v2191, 128
        %2203 = vxpose.xlu0.b32.cont [2/16] %v2193, 128
        %2204 = vxpose.xlu0.b32.cont [3/16] %v2195, 128
        %2205 = vxpose.xlu0.b32.cont [4/16] %v2197, 128
        %2206 = vxpose.xlu0.b32.cont [5/16] 0.0, 128
        %2207 = vxpose.xlu0.b32.cont [6/16] 0.0, 128
        %2208 = vxpose.xlu0.b32.cont [7/16] 0.0, 128
        %2209 = vxpose.xlu0.b32.cont [8/16] 0.0, 128
        %2210 = vxpose.xlu0.b32.cont [9/16] 0.0, 128
        %2211 = vxpose.xlu0.b32.cont [10/16] 0.0, 128
        %2212 = vxpose.xlu0.b32.cont [11/16] 0.0, 128
        %2213 = vxpose.xlu0.b32.cont [12/16] 0.0, 128
        %2214 = vxpose.xlu0.b32.cont [13/16] 0.0, 128
        %2215 = vxpose.xlu0.b32.cont [14/16] 0.0, 128
        %2216 = vxpose.xlu0.b32.cont [15/16] 0.0, 128
        %2217 = vxpose.xlu0.b32.end [16/16] 0.0, 128
        %v2218 = vpop.trf.xlu0
        %v2219 = vpop.trf.xlu0
        %v2220 = vpop.trf.xlu0
        %v2221 = vpop.trf.xlu0
        %v2222 = vpop.trf.xlu0
        %v2223 = vpop.trf.xlu0
        %v2224 = vpop.trf.xlu0
        %v2225 = vpop.trf.xlu0
        %v2226 = vpop.trf.xlu0
        %v2227 = vpop.trf.xlu0
        %v2228 = vpop.trf.xlu0
        %v2229 = vpop.trf.xlu0
        %v2230 = vpop.trf.xlu0
        %v2231 = vpop.trf.xlu0
        %v2232 = vpop.trf.xlu0
        %v2233 = vpop.trf.xlu0
        %v2234 = vpack.c.bf16 %v2219, %v2218
        %v2235 = vpack.c.bf16 %v2221, %v2220
        %2236 = vrot.lane.b32.xlu0 %v1340, 32
        %v2237 = vpop.permute.xlu0 %2236
        %2238 = vrot.lane.b32.xlu0 %v1341, 32
        %v2239 = vpop.permute.xlu0 %2238
        %v2241 = vsel %vm1378, %v2237, 0
        %v2244 = vsel %vm1378, %v2239, 0
        %2246 = vmatprep.subr.bf16.mxu0 0
        %2247 = vmatpush1.bf16.msra.mxu0 %v2234
        %2248 = vmatprep.subr.bf16.mxu0 0
        %2249 = vmatpush1.bf16.msra.mxu0 %v2235
        %2250 = vmatprep.subr.bf16.mxu0 0
        %2251 = vmatpush1.bf16.msra.mxu0 0
        %2252 = vmatprep.subr.bf16.mxu0 0
        %2253 = vmatpush1.bf16.msra.mxu0 0
        %2254 = vmatprep.subr.bf16.mxu0 0
        %2255 = vmatpush1.bf16.msra.mxu0 0
        %2256 = vmatprep.subr.bf16.mxu0 0
        %2257 = vmatpush1.bf16.msra.mxu0 0
        %2258 = vmatprep.subr.bf16.mxu0 0
        %2259 = vmatpush1.bf16.msra.mxu0 0
        %2260 = vmatprep.subr.bf16.mxu0 0
        %2261 = vmatpush1.bf16.msra.mxu0 0
        %2262 = vmatprep.subr.bf16.mxu0 0
        %2263 = vmatpush1.bf16.msra.mxu0 0
        %2264 = vmatprep.subr.bf16.mxu0 0
        %2265 = vmatpush1.bf16.msra.mxu0 0
        %2266 = vmatprep.subr.bf16.mxu0 0
        %2267 = vmatpush1.bf16.msra.mxu0 0
        %2268 = vmatprep.subr.bf16.mxu0 0
        %2269 = vmatpush1.bf16.msra.mxu0 0
        %2270 = vmatprep.subr.bf16.mxu0 0
        %2271 = vmatpush1.bf16.msra.mxu0 0
        %2272 = vmatprep.subr.bf16.mxu0 0
        %2273 = vmatpush1.bf16.msra.mxu0 0
        %2274 = vmatprep.subr.bf16.mxu0 0
        %2275 = vmatpush1.bf16.msra.mxu0 0
        %2276 = vmatprep.subr.bf16.mxu0 0
        %2277 = vmatpush1.bf16.msra.mxu0 0
        %2278 = vmatprep.mubr.bf16.mxu0 0
        %2279 = vmatmul.mubr.bf16.gmra.mrb[0].mxu0 %v2241
        %v2280 = vpop.f32.mrb[0].mxu0
        %v2281 = vadd.f32 0.0, %v2280
        %v2282 = vpop.f32.mrb[0].mxu0
        %v2283 = vpop.f32.mrb[0].mxu0
        %v2284 = vadd.f32 0.0, %v2283
        %v2285 = vpop.f32.mrb[0].mxu0
        %2286 = vmatprep.mubr.bf16.mxu0 0
        %2287 = vmatmul.mubr.bf16.gmra.mrb[0].mxu0 %v2244
        %v2288 = vpop.f32.mrb[0].mxu0
        %v2289 = vadd.f32 0.0, %v2288
        %v2290 = vpop.f32.mrb[0].mxu0
        %v2291 = vpop.f32.mrb[0].mxu0
        %v2292 = vadd.f32 0.0, %v2291
        %v2293 = vpop.f32.mrb[0].mxu0
        %2294 = vdwg.mxu0
        %v2295 = vsel %vm1320, %v2281, -1e+09
        %v2296 = vsel %vm1321, %v2284, -1e+09
        %v2297 = vsel %vm1322, %v2289, -1e+09
        %v2298 = vsel %vm1323, %v2292, -1e+09
        %v2299 = vsel %vm1378, %v2295, -inf
        %2300 = vmax.xlane.f32.xlu0 %v2299
        %v2301 = vpop.xlane.xlu0 %2300
        %v2302 = vsel %vm1378, %v2296, -inf
        %2303 = vmax.xlane.f32.xlu0 %v2302
        %v2304 = vpop.xlane.xlu0 %2303
        %v2305 = vsel %vm1378, %v2297, -inf
        %2306 = vmax.xlane.f32.xlu0 %v2305
        %v2307 = vpop.xlane.xlu0 %2306
        %v2308 = vsel %vm1378, %v2298, -inf
        %2309 = vmax.xlane.f32.xlu0 %v2308
        %v2310 = vpop.xlane.xlu0 %2309
        %v2311 = vsub.f32 %v2295, %v2301
        %v2312 = vsub.f32 %v2296, %v2304
        %v2313 = vsub.f32 %v2297, %v2307
        %v2314 = vsub.f32 %v2298, %v2310
        %v2315 = vmul.f32 %v2311, 1.442695
        %v2316 = vpow.pop %v2315
        %v2317 = vmul.f32 %v2312, 1.442695
        %v2318 = vpow.pop %v2317
        %v2319 = vmul.f32 %v2313, 1.442695
        %v2320 = vpow.pop %v2319
        %v2321 = vmul.f32 %v2314, 1.442695
        %v2322 = vpow.pop %v2321
        %v2323 = vsel %vm1378, %v2316, 0.0
        %2324 = vadd.xlane.f32.xlu0 %v2323
        %v2325 = vpop.xlane.xlu0 %2324
        %v2326 = vsel %vm1378, %v2318, 0.0
        %2327 = vadd.xlane.f32.xlu0 %v2326
        %v2328 = vpop.xlane.xlu0 %2327
        %v2329 = vsel %vm1378, %v2320, 0.0
        %2330 = vadd.xlane.f32.xlu0 %v2329
        %v2331 = vpop.xlane.xlu0 %2330
        %v2332 = vsel %vm1378, %v2322, 0.0
        %2333 = vadd.xlane.f32.xlu0 %v2332
        %v2334 = vpop.xlane.xlu0 %2333
        %v2335 = vrcp.pop %v2325
        %v2336 = vrcp.pop %v2328
        %v2337 = vrcp.pop %v2331
        %v2338 = vrcp.pop %v2334
        %v2339 = vmul.f32 %v2316, %v2335
        %v2340 = vmul.f32 %v2318, %v2336
        %v2341 = vmul.f32 %v2320, %v2337
        %v2342 = vmul.f32 %v2322, %v2338
        %v2343 = vpack.c.bf16 %v2340, %v2339
        %v2344 = vpack.c.bf16 %v2342, %v2341
        %2345 = vrot.lane.b32.xlu0 %v1376, 32
        %v2346 = vpop.permute.xlu0 %2345
        %2347 = vrot.lane.b32.xlu0 %v1377, 32
        %v2348 = vpop.permute.xlu0 %2347
        %v2352 = vsel %vm1378, %v2343, 0
        %v2355 = vsel %vm1378, %v2344, 0
        %2357 = vmatprep.subr.bf16.mxu0 0
        %2358 = vmatpush1.bf16.msra.mxu0 %v2346
        %2359 = vmatprep.subr.bf16.mxu0 0
        %2360 = vmatpush1.bf16.msra.mxu0 %v2348
        %2361 = vmatprep.subr.bf16.mxu0 0
        %2362 = vmatpush1.bf16.msra.mxu0 0
        %2363 = vmatprep.subr.bf16.mxu0 0
        %2364 = vmatpush1.bf16.msra.mxu0 0
        %2365 = vmatprep.subr.bf16.mxu0 0
        %2366 = vmatpush1.bf16.msra.mxu0 0
        %2367 = vmatprep.subr.bf16.mxu0 0
        %2368 = vmatpush1.bf16.msra.mxu0 0
        %2369 = vmatprep.subr.bf16.mxu0 0
        %2370 = vmatpush1.bf16.msra.mxu0 0
        %2371 = vmatprep.subr.bf16.mxu0 0
        %2372 = vmatpush1.bf16.msra.mxu0 0
        %2373 = vmatprep.subr.bf16.mxu0 0
        %2374 = vmatpush1.bf16.msra.mxu0 0
        %2375 = vmatprep.subr.bf16.mxu0 0
        %2376 = vmatpush1.bf16.msra.mxu0 0
        %2377 = vmatprep.subr.bf16.mxu0 0
        %2378 = vmatpush1.bf16.msra.mxu0 0
        %2379 = vmatprep.subr.bf16.mxu0 0
        %2380 = vmatpush1.bf16.msra.mxu0 0
        %2381 = vmatprep.subr.bf16.mxu0 0
        %2382 = vmatpush1.bf16.msra.mxu0 0
        %2383 = vmatprep.subr.bf16.mxu0 0
        %2384 = vmatpush1.bf16.msra.mxu0 0
        %2385 = vmatprep.subr.bf16.mxu0 0
        %2386 = vmatpush1.bf16.msra.mxu0 0
        %2387 = vmatprep.subr.bf16.mxu0 0
        %2388 = vmatpush1.bf16.msra.mxu0 0
        %2389 = vmatprep.mubr.bf16.mxu0 0
        %2390 = vmatmul.mubr.bf16.gmra.mrb[0].mxu0 %v2352
        %v2391 = vpop.f32.mrb[0].mxu0
        %v2392 = vadd.f32 0.0, %v2391
        %v2393 = vpop.f32.mrb[0].mxu0
        %v2394 = vpop.f32.mrb[0].mxu0
        %v2395 = vadd.f32 0.0, %v2394
        %v2396 = vpop.f32.mrb[0].mxu0
        %2397 = vmatprep.mubr.bf16.mxu0 0
        %2398 = vmatmul.mubr.bf16.gmra.mrb[0].mxu0 %v2355
        %v2399 = vpop.f32.mrb[0].mxu0
        %v2400 = vadd.f32 0.0, %v2399
        %v2401 = vpop.f32.mrb[0].mxu0
        %v2402 = vpop.f32.mrb[0].mxu0
        %v2403 = vadd.f32 0.0, %v2402
        %v2404 = vpop.f32.mrb[0].mxu0
        %2405 = vdwg.mxu0
        %v2406 = vpack.c.bf16 %v2395, %v2392
        %v2407 = vpack.c.bf16 %v2403, %v2400
        %v2412 = vunpack.c.l.b16 %v1336
        %v2413 = vunpack.c.l.b16 %v1337
        %v2414 = vunpack.c.l.b16 %v1338
        %v2415 = vunpack.c.l.b16 %v1339
        %v2416 = vpack.c.b16 %v2413, %v2412
        %v2417 = vpack.c.b16 %v2415, %v2414
        %v2421 = vsel %vm1378, %v2406, 0
        %v2424 = vsel %vm1378, %v2407, 0
        %2426 = vmatprep.subr.bf16.mxu0 0
        %2427 = vmatpush1.bf16.msra.mxu0 %v2416
        %2428 = vmatprep.subr.bf16.mxu0 0
        %2429 = vmatpush1.bf16.msra.mxu0 %v2417
        %2430 = vmatprep.subr.bf16.mxu0 0
        %2431 = vmatpush1.bf16.msra.mxu0 0
        %2432 = vmatprep.subr.bf16.mxu0 0
        %2433 = vmatpush1.bf16.msra.mxu0 0
        %2434 = vmatprep.subr.bf16.mxu0 0
        %2435 = vmatpush1.bf16.msra.mxu0 0
        %2436 = vmatprep.subr.bf16.mxu0 0
        %2437 = vmatpush1.bf16.msra.mxu0 0
        %2438 = vmatprep.subr.bf16.mxu0 0
        %2439 = vmatpush1.bf16.msra.mxu0 0
        %2440 = vmatprep.subr.bf16.mxu0 0
        %2441 = vmatpush1.bf16.msra.mxu0 0
        %2442 = vmatprep.subr.bf16.mxu0 0
        %2443 = vmatpush1.bf16.msra.mxu0 0
        %2444 = vmatprep.subr.bf16.mxu0 0
        %2445 = vmatpush1.bf16.msra.mxu0 0
        %2446 = vmatprep.subr.bf16.mxu0 0
        %2447 = vmatpush1.bf16.msra.mxu0 0
        %2448 = vmatprep.subr.bf16.mxu0 0
        %2449 = vmatpush1.bf16.msra.mxu0 0
        %2450 = vmatprep.subr.bf16.mxu0 0
        %2451 = vmatpush1.bf16.msra.mxu0 0
        %2452 = vmatprep.subr.bf16.mxu0 0
        %2453 = vmatpush1.bf16.msra.mxu0 0
        %2454 = vmatprep.subr.bf16.mxu0 0
        %2455 = vmatpush1.bf16.msra.mxu0 0
        %2456 = vmatprep.subr.bf16.mxu0 0
        %2457 = vmatpush1.bf16.msra.mxu0 0
        %2458 = vmatprep.mubr.bf16.mxu0 0
        %2459 = vmatmul.mubr.bf16.gmra.mrb[0].mxu0 %v2421
        %v2460 = vpop.f32.mrb[0].mxu0
        %v2461 = vadd.f32 0.0, %v2460
        %v2462 = vpop.f32.mrb[0].mxu0
        %v2463 = vpop.f32.mrb[0].mxu0
        %v2464 = vadd.f32 0.0, %v2463
        %v2465 = vpop.f32.mrb[0].mxu0
        %2466 = vmatprep.mubr.bf16.mxu0 0
        %2467 = vmatmul.mubr.bf16.gmra.mrb[0].mxu0 %v2424
        %v2468 = vpop.f32.mrb[0].mxu0
        %v2469 = vadd.f32 0.0, %v2468
        %v2470 = vpop.f32.mrb[0].mxu0
        %v2471 = vpop.f32.mrb[0].mxu0
        %v2472 = vadd.f32 0.0, %v2471
        %v2473 = vpop.f32.mrb[0].mxu0
        %2474 = vdwg.mxu0
        %v2475 = vadd.f32 %v2186, %v2461
        %v2476 = vadd.f32 %v2187, %v2464
        %v2477 = vadd.f32 %v2188, %v2469
        %v2478 = vadd.f32 %v2189, %v2472
        %v2479 = vadd.f32 %v960, %v2475
        %v2480 = vadd.f32 %v961, %v2476
        %v2481 = vadd.f32 %v962, %v2477
        %v2482 = vadd.f32 %v963, %v2478
        %v2483 = vld [vmem:[%s795] sm:$0x1]
        %v2485 = vlaneseq
        %v2486 = vshrl.u32 %v2485, 7
        %v2487 = vsub.s32 0, %v2486
        %v2488 = vrot.slane %v2483, %v2487
        %v2490 = vadd.f32 %v2479, %v2488
        %v2491 = vadd.f32 %v2480, %v2488
        %v2492 = vadd.f32 %v2481, %v2488
        %v2493 = vadd.f32 %v2482, %v2488
        %v2494 = vld [vmem:[%s803] sm:$0x1]
        %v2495 = vld [vmem:[%s811] sm:$0x1]
        %2496 = vadd.xlane.f32.xlu0 %v2490
        %v2497 = vpop.xlane.xlu0 %2496
        %2498 = vadd.xlane.f32.xlu0 %v2491
        %v2499 = vpop.xlane.xlu0 %2498
        %2500 = vadd.xlane.f32.xlu0 %v2492
        %v2501 = vpop.xlane.xlu0 %2500
        %2502 = vadd.xlane.f32.xlu0 %v2493
        %v2503 = vpop.xlane.xlu0 %2502
        %v2504 = vmul.f32 %v2497, %v974
        %v2505 = vmul.f32 %v2499, %v974
        %v2506 = vmul.f32 %v2501, %v974
        %v2507 = vmul.f32 %v2503, %v974
        %v2508 = vsub.f32 %v2490, %v2504
        %v2509 = vsub.f32 %v2491, %v2505
        %v2510 = vsub.f32 %v2492, %v2506
        %v2511 = vsub.f32 %v2493, %v2507
        %v2512 = vmul.f32 %v2508, %v2508
        %v2513 = vmul.f32 %v2509, %v2509
        %v2514 = vmul.f32 %v2510, %v2510
        %v2515 = vmul.f32 %v2511, %v2511
        %2516 = vadd.xlane.f32.xlu0 %v2512
        %v2517 = vpop.xlane.xlu0 %2516
        %2518 = vadd.xlane.f32.xlu0 %v2513
        %v2519 = vpop.xlane.xlu0 %2518
        %2520 = vadd.xlane.f32.xlu0 %v2514
        %v2521 = vpop.xlane.xlu0 %2520
        %2522 = vadd.xlane.f32.xlu0 %v2515
        %v2523 = vpop.xlane.xlu0 %2522
        %v2524 = vmul.f32 %v2517, %v974
        %v2525 = vmul.f32 %v2519, %v974
        %v2526 = vmul.f32 %v2521, %v974
        %v2527 = vmul.f32 %v2523, %v974
        %v2528 = vadd.f32 %v2524, 1e-05
        %v2529 = vadd.f32 %v2525, 1e-05
        %v2530 = vadd.f32 %v2526, 1e-05
        %v2531 = vadd.f32 %v2527, 1e-05
        %v2532 = vrsqrt.pop %v2528
        %v2533 = vrsqrt.pop %v2529
        %v2534 = vrsqrt.pop %v2530
        %v2535 = vrsqrt.pop %v2531
        %v2536 = vmul.f32 %v2508, %v2532
        %v2537 = vmul.f32 %v2509, %v2533
        %v2538 = vmul.f32 %v2510, %v2534
        %v2539 = vmul.f32 %v2511, %v2535
        %v2541 = vlaneseq
        %v2542 = vshrl.u32 %v2541, 7
        %v2543 = vsub.s32 0, %v2542
        %v2544 = vrot.slane %v2494, %v2543
        %v2546 = vmul.f32 %v2536, %v2544
        %v2547 = vmul.f32 %v2537, %v2544
        %v2548 = vmul.f32 %v2538, %v2544
        %v2549 = vmul.f32 %v2539, %v2544
        %v2551 = vlaneseq
        %v2552 = vshrl.u32 %v2551, 7
        %v2553 = vsub.s32 0, %v2552
        %v2554 = vrot.slane %v2495, %v2553
        %v2556 = vadd.f32 %v2546, %v2554
        %v2557 = vadd.f32 %v2547, %v2554
        %v2558 = vadd.f32 %v2548, %v2554
        %v2559 = vadd.f32 %v2549, %v2554
        %v2560 = vpack.c.bf16 %v2557, %v2556
        %v2561 = vpack.c.bf16 %v2559, %v2558
        %v2562 = vld [vmem:[%s820] sm:$0xff]
        %v2563 = vld [vmem:[%s820 + $0x8] sm:$0xff]
        %v2564 = vld [vmem:[%s820 + $0x10] sm:$0xff]
        %v2565 = vld [vmem:[%s820 + $0x18] sm:$0xff]
        %v2566 = vld [vmem:[%s820 + $0x20] sm:$0xff]
        %v2567 = vld [vmem:[%s820 + $0x28] sm:$0xff]
        %v2568 = vld [vmem:[%s820 + $0x30] sm:$0xff]
        %v2569 = vld [vmem:[%s820 + $0x38] sm:$0xff]
        %v2570 = vld [vmem:[%s820 + $0x40] sm:$0xff]
        %v2571 = vld [vmem:[%s820 + $0x48] sm:$0xff]
        %v2572 = vld [vmem:[%s820 + $0x50] sm:$0xff]
        %v2573 = vld [vmem:[%s820 + $0x58] sm:$0xff]
        %v2574 = vld [vmem:[%s820 + $0x60] sm:$0xff]
        %v2575 = vld [vmem:[%s820 + $0x68] sm:$0xff]
        %v2576 = vld [vmem:[%s820 + $0x70] sm:$0xff]
        %v2577 = vld [vmem:[%s820 + $0x78] sm:$0xff]
        %v2578 = vld [vmem:[%s820 + $0x80] sm:$0xff]
        %v2579 = vld [vmem:[%s820 + $0x88] sm:$0xff]
        %v2580 = vld [vmem:[%s820 + $0x90] sm:$0xff]
        %v2581 = vld [vmem:[%s820 + $0x98] sm:$0xff]
        %v2582 = vld [vmem:[%s820 + $0xa0] sm:$0xff]
        %v2583 = vld [vmem:[%s820 + $0xa8] sm:$0xff]
        %v2584 = vld [vmem:[%s820 + $0xb0] sm:$0xff]
        %v2585 = vld [vmem:[%s820 + $0xb8] sm:$0xff]
        %v2586 = vld [vmem:[%s820 + $0xc0] sm:$0xff]
        %v2587 = vld [vmem:[%s820 + $0xc8] sm:$0xff]
        %v2588 = vld [vmem:[%s820 + $0xd0] sm:$0xff]
        %v2589 = vld [vmem:[%s820 + $0xd8] sm:$0xff]
        %v2590 = vld [vmem:[%s820 + $0xe0] sm:$0xff]
        %v2591 = vld [vmem:[%s820 + $0xe8] sm:$0xff]
        %v2592 = vld [vmem:[%s820 + $0xf0] sm:$0xff]
        %v2593 = vld [vmem:[%s820 + $0xf8] sm:$0xff]
        %v2594 = vld [vmem:[%s829] sm:$0xf]
        %v2596 = vlaneseq
        %v2597 = vshrl.u32 %v2596, 7
        %v2598 = vsub.s32 0, %v2597
        %v2599 = vrot.slane %v2594, %v2598
        %v2600 = vlaneseq
        %v2601 = vshrl.u32 %v2600, 7
        %v2602 = vsub.s32 1, %v2601
        %v2603 = vrot.slane %v2594, %v2602
        %v2604 = vlaneseq
        %v2605 = vshrl.u32 %v2604, 7
        %v2606 = vsub.s32 2, %v2605
        %v2607 = vrot.slane %v2594, %v2606
        %v2608 = vlaneseq
        %v2609 = vshrl.u32 %v2608, 7
        %v2610 = vsub.s32 3, %v2609
        %v2611 = vrot.slane %v2594, %v2610
        %v2648 = vunpack.c.l.b16 %v2562
        %v2649 = vunpack.c.h.b16 %v2562
        %v2650 = vunpack.c.l.b16 %v2563
        %v2651 = vunpack.c.h.b16 %v2563
        %v2652 = vunpack.c.l.b16 %v2564
        %v2653 = vunpack.c.h.b16 %v2564
        %v2654 = vunpack.c.l.b16 %v2565
        %v2655 = vunpack.c.h.b16 %v2565
        %v2656 = vunpack.c.l.b16 %v2566
        %v2657 = vunpack.c.h.b16 %v2566
        %v2658 = vunpack.c.l.b16 %v2567
        %v2659 = vunpack.c.h.b16 %v2567
        %v2660 = vunpack.c.l.b16 %v2568
        %v2661 = vunpack.c.h.b16 %v2568
        %v2662 = vunpack.c.l.b16 %v2569
        %v2663 = vunpack.c.h.b16 %v2569
        %v2664 = vunpack.c.l.b16 %v2570
        %v2665 = vunpack.c.h.b16 %v2570
        %v2666 = vunpack.c.l.b16 %v2571
        %v2667 = vunpack.c.h.b16 %v2571
        %v2668 = vunpack.c.l.b16 %v2572
        %v2669 = vunpack.c.h.b16 %v2572
        %v2670 = vunpack.c.l.b16 %v2573
        %v2671 = vunpack.c.h.b16 %v2573
        %v2672 = vunpack.c.l.b16 %v2574
        %v2673 = vunpack.c.h.b16 %v2574
        %v2674 = vunpack.c.l.b16 %v2575
        %v2675 = vunpack.c.h.b16 %v2575
        %v2676 = vunpack.c.l.b16 %v2576
        %v2677 = vunpack.c.h.b16 %v2576
        %v2678 = vunpack.c.l.b16 %v2577
        %v2679 = vunpack.c.h.b16 %v2577
        %v2680 = vunpack.c.l.b16 %v2578
        %v2681 = vunpack.c.h.b16 %v2578
        %v2682 = vunpack.c.l.b16 %v2579
        %v2683 = vunpack.c.h.b16 %v2579
        %v2684 = vunpack.c.l.b16 %v2580
        %v2685 = vunpack.c.h.b16 %v2580
        %v2686 = vunpack.c.l.b16 %v2581
        %v2687 = vunpack.c.h.b16 %v2581
        %v2688 = vunpack.c.l.b16 %v2582
        %v2689 = vunpack.c.h.b16 %v2582
        %v2690 = vunpack.c.l.b16 %v2583
        %v2691 = vunpack.c.h.b16 %v2583
        %v2692 = vunpack.c.l.b16 %v2584
        %v2693 = vunpack.c.h.b16 %v2584
        %v2694 = vunpack.c.l.b16 %v2585
        %v2695 = vunpack.c.h.b16 %v2585
        %v2696 = vunpack.c.l.b16 %v2586
        %v2697 = vunpack.c.h.b16 %v2586
        %v2698 = vunpack.c.l.b16 %v2587
        %v2699 = vunpack.c.h.b16 %v2587
        %v2700 = vunpack.c.l.b16 %v2588
        %v2701 = vunpack.c.h.b16 %v2588
        %v2702 = vunpack.c.l.b16 %v2589
        %v2703 = vunpack.c.h.b16 %v2589
        %v2704 = vunpack.c.l.b16 %v2590
        %v2705 = vunpack.c.h.b16 %v2590
        %v2706 = vunpack.c.l.b16 %v2591
        %v2707 = vunpack.c.h.b16 %v2591
        %v2708 = vunpack.c.l.b16 %v2592
        %v2709 = vunpack.c.h.b16 %v2592
        %v2710 = vunpack.c.l.b16 %v2593
        %v2711 = vunpack.c.h.b16 %v2593
        %v2712 = vpack.c.b16 %v2652, %v2648
        %v2713 = vpack.c.b16 %v2653, %v2649
        %v2714 = vpack.c.b16 %v2654, %v2650
        %v2715 = vpack.c.b16 %v2655, %v2651
        %v2716 = vpack.c.b16 %v2660, %v2656
        %v2717 = vpack.c.b16 %v2661, %v2657
        %v2718 = vpack.c.b16 %v2662, %v2658
        %v2719 = vpack.c.b16 %v2663, %v2659
        %v2720 = vpack.c.b16 %v2668, %v2664
        %v2721 = vpack.c.b16 %v2669, %v2665
        %v2722 = vpack.c.b16 %v2670, %v2666
        %v2723 = vpack.c.b16 %v2671, %v2667
        %v2724 = vpack.c.b16 %v2676, %v2672
        %v2725 = vpack.c.b16 %v2677, %v2673
        %v2726 = vpack.c.b16 %v2678, %v2674
        %v2727 = vpack.c.b16 %v2679, %v2675
        %v2728 = vpack.c.b16 %v2684, %v2680
        %v2729 = vpack.c.b16 %v2685, %v2681
        %v2730 = vpack.c.b16 %v2686, %v2682
        %v2731 = vpack.c.b16 %v2687, %v2683
        %v2732 = vpack.c.b16 %v2692, %v2688
        %v2733 = vpack.c.b16 %v2693, %v2689
        %v2734 = vpack.c.b16 %v2694, %v2690
        %v2735 = vpack.c.b16 %v2695, %v2691
        %v2736 = vpack.c.b16 %v2700, %v2696
        %v2737 = vpack.c.b16 %v2701, %v2697
        %v2738 = vpack.c.b16 %v2702, %v2698
        %v2739 = vpack.c.b16 %v2703, %v2699
        %v2740 = vpack.c.b16 %v2708, %v2704
        %v2741 = vpack.c.b16 %v2709, %v2705
        %v2742 = vpack.c.b16 %v2710, %v2706
        %v2743 = vpack.c.b16 %v2711, %v2707
        %2776 = vmatprep.subr.bf16.mxu0 %v2713
        %2777 = vmatpush1.bf16.msra.mxu0 %v2712
        %2778 = vmatprep.subr.bf16.mxu0 %v2717
        %2779 = vmatpush1.bf16.msra.mxu0 %v2716
        %2780 = vmatprep.subr.bf16.mxu0 %v2721
        %2781 = vmatpush1.bf16.msra.mxu0 %v2720
        %2782 = vmatprep.subr.bf16.mxu0 %v2725
        %2783 = vmatpush1.bf16.msra.mxu0 %v2724
        %2784 = vmatprep.subr.bf16.mxu0 %v2729
        %2785 = vmatpush1.bf16.msra.mxu0 %v2728
        %2786 = vmatprep.subr.bf16.mxu0 %v2733
        %2787 = vmatpush1.bf16.msra.mxu0 %v2732
        %2788 = vmatprep.subr.bf16.mxu0 %v2737
        %2789 = vmatpush1.bf16.msra.mxu0 %v2736
        %2790 = vmatprep.subr.bf16.mxu0 %v2741
        %2791 = vmatpush1.bf16.msra.mxu0 %v2740
        %2792 = vmatprep.subr.bf16.mxu0 0
        %2793 = vmatpush1.bf16.msra.mxu0 0
        %2794 = vmatprep.subr.bf16.mxu0 0
        %2795 = vmatpush1.bf16.msra.mxu0 0
        %2796 = vmatprep.subr.bf16.mxu0 0
        %2797 = vmatpush1.bf16.msra.mxu0 0
        %2798 = vmatprep.subr.bf16.mxu0 0
        %2799 = vmatpush1.bf16.msra.mxu0 0
        %2800 = vmatprep.subr.bf16.mxu0 0
        %2801 = vmatpush1.bf16.msra.mxu0 0
        %2802 = vmatprep.subr.bf16.mxu0 0
        %2803 = vmatpush1.bf16.msra.mxu0 0
        %2804 = vmatprep.subr.bf16.mxu0 0
        %2805 = vmatpush1.bf16.msra.mxu0 0
        %2806 = vmatprep.subr.bf16.mxu0 0
        %2807 = vmatpush1.bf16.msra.mxu0 0
        %2808 = vmatprep.mubr.bf16.mxu0 0
        %2809 = vmatmul.mubr.bf16.gmra.mrb[0].mxu0 %v2560
        %v2810 = vpop.f32.mrb[0].mxu0
        %v2811 = vadd.f32 %v2599, %v2810
        %v2812 = vpop.f32.mrb[0].mxu0
        %v2813 = vadd.f32 %v2603, %v2812
        %v2814 = vpop.f32.mrb[0].mxu0
        %v2815 = vadd.f32 %v2599, %v2814
        %v2816 = vpop.f32.mrb[0].mxu0
        %v2817 = vadd.f32 %v2603, %v2816
        %2818 = vmatprep.mubr.bf16.mxu0 0
        %2819 = vmatmul.mubr.bf16.gmra.mrb[0].mxu0 %v2561
        %v2820 = vpop.f32.mrb[0].mxu0
        %v2821 = vadd.f32 %v2599, %v2820
        %v2822 = vpop.f32.mrb[0].mxu0
        %v2823 = vadd.f32 %v2603, %v2822
        %v2824 = vpop.f32.mrb[0].mxu0
        %v2825 = vadd.f32 %v2599, %v2824
        %v2826 = vpop.f32.mrb[0].mxu0
        %v2827 = vadd.f32 %v2603, %v2826
        %2828 = vdwg.mxu0
        %2829 = vmatprep.subr.bf16.mxu0 %v2715
        %2830 = vmatpush1.bf16.msra.mxu0 %v2714
        %2831 = vmatprep.subr.bf16.mxu0 %v2719
        %2832 = vmatpush1.bf16.msra.mxu0 %v2718
        %2833 = vmatprep.subr.bf16.mxu0 %v2723
        %2834 = vmatpush1.bf16.msra.mxu0 %v2722
        %2835 = vmatprep.subr.bf16.mxu0 %v2727
        %2836 = vmatpush1.bf16.msra.mxu0 %v2726
        %2837 = vmatprep.subr.bf16.mxu0 %v2731
        %2838 = vmatpush1.bf16.msra.mxu0 %v2730
        %2839 = vmatprep.subr.bf16.mxu0 %v2735
        %2840 = vmatpush1.bf16.msra.mxu0 %v2734
        %2841 = vmatprep.subr.bf16.mxu0 %v2739
        %2842 = vmatpush1.bf16.msra.mxu0 %v2738
        %2843 = vmatprep.subr.bf16.mxu0 %v2743
        %2844 = vmatpush1.bf16.msra.mxu0 %v2742
        %2845 = vmatprep.subr.bf16.mxu0 0
        %2846 = vmatpush1.bf16.msra.mxu0 0
        %2847 = vmatprep.subr.bf16.mxu0 0
        %2848 = vmatpush1.bf16.msra.mxu0 0
        %2849 = vmatprep.subr.bf16.mxu0 0
        %2850 = vmatpush1.bf16.msra.mxu0 0
        %2851 = vmatprep.subr.bf16.mxu0 0
        %2852 = vmatpush1.bf16.msra.mxu0 0
        %2853 = vmatprep.subr.bf16.mxu0 0
        %2854 = vmatpush1.bf16.msra.mxu0 0
        %2855 = vmatprep.subr.bf16.mxu0 0
        %2856 = vmatpush1.bf16.msra.mxu0 0
        %2857 = vmatprep.subr.bf16.mxu0 0
        %2858 = vmatpush1.bf16.msra.mxu0 0
        %2859 = vmatprep.subr.bf16.mxu0 0
        %2860 = vmatpush1.bf16.msra.mxu0 0
        %2861 = vmatprep.mubr.bf16.mxu0 0
        %2862 = vmatmul.mubr.bf16.gmra.mrb[0].mxu0 %v2560
        %v2863 = vpop.f32.mrb[0].mxu0
        %v2864 = vadd.f32 %v2607, %v2863
        %v2865 = vpop.f32.mrb[0].mxu0
        %v2866 = vadd.f32 %v2611, %v2865
        %v2867 = vpop.f32.mrb[0].mxu0
        %v2868 = vadd.f32 %v2607, %v2867
        %v2869 = vpop.f32.mrb[0].mxu0
        %v2870 = vadd.f32 %v2611, %v2869
        %2871 = vmatprep.mubr.bf16.mxu0 0
        %2872 = vmatmul.mubr.bf16.gmra.mrb[0].mxu0 %v2561
        %v2873 = vpop.f32.mrb[0].mxu0
        %v2874 = vadd.f32 %v2607, %v2873
        %v2875 = vpop.f32.mrb[0].mxu0
        %v2876 = vadd.f32 %v2611, %v2875
        %v2877 = vpop.f32.mrb[0].mxu0
        %v2878 = vadd.f32 %v2607, %v2877
        %v2879 = vpop.f32.mrb[0].mxu0
        %v2880 = vadd.f32 %v2611, %v2879
        %2881 = vdwg.mxu0
        %v2882 = vmul.f32 %v2811, -1.702
        %v2883 = vmul.f32 %v2813, -1.702
        %v2884 = vmul.f32 %v2864, -1.702
        %v2885 = vmul.f32 %v2866, -1.702
        %v2886 = vmul.f32 %v2815, -1.702
        %v2887 = vmul.f32 %v2817, -1.702
        %v2888 = vmul.f32 %v2868, -1.702
        %v2889 = vmul.f32 %v2870, -1.702
        %v2890 = vmul.f32 %v2821, -1.702
        %v2891 = vmul.f32 %v2823, -1.702
        %v2892 = vmul.f32 %v2874, -1.702
        %v2893 = vmul.f32 %v2876, -1.702
        %v2894 = vmul.f32 %v2825, -1.702
        %v2895 = vmul.f32 %v2827, -1.702
        %v2896 = vmul.f32 %v2878, -1.702
        %v2897 = vmul.f32 %v2880, -1.702
        %v2898 = vmul.f32 %v2882, 1.442695
        %v2899 = vpow.pop %v2898
        %v2900 = vmul.f32 %v2883, 1.442695
        %v2901 = vpow.pop %v2900
        %v2902 = vmul.f32 %v2884, 1.442695
        %v2903 = vpow.pop %v2902
        %v2904 = vmul.f32 %v2885, 1.442695
        %v2905 = vpow.pop %v2904
        %v2906 = vmul.f32 %v2886, 1.442695
        %v2907 = vpow.pop %v2906
        %v2908 = vmul.f32 %v2887, 1.442695
        %v2909 = vpow.pop %v2908
        %v2910 = vmul.f32 %v2888, 1.442695
        %v2911 = vpow.pop %v2910
        %v2912 = vmul.f32 %v2889, 1.442695
        %v2913 = vpow.pop %v2912
        %v2914 = vmul.f32 %v2890, 1.442695
        %v2915 = vpow.pop %v2914
        %v2916 = vmul.f32 %v2891, 1.442695
        %v2917 = vpow.pop %v2916
        %v2918 = vmul.f32 %v2892, 1.442695
        %v2919 = vpow.pop %v2918
        %v2920 = vmul.f32 %v2893, 1.442695
        %v2921 = vpow.pop %v2920
        %v2922 = vmul.f32 %v2894, 1.442695
        %v2923 = vpow.pop %v2922
        %v2924 = vmul.f32 %v2895, 1.442695
        %v2925 = vpow.pop %v2924
        %v2926 = vmul.f32 %v2896, 1.442695
        %v2927 = vpow.pop %v2926
        %v2928 = vmul.f32 %v2897, 1.442695
        %v2929 = vpow.pop %v2928
        %v2930 = vadd.f32 %v2899, 1.0
        %v2931 = vadd.f32 %v2901, 1.0
        %v2932 = vadd.f32 %v2903, 1.0
        %v2933 = vadd.f32 %v2905, 1.0
        %v2934 = vadd.f32 %v2907, 1.0
        %v2935 = vadd.f32 %v2909, 1.0
        %v2936 = vadd.f32 %v2911, 1.0
        %v2937 = vadd.f32 %v2913, 1.0
        %v2938 = vadd.f32 %v2915, 1.0
        %v2939 = vadd.f32 %v2917, 1.0
        %v2940 = vadd.f32 %v2919, 1.0
        %v2941 = vadd.f32 %v2921, 1.0
        %v2942 = vadd.f32 %v2923, 1.0
        %v2943 = vadd.f32 %v2925, 1.0
        %v2944 = vadd.f32 %v2927, 1.0
        %v2945 = vadd.f32 %v2929, 1.0
        %v2946 = vrcp.pop %v2930
        %v2947 = vrcp.pop %v2931
        %v2948 = vrcp.pop %v2932
        %v2949 = vrcp.pop %v2933
        %v2950 = vrcp.pop %v2934
        %v2951 = vrcp.pop %v2935
        %v2952 = vrcp.pop %v2936
        %v2953 = vrcp.pop %v2937
        %v2954 = vrcp.pop %v2938
        %v2955 = vrcp.pop %v2939
        %v2956 = vrcp.pop %v2940
        %v2957 = vrcp.pop %v2941
        %v2958 = vrcp.pop %v2942
        %v2959 = vrcp.pop %v2943
        %v2960 = vrcp.pop %v2944
        %v2961 = vrcp.pop %v2945
        %v2962 = vmul.f32 %v2811, %v2946
        %v2963 = vmul.f32 %v2813, %v2947
        %v2964 = vmul.f32 %v2864, %v2948
        %v2965 = vmul.f32 %v2866, %v2949
        %v2966 = vmul.f32 %v2815, %v2950
        %v2967 = vmul.f32 %v2817, %v2951
        %v2968 = vmul.f32 %v2868, %v2952
        %v2969 = vmul.f32 %v2870, %v2953
        %v2970 = vmul.f32 %v2821, %v2954
        %v2971 = vmul.f32 %v2823, %v2955
        %v2972 = vmul.f32 %v2874, %v2956
        %v2973 = vmul.f32 %v2876, %v2957
        %v2974 = vmul.f32 %v2825, %v2958
        %v2975 = vmul.f32 %v2827, %v2959
        %v2976 = vmul.f32 %v2878, %v2960
        %v2977 = vmul.f32 %v2880, %v2961
        %v2978 = vpack.c.bf16 %v2966, %v2962
        %v2979 = vpack.c.bf16 %v2967, %v2963
        %v2980 = vpack.c.bf16 %v2968, %v2964
        %v2981 = vpack.c.bf16 %v2969, %v2965
        %v2982 = vpack.c.bf16 %v2974, %v2970
        %v2983 = vpack.c.bf16 %v2975, %v2971
        %v2984 = vpack.c.bf16 %v2976, %v2972
        %v2985 = vpack.c.bf16 %v2977, %v2973
        %v2986 = vld [vmem:[%s838] sm:$0xf]
        %v2987 = vld [vmem:[%s838 + $0x4] sm:$0xf]
        %v2988 = vld [vmem:[%s838 + $0x8] sm:$0xf]
        %v2989 = vld [vmem:[%s838 + $0xc] sm:$0xf]
        %v2990 = vld [vmem:[%s838 + $0x10] sm:$0xf]
        %v2991 = vld [vmem:[%s838 + $0x14] sm:$0xf]
        %v2992 = vld [vmem:[%s838 + $0x18] sm:$0xf]
        %v2993 = vld [vmem:[%s838 + $0x1c] sm:$0xf]
        %v2994 = vld [vmem:[%s838 + $0x20] sm:$0xf]
        %v2995 = vld [vmem:[%s838 + $0x24] sm:$0xf]
        %v2996 = vld [vmem:[%s838 + $0x28] sm:$0xf]
        %v2997 = vld [vmem:[%s838 + $0x2c] sm:$0xf]
        %v2998 = vld [vmem:[%s838 + $0x30] sm:$0xf]
        %v2999 = vld [vmem:[%s838 + $0x34] sm:$0xf]
        %v3000 = vld [vmem:[%s838 + $0x38] sm:$0xf]
        %v3001 = vld [vmem:[%s838 + $0x3c] sm:$0xf]
        %v3002 = vld [vmem:[%s838 + $0x40] sm:$0xf]
        %v3003 = vld [vmem:[%s838 + $0x44] sm:$0xf]
        %v3004 = vld [vmem:[%s838 + $0x48] sm:$0xf]
        %v3005 = vld [vmem:[%s838 + $0x4c] sm:$0xf]
        %v3006 = vld [vmem:[%s838 + $0x50] sm:$0xf]
        %v3007 = vld [vmem:[%s838 + $0x54] sm:$0xf]
        %v3008 = vld [vmem:[%s838 + $0x58] sm:$0xf]
        %v3009 = vld [vmem:[%s838 + $0x5c] sm:$0xf]
        %v3010 = vld [vmem:[%s838 + $0x60] sm:$0xf]
        %v3011 = vld [vmem:[%s838 + $0x64] sm:$0xf]
        %v3012 = vld [vmem:[%s838 + $0x68] sm:$0xf]
        %v3013 = vld [vmem:[%s838 + $0x6c] sm:$0xf]
        %v3014 = vld [vmem:[%s838 + $0x70] sm:$0xf]
        %v3015 = vld [vmem:[%s838 + $0x74] sm:$0xf]
        %v3016 = vld [vmem:[%s838 + $0x78] sm:$0xf]
        %v3017 = vld [vmem:[%s838 + $0x7c] sm:$0xf]
        %v3018 = vld [vmem:[%s838 + $0x80] sm:$0xf]
        %v3019 = vld [vmem:[%s838 + $0x84] sm:$0xf]
        %v3020 = vld [vmem:[%s838 + $0x88] sm:$0xf]
        %v3021 = vld [vmem:[%s838 + $0x8c] sm:$0xf]
        %v3022 = vld [vmem:[%s838 + $0x90] sm:$0xf]
        %v3023 = vld [vmem:[%s838 + $0x94] sm:$0xf]
        %v3024 = vld [vmem:[%s838 + $0x98] sm:$0xf]
        %v3025 = vld [vmem:[%s838 + $0x9c] sm:$0xf]
        %v3026 = vld [vmem:[%s838 + $0xa0] sm:$0xf]
        %v3027 = vld [vmem:[%s838 + $0xa4] sm:$0xf]
        %v3028 = vld [vmem:[%s838 + $0xa8] sm:$0xf]
        %v3029 = vld [vmem:[%s838 + $0xac] sm:$0xf]
        %v3030 = vld [vmem:[%s838 + $0xb0] sm:$0xf]
        %v3031 = vld [vmem:[%s838 + $0xb4] sm:$0xf]
        %v3032 = vld [vmem:[%s838 + $0xb8] sm:$0xf]
        %v3033 = vld [vmem:[%s838 + $0xbc] sm:$0xf]
        %v3034 = vld [vmem:[%s838 + $0xc0] sm:$0xf]
        %v3035 = vld [vmem:[%s838 + $0xc4] sm:$0xf]
        %v3036 = vld [vmem:[%s838 + $0xc8] sm:$0xf]
        %v3037 = vld [vmem:[%s838 + $0xcc] sm:$0xf]
        %v3038 = vld [vmem:[%s838 + $0xd0] sm:$0xf]
        %v3039 = vld [vmem:[%s838 + $0xd4] sm:$0xf]
        %v3040 = vld [vmem:[%s838 + $0xd8] sm:$0xf]
        %v3041 = vld [vmem:[%s838 + $0xdc] sm:$0xf]
        %v3042 = vld [vmem:[%s838 + $0xe0] sm:$0xf]
        %v3043 = vld [vmem:[%s838 + $0xe4] sm:$0xf]
        %v3044 = vld [vmem:[%s838 + $0xe8] sm:$0xf]
        %v3045 = vld [vmem:[%s838 + $0xec] sm:$0xf]
        %v3046 = vld [vmem:[%s838 + $0xf0] sm:$0xf]
        %v3047 = vld [vmem:[%s838 + $0xf4] sm:$0xf]
        %v3048 = vld [vmem:[%s838 + $0xf8] sm:$0xf]
        %v3049 = vld [vmem:[%s838 + $0xfc] sm:$0xf]
        %v3050 = vld [vmem:[%s846] sm:$0x1]
        %v3052 = vlaneseq
        %v3053 = vshrl.u32 %v3052, 7
        %v3054 = vsub.s32 0, %v3053
        %v3055 = vrot.slane %v3050, %v3054
        %v3121 = vunpack.c.l.b16 %v2986
        %v3122 = vunpack.c.l.b16 %v2987
        %v3123 = vunpack.c.l.b16 %v2988
        %v3124 = vunpack.c.l.b16 %v2989
        %v3125 = vunpack.c.l.b16 %v2990
        %v3126 = vunpack.c.l.b16 %v2991
        %v3127 = vunpack.c.l.b16 %v2992
        %v3128 = vunpack.c.l.b16 %v2993
        %v3129 = vunpack.c.l.b16 %v2994
        %v3130 = vunpack.c.l.b16 %v2995
        %v3131 = vunpack.c.l.b16 %v2996
        %v3132 = vunpack.c.l.b16 %v2997
        %v3133 = vunpack.c.l.b16 %v2998
        %v3134 = vunpack.c.l.b16 %v2999
        %v3135 = vunpack.c.l.b16 %v3000
        %v3136 = vunpack.c.l.b16 %v3001
        %v3137 = vunpack.c.l.b16 %v3002
        %v3138 = vunpack.c.l.b16 %v3003
        %v3139 = vunpack.c.l.b16 %v3004
        %v3140 = vunpack.c.l.b16 %v3005
        %v3141 = vunpack.c.l.b16 %v3006
        %v3142 = vunpack.c.l.b16 %v3007
        %v3143 = vunpack.c.l.b16 %v3008
        %v3144 = vunpack.c.l.b16 %v3009
        %v3145 = vunpack.c.l.b16 %v3010
        %v3146 = vunpack.c.l.b16 %v3011
        %v3147 = vunpack.c.l.b16 %v3012
        %v3148 = vunpack.c.l.b16 %v3013
        %v3149 = vunpack.c.l.b16 %v3014
        %v3150 = vunpack.c.l.b16 %v3015
        %v3151 = vunpack.c.l.b16 %v3016
        %v3152 = vunpack.c.l.b16 %v3017
        %v3153 = vunpack.c.l.b16 %v3018
        %v3154 = vunpack.c.l.b16 %v3019
        %v3155 = vunpack.c.l.b16 %v3020
        %v3156 = vunpack.c.l.b16 %v3021
        %v3157 = vunpack.c.l.b16 %v3022
        %v3158 = vunpack.c.l.b16 %v3023
        %v3159 = vunpack.c.l.b16 %v3024
        %v3160 = vunpack.c.l.b16 %v3025
        %v3161 = vunpack.c.l.b16 %v3026
        %v3162 = vunpack.c.l.b16 %v3027
        %v3163 = vunpack.c.l.b16 %v3028
        %v3164 = vunpack.c.l.b16 %v3029
        %v3165 = vunpack.c.l.b16 %v3030
        %v3166 = vunpack.c.l.b16 %v3031
        %v3167 = vunpack.c.l.b16 %v3032
        %v3168 = vunpack.c.l.b16 %v3033
        %v3169 = vunpack.c.l.b16 %v3034
        %v3170 = vunpack.c.l.b16 %v3035
        %v3171 = vunpack.c.l.b16 %v3036
        %v3172 = vunpack.c.l.b16 %v3037
        %v3173 = vunpack.c.l.b16 %v3038
        %v3174 = vunpack.c.l.b16 %v3039
        %v3175 = vunpack.c.l.b16 %v3040
        %v3176 = vunpack.c.l.b16 %v3041
        %v3177 = vunpack.c.l.b16 %v3042
        %v3178 = vunpack.c.l.b16 %v3043
        %v3179 = vunpack.c.l.b16 %v3044
        %v3180 = vunpack.c.l.b16 %v3045
        %v3181 = vunpack.c.l.b16 %v3046
        %v3182 = vunpack.c.l.b16 %v3047
        %v3183 = vunpack.c.l.b16 %v3048
        %v3184 = vunpack.c.l.b16 %v3049
        %v3185 = vpack.c.b16 %v3122, %v3121
        %v3186 = vpack.c.b16 %v3124, %v3123
        %v3187 = vpack.c.b16 %v3126, %v3125
        %v3188 = vpack.c.b16 %v3128, %v3127
        %v3189 = vpack.c.b16 %v3130, %v3129
        %v3190 = vpack.c.b16 %v3132, %v3131
        %v3191 = vpack.c.b16 %v3134, %v3133
        %v3192 = vpack.c.b16 %v3136, %v3135
        %v3193 = vpack.c.b16 %v3138, %v3137
        %v3194 = vpack.c.b16 %v3140, %v3139
        %v3195 = vpack.c.b16 %v3142, %v3141
        %v3196 = vpack.c.b16 %v3144, %v3143
        %v3197 = vpack.c.b16 %v3146, %v3145
        %v3198 = vpack.c.b16 %v3148, %v3147
        %v3199 = vpack.c.b16 %v3150, %v3149
        %v3200 = vpack.c.b16 %v3152, %v3151
        %v3201 = vpack.c.b16 %v3154, %v3153
        %v3202 = vpack.c.b16 %v3156, %v3155
        %v3203 = vpack.c.b16 %v3158, %v3157
        %v3204 = vpack.c.b16 %v3160, %v3159
        %v3205 = vpack.c.b16 %v3162, %v3161
        %v3206 = vpack.c.b16 %v3164, %v3163
        %v3207 = vpack.c.b16 %v3166, %v3165
        %v3208 = vpack.c.b16 %v3168, %v3167
        %v3209 = vpack.c.b16 %v3170, %v3169
        %v3210 = vpack.c.b16 %v3172, %v3171
        %v3211 = vpack.c.b16 %v3174, %v3173
        %v3212 = vpack.c.b16 %v3176, %v3175
        %v3213 = vpack.c.b16 %v3178, %v3177
        %v3214 = vpack.c.b16 %v3180, %v3179
        %v3215 = vpack.c.b16 %v3182, %v3181
        %v3216 = vpack.c.b16 %v3184, %v3183
        %3249 = vmatprep.subr.bf16.mxu0 0
        %3250 = vmatpush1.bf16.msra.mxu0 %v3185
        %3251 = vmatprep.subr.bf16.mxu0 0
        %3252 = vmatpush1.bf16.msra.mxu0 %v3186
        %3253 = vmatprep.subr.bf16.mxu0 0
        %3254 = vmatpush1.bf16.msra.mxu0 %v3187
        %3255 = vmatprep.subr.bf16.mxu0 0
        %3256 = vmatpush1.bf16.msra.mxu0 %v3188
        %3257 = vmatprep.subr.bf16.mxu0 0
        %3258 = vmatpush1.bf16.msra.mxu0 %v3189
        %3259 = vmatprep.subr.bf16.mxu0 0
        %3260 = vmatpush1.bf16.msra.mxu0 %v3190
        %3261 = vmatprep.subr.bf16.mxu0 0
        %3262 = vmatpush1.bf16.msra.mxu0 %v3191
        %3263 = vmatprep.subr.bf16.mxu0 0
        %3264 = vmatpush1.bf16.msra.mxu0 %v3192
        %3265 = vmatprep.subr.bf16.mxu0 0
        %3266 = vmatpush1.bf16.msra.mxu0 %v3193
        %3267 = vmatprep.subr.bf16.mxu0 0
        %3268 = vmatpush1.bf16.msra.mxu0 %v3194
        %3269 = vmatprep.subr.bf16.mxu0 0
        %3270 = vmatpush1.bf16.msra.mxu0 %v3195
        %3271 = vmatprep.subr.bf16.mxu0 0
        %3272 = vmatpush1.bf16.msra.mxu0 %v3196
        %3273 = vmatprep.subr.bf16.mxu0 0
        %3274 = vmatpush1.bf16.msra.mxu0 %v3197
        %3275 = vmatprep.subr.bf16.mxu0 0
        %3276 = vmatpush1.bf16.msra.mxu0 %v3198
        %3277 = vmatprep.subr.bf16.mxu0 0
        %3278 = vmatpush1.bf16.msra.mxu0 %v3199
        %3279 = vmatprep.subr.bf16.mxu0 0
        %3280 = vmatpush1.bf16.msra.mxu0 %v3200
        %3281 = vmatprep.mubr.bf16.mxu0 %v2979
        %3282 = vmatmul.mubr.bf16.gmra.mrb[0].mxu0 %v2978
        %v3283 = vpop.f32.mrb[0].mxu0
        %v3284 = vadd.f32 %v3055, %v3283
        %v3285 = vpop.f32.mrb[0].mxu0
        %v3286 = vpop.f32.mrb[0].mxu0
        %v3287 = vadd.f32 %v3055, %v3286
        %v3288 = vpop.f32.mrb[0].mxu0
        %3289 = vmatprep.mubr.bf16.mxu0 %v2983
        %3290 = vmatmul.mubr.bf16.gmra.mrb[0].mxu0 %v2982
        %v3291 = vpop.f32.mrb[0].mxu0
        %v3292 = vadd.f32 %v3055, %v3291
        %v3293 = vpop.f32.mrb[0].mxu0
        %v3294 = vpop.f32.mrb[0].mxu0
        %v3295 = vadd.f32 %v3055, %v3294
        %v3296 = vpop.f32.mrb[0].mxu0
        %3297 = vdwg.mxu0
        %3298 = vmatprep.subr.bf16.mxu0 0
        %3299 = vmatpush1.bf16.msra.mxu0 %v3201
        %3300 = vmatprep.subr.bf16.mxu0 0
        %3301 = vmatpush1.bf16.msra.mxu0 %v3202
        %3302 = vmatprep.subr.bf16.mxu0 0
        %3303 = vmatpush1.bf16.msra.mxu0 %v3203
        %3304 = vmatprep.subr.bf16.mxu0 0
        %3305 = vmatpush1.bf16.msra.mxu0 %v3204
        %3306 = vmatprep.subr.bf16.mxu0 0
        %3307 = vmatpush1.bf16.msra.mxu0 %v3205
        %3308 = vmatprep.subr.bf16.mxu0 0
        %3309 = vmatpush1.bf16.msra.mxu0 %v3206
        %3310 = vmatprep.subr.bf16.mxu0 0
        %3311 = vmatpush1.bf16.msra.mxu0 %v3207
        %3312 = vmatprep.subr.bf16.mxu0 0
        %3313 = vmatpush1.bf16.msra.mxu0 %v3208
        %3314 = vmatprep.subr.bf16.mxu0 0
        %3315 = vmatpush1.bf16.msra.mxu0 %v3209
        %3316 = vmatprep.subr.bf16.mxu0 0
        %3317 = vmatpush1.bf16.msra.mxu0 %v3210
        %3318 = vmatprep.subr.bf16.mxu0 0
        %3319 = vmatpush1.bf16.msra.mxu0 %v3211
        %3320 = vmatprep.subr.bf16.mxu0 0
        %3321 = vmatpush1.bf16.msra.mxu0 %v3212
        %3322 = vmatprep.subr.bf16.mxu0 0
        %3323 = vmatpush1.bf16.msra.mxu0 %v3213
        %3324 = vmatprep.subr.bf16.mxu0 0
        %3325 = vmatpush1.bf16.msra.mxu0 %v3214
        %3326 = vmatprep.subr.bf16.mxu0 0
        %3327 = vmatpush1.bf16.msra.mxu0 %v3215
        %3328 = vmatprep.subr.bf16.mxu0 0
        %3329 = vmatpush1.bf16.msra.mxu0 %v3216
        %3330 = vmatprep.mubr.bf16.mxu0 %v2981
        %3331 = vmatmul.mubr.bf16.gmra.mrb[0].mxu0 %v2980
        %v3332 = vpop.f32.mrb[0].mxu0
        %v3333 = vadd.f32 %v3284, %v3332
        %v3334 = vpop.f32.mrb[0].mxu0
        %v3335 = vpop.f32.mrb[0].mxu0
        %v3336 = vadd.f32 %v3287, %v3335
        %v3337 = vpop.f32.mrb[0].mxu0
        %3338 = vmatprep.mubr.bf16.mxu0 %v2985
        %3339 = vmatmul.mubr.bf16.gmra.mrb[0].mxu0 %v2984
        %v3340 = vpop.f32.mrb[0].mxu0
        %v3341 = vadd.f32 %v3292, %v3340
        %v3342 = vpop.f32.mrb[0].mxu0
        %v3343 = vpop.f32.mrb[0].mxu0
        %v3344 = vadd.f32 %v3295, %v3343
        %v3345 = vpop.f32.mrb[0].mxu0
        %3346 = vdwg.mxu0
        %v3347 = vadd.f32 %v2490, %v3333
        %v3348 = vadd.f32 %v2491, %v3336
        %v3349 = vadd.f32 %v2492, %v3341
        %v3350 = vadd.f32 %v2493, %v3344
        %3351 = vst [vmem:[#allocation2] sm:$0xff] %v3347
        %3352 = vst [vmem:[#allocation2 + $0x8] sm:$0xff] %v3348
        %3353 = vst [vmem:[#allocation2 + $0x10] sm:$0xff] %v3349
        %3354 = vst [vmem:[#allocation2 + $0x18] sm:$0xff] %v3350
        %p3355 = scmp.eq.s32.totalorder %s31, 1
        // Predicated region
        $region153: #{tpu_custom_call.1} parent=83 // pred_check
          %p3356 = pneg %p3355
        $region154: #{tpu_custom_call.1} parent=83 // pred_check_branch
          %3358 = sbr.rel (%p3356) target = $region156
        $region155: #{tpu_custom_call.1} parent=83 // pred_region
          %v3359 = vld [vmem:[#allocation20] sm:$0x1]
          %v3360 = vld [vmem:[#allocation21] sm:$0x1]
          %3361 = vadd.xlane.f32.xlu0 %v3347
          %v3362 = vpop.xlane.xlu0 %3361
          %3363 = vadd.xlane.f32.xlu0 %v3348
          %v3364 = vpop.xlane.xlu0 %3363
          %3365 = vadd.xlane.f32.xlu0 %v3349
          %v3366 = vpop.xlane.xlu0 %3365
          %3367 = vadd.xlane.f32.xlu0 %v3350
          %v3368 = vpop.xlane.xlu0 %3367
          %v3369 = vmul.f32 %v3362, %v974
          %v3370 = vmul.f32 %v3364, %v974
          %v3371 = vmul.f32 %v3366, %v974
          %v3372 = vmul.f32 %v3368, %v974
          %v3373 = vsub.f32 %v3347, %v3369
          %v3374 = vsub.f32 %v3348, %v3370
          %v3375 = vsub.f32 %v3349, %v3371
          %v3376 = vsub.f32 %v3350, %v3372
          %v3377 = vmul.f32 %v3373, %v3373
          %v3378 = vmul.f32 %v3374, %v3374
          %v3379 = vmul.f32 %v3375, %v3375
          %v3380 = vmul.f32 %v3376, %v3376
          %3381 = vadd.xlane.f32.xlu0 %v3377
          %v3382 = vpop.xlane.xlu0 %3381
          %3383 = vadd.xlane.f32.xlu0 %v3378
          %v3384 = vpop.xlane.xlu0 %3383
          %3385 = vadd.xlane.f32.xlu0 %v3379
          %v3386 = vpop.xlane.xlu0 %3385
          %3387 = vadd.xlane.f32.xlu0 %v3380
          %v3388 = vpop.xlane.xlu0 %3387
          %v3389 = vmul.f32 %v3382, %v974
          %v3390 = vmul.f32 %v3384, %v974
          %v3391 = vmul.f32 %v3386, %v974
          %v3392 = vmul.f32 %v3388, %v974
          %v3393 = vadd.f32 %v3389, 1e-05
          %v3394 = vadd.f32 %v3390, 1e-05
          %v3395 = vadd.f32 %v3391, 1e-05
          %v3396 = vadd.f32 %v3392, 1e-05
          %v3397 = vrsqrt.pop %v3393
          %v3398 = vrsqrt.pop %v3394
          %v3399 = vrsqrt.pop %v3395
          %v3400 = vrsqrt.pop %v3396
          %v3401 = vmul.f32 %v3373, %v3397
          %v3402 = vmul.f32 %v3374, %v3398
          %v3403 = vmul.f32 %v3375, %v3399
          %v3404 = vmul.f32 %v3376, %v3400
          %v3406 = vlaneseq
          %v3407 = vshrl.u32 %v3406, 7
          %v3408 = vsub.s32 0, %v3407
          %v3409 = vrot.slane %v3359, %v3408
          %v3411 = vmul.f32 %v3401, %v3409
          %v3412 = vmul.f32 %v3402, %v3409
          %v3413 = vmul.f32 %v3403, %v3409
          %v3414 = vmul.f32 %v3404, %v3409
          %v3416 = vlaneseq
          %v3417 = vshrl.u32 %v3416, 7
          %v3418 = vsub.s32 0, %v3417
          %v3419 = vrot.slane %v3360, %v3418
          %v3421 = vadd.f32 %v3411, %v3419
          %v3422 = vadd.f32 %v3412, %v3419
          %v3423 = vadd.f32 %v3413, %v3419
          %v3424 = vadd.f32 %v3414, %v3419
          %3425 = vst [vmem:[#allocation23] sm:$0xff] %v3421
          %3426 = vst [vmem:[#allocation23 + $0x8] sm:$0xff] %v3422
          %3427 = vst [vmem:[#allocation23 + $0x10] sm:$0xff] %v3423
          %3428 = vst [vmem:[#allocation23 + $0x18] sm:$0xff] %v3424
        $region156: #{tpu_custom_call.1} parent=83 // pred_fallthru
          _
        // Predicated region
        $region157: #{tpu_custom_call.1} parent=83 // pred_check
          %p3429 = pneg %p440
        $region158: #{tpu_custom_call.1} parent=83 // pred_check_branch
          %3431 = sbr.rel (%p3429) target = $region160
        $region159: #{tpu_custom_call.1} parent=83 // pred_region
          %s3433 = ssub.s32 512, 512
          %3434 = vsyncadd [#allocation5], %s3433
          %s3435 = sshll.u32 [#allocation23], 4
          %s3436 = int_to_ptr.vmem [resolvable:$true] %s3435
          %3441 = dma.vmem_to_hbm [thread:$0]  %s3436, 512, %s16, [#allocation5], 128, 128, 8
        $region160: #{tpu_custom_call.1} parent=83 // pred_fallthru
          _
        // Predicated region
        $region161: #{tpu_custom_call.1} parent=83 // pred_check
          %p3442 = pneg %p440
        $region162: #{tpu_custom_call.1} parent=83 // pred_check_branch
          %3444 = sbr.rel (%p3442) target = $region164
        $region163: #{tpu_custom_call.1} parent=83 // pred_region
          %3445 = dma.done [#allocation5], 512
        $region164: #{tpu_custom_call.1} parent=83 // pred_fallthru
          _
      $region84: #{tpu_custom_call.1} parent=5 // pred_fallthru
        _
      %p3446 = scmp.le.s32.totalorder 2, %s26
      // Predicated region
      $region165: #{tpu_custom_call.1} parent=5 // pred_check
        %p3447 = pneg %p3446
      $region166: #{tpu_custom_call.1} parent=5 // pred_check_branch
        %3449 = sbr.rel (%p3447) target = $region168
      $region167: #{tpu_custom_call.1} parent=5 // pred_region
        %s3450 = ssub.s32 %s26, 2
      $region168: #{tpu_custom_call.1} parent=5 // pred_fallthru
        _
    $region6: #{tpu_custom_call.1} parent=1 // loop_footer
      %s30 = sadd.s32 1, %s26
    $region7: #{tpu_custom_call.1} parent=1 // loop_footer_branch
      %25 = sbr.rel target = $region3
    $region8: #{tpu_custom_call.1} parent=1 // loop_exit
      _
    %3451 = vsyncpa [#allocation4], 1
    %s3452 = scalar_lea.sflag [#allocation4], 1
    %3453 = vsyncpa %s3452, 1
    %3454 = vsyncpa [#allocation7], 1
    %3455 = vsyncpa [#allocation22], 1
    %3456 = vsyncpa [#allocation5], 1
    %s3457 = scalar_lea.sflag [#allocation5], 1
    %3458 = vsyncpa %s3457, 1

</llo_original>
